<compile_context>
chip_gen: v7x
topology: tpu7x:2x2x1
jax: 0.10.0
libtpu: 0.0.40
codegen_flags: <defaults>
</compile_context>

<pallas_src>
import functools

import jax
import jax.numpy as jnp
from jax import lax
from jax.experimental import pallas as pl
from jax.experimental.pallas import tpu as pltpu


def _cdiv(a, b):
    return -(-a // b)


def _round_up(a, b):
    return _cdiv(a, b) * b


# ----------------------------------------------------------------------------- Pallas kernel
def _conv1d_kernel(x_ref, h_ref, w_ref, b_ref, o_ref, win_ref, acc_ref, *, K, TL):
    # x_ref: (1, TL, Cin_p)      main rows of this tile's input window (bf16)
    # h_ref: (1, HALO, Cin_p)    halo rows (next TL-block's head)        (bf16)
    # w_ref: (K, Cin_p, Cout_p)  taps, VMEM-resident                     (bf16)
    # b_ref: (1, Cout_p)         bias                                    (f32)
    # o_ref: (1, TL, Cout_p)     output tile                             (f32)
    # win_ref: (TL+HALO, Cin_p) scratch window, acc_ref: (TL, Cout_p) f32 accumulator.
    win_ref[0:TL, :] = x_ref[0]
    win_ref[TL:, :] = h_ref[0]
    # First tap initialises the accumulator (no extra zero pass).
    acc_ref[...] = jnp.dot(win_ref[0:TL, :], w_ref[0],
                           preferred_element_type=jnp.float32)
    for k in range(1, K):  # static unroll: K is small after phase/stride folding
        acc_ref[...] += jnp.dot(win_ref[k:k + TL, :], w_ref[k],
                                preferred_element_type=jnp.float32)
    o_ref[0] = (acc_ref[...] + b_ref[...]).astype(o_ref.dtype)


def conv1d_pallas(x_nlc, w_kio, bias, l_out, *, tile_l=256,
                  compute_dtype=jnp.bfloat16, vmem_budget=28 << 20):
    """Stride-1 VALID conv: y[n, t, o] = sum_{k, c} x[n, t+k, c] * w[k, c, o] + bias[o].

    Computes t = 0 .. l_out-1.  Positions of x past its length are treated as zeros
    (callers rely on that for phase folding / output_padding).  Returns f32 (N, l_out, C_out).
    """
    N, L_in, C_in = x_nlc.shape
    K, _, C_out = w_kio.shape

    c_in_p = _round_up(max(C_in, 1), 128)     # lane-dense contraction
    c_out_p = _round_up(max(C_out, 1), 128)   # lane-dense (unmasked) output stores
    in_bytes = jnp.dtype(compute_dtype).itemsize

    halo = max(8, _round_up(K - 1, 8))        # sublane-aligned halo, >= K-1

    def vmem_est(mult):
        tl_ = mult * halo
        return (2 * (tl_ + halo) * c_in_p * in_bytes   # main + halo, double-buffered
                + 2 * tl_ * c_out_p * 4                # output, double-buffered
                + K * c_in_p * c_out_p * in_bytes      # resident weights
                + c_out_p * 4                          # bias
                + (tl_ + halo) * c_in_p * in_bytes     # window scratch
                + tl_ * c_out_p * 4)                   # f32 accumulator

    mult = max(1, min(tile_l // halo, _cdiv(l_out, halo)))
    while mult > 1 and vmem_est(mult) > vmem_budget:
        mult = max(1, mult // 2)
    tl = mult * halo                                    # output tile length (mult. of 8)

    num_tiles = _cdiv(l_out, tl)
    l_out_pad = num_tiles * tl
    l_in_pad = l_out_pad + halo

    # Pad length & channels, cast to the compute dtype (zero padding is semantically correct).
    x_p = x_nlc
    if L_in < l_in_pad:
        x_p = jnp.pad(x_p, ((0, 0), (0, l_in_pad - L_in), (0, 0)))
    else:
        x_p = x_p[:, :l_in_pad, :]
    if C_in < c_in_p:
        x_p = jnp.pad(x_p, ((0, 0), (0, 0), (0, c_in_p - C_in)))
    x_p = x_p.astype(compute_dtype)

    w_p = jnp.pad(w_kio, ((0, 0), (0, c_in_p - C_in),
                          (0, c_out_p - C_out))).astype(compute_dtype)
    b_p = jnp.pad(bias.astype(jnp.float32), (0, c_out_p - C_out)).reshape(1, c_out_p)

    kernel = functools.partial(_conv1d_kernel, K=K, TL=tl)
    vmem_limit = int(min(max(int(1.5 * vmem_est(mult)), 32 << 20), 56 << 20))

    out = pl.pallas_call(
        kernel,
        out_shape=jax.ShapeDtypeStruct((N, l_out_pad, c_out_p), jnp.float32),
        grid_spec=pltpu.PrefetchScalarGridSpec(
            num_scalar_prefetch=0,
            grid=(N, num_tiles),
            in_specs=[
                # main TL rows of the input window for output tile j
                pl.BlockSpec((1, tl, c_in_p), lambda b, j: (b, j, 0)),
                # halo rows right after the main block (same array, small block)
                pl.BlockSpec((1, halo, c_in_p), lambda b, j: (b, (j + 1) * mult, 0)),
                # weights & bias: constant index map -> stay VMEM resident
                pl.BlockSpec((K, c_in_p, c_out_p), lambda b, j: (0, 0, 0)),
                pl.BlockSpec((1, c_out_p), lambda b, j: (0, 0)),
            ],
            out_specs=pl.BlockSpec((1, tl, c_out_p), lambda b, j: (b, j, 0)),
            scratch_shapes=[
                pltpu.VMEM((tl + halo, c_in_p), compute_dtype),
                pltpu.VMEM((tl, c_out_p), jnp.float32),
            ],
        ),
        compiler_params=pltpu.CompilerParams(
            dimension_semantics=("parallel", "parallel"),
            vmem_limit_bytes=vmem_limit,
        ),
    )(x_p, x_p, w_p, b_p)

    return out[:, :l_out, :C_out]


# ----------------------------------------------------------------------------- module
class Transpose1dLayer:
    """Forward-equivalent of the PyTorch Transpose1dLayer (WaveGAN)."""

    def __init__(self, in_channels, out_channels, kernel_size, stride,
                 padding=11, upsample=None, output_padding=1, *, key):
        self.in_channels = in_channels
        self.out_channels = out_channels
        self.kernel_size = kernel_size
        self.stride = stride
        self.padding = padding
        self.upsample = upsample
        self.output_padding = output_padding

        k1, k2, k3, k4 = jax.random.split(key, 4)
        s_c = 1.0 / (in_channels * kernel_size) ** 0.5
        # Conv1d params (upsample path): weight (C_out, C_in, K), bias (C_out,)
        self.conv_w = jax.random.uniform(k1, (out_channels, in_channels, kernel_size),
                                         jnp.float32, -s_c, s_c)
        self.conv_b = jax.random.uniform(k2, (out_channels,), jnp.float32, -s_c, s_c)
        # ConvTranspose1d params: weight (C_in, C_out, K), bias (C_out,)
        s_t = 1.0 / (out_channels * kernel_size) ** 0.5
        self.tconv_w = jax.random.uniform(k3, (in_channels, out_channels, kernel_size),
                                          jnp.float32, -s_t, s_t)
        self.tconv_b = jax.random.uniform(k4, (out_channels,), jnp.float32, -s_t, s_t)

        K, s, p = kernel_size, stride, padding

        # ---- upsample path: pre-reshape Conv1d weights to kernel layout (K, Cin, Cout),
        #      folding stride > 1 into the input-channel dim (stride-1 kernel only).
        w_kio = jnp.transpose(self.conv_w, (2, 1, 0))                   # (K, Cin, Cout)
        if s > 1:
            k_pad = _round_up(K, s)
            w_kio = jnp.pad(w_kio, ((0, k_pad - K), (0, 0), (0, 0)))
            w_kio = w_kio.reshape(k_pad // s, s, in_channels, out_channels)
            w_kio = w_kio.reshape(k_pad // s, s * in_channels, out_channels)
        self._up_w = w_kio
        self._up_b = self.conv_b

        # ---- transpose path: polyphase decomposition of ConvTranspose1d, all `stride`
        #      output phases folded into the output-channel dim of one stride-1 conv
        #      over the un-dilated input (no zero-stuffing).
        wf = jnp.transpose(self.tconv_w[:, :, ::-1], (2, 0, 1))         # (K, Cin, Cout) flipped
        lp = K - 1 - p                                                  # left pad of dilated input
        k0 = [(lp - r) % s for r in range(s)]                           # first tap of phase r
        d = [(r + k0[r] - lp) // s for r in range(s)]                   # input offset of phase r
        j_taps = [max(0, _cdiv(K - k0[r], s)) for r in range(s)]        # taps in phase r
        d_min = min(d)
        e = [d[r] - d_min for r in range(s)]
        k_fold = max(1, max(j_taps[r] + e[r] for r in range(s)))
        w_fold = jnp.zeros((k_fold, in_channels, s * out_channels), self.tconv_w.dtype)
        for r in range(s):
            for j in range(j_taps[r]):
                w_fold = w_fold.at[e[r] + j, :,
                                   r * out_channels:(r + 1) * out_channels].set(wf[k0[r] + j * s])
        self._tr_w = w_fold
        self._tr_b = jnp.tile(self.tconv_b, s)
        self._tr_shift = d_min          # shift of x before the folded conv (pad/crop)

    def __call__(self, x):
        # x: (N, C_in, L) in PyTorch NCL layout.
        n, _, length = x.shape
        K, s = self.kernel_size, self.stride
        if self.upsample:
            u = int(self.upsample)
            rp = K // 2
            x_nlc = jnp.transpose(x, (0, 2, 1))                         # (N, L, Cin)
            x_up = jnp.repeat(x_nlc, u, axis=1)                         # nearest upsample
            x_up = jnp.pad(x_up, ((0, 0), (rp, rp), (0, 0)))            # ConstantPad1d(K//2, 0)
            lv = u * length + 2 * rp
            l_out = (lv - K) // s + 1
            if s > 1:                                                   # fold stride -> channels
                lv_pad = _round_up(lv, s)
                x_up = jnp.pad(x_up, ((0, 0), (0, lv_pad - lv), (0, 0)))
                x_up = x_up.reshape(n, lv_pad // s, s, self.in_channels)
                x_up = x_up.reshape(n, lv_pad // s, s * self.in_channels)
            y = conv1d_pallas(x_up, self._up_w, self._up_b, l_out)      # (N, L_out, Cout)
            return jnp.transpose(y, (0, 2, 1))                          # (N, Cout, L_out)
        else:
            p, op = self.padding, self.output_padding
            l_out = (length - 1) * s - 2 * p + K + op
            t = _cdiv(l_out, s)
            x_nlc = jnp.transpose(x, (0, 2, 1))                         # (N, L, Cin)
            if self._tr_shift < 0:
                x_in = jnp.pad(x_nlc, ((0, 0), (-self._tr_shift, 0), (0, 0)))
            elif self._tr_shift > 0:
                x_in = x_nlc[:, self._tr_shift:, :]
            else:
                x_in = x_nlc
            out = conv1d_pallas(x_in, self._tr_w, self._tr_b, t)        # (N, T, s*Cout)
            y = out.reshape(n, t, s, self.out_channels)
            y = y.reshape(n, t * s, self.out_channels)[:, :l_out, :]    # un-interleave phases
            return jnp.transpose(y, (0, 2, 1))                          # (N, Cout, L_out)


# ----------------------------------------------------------------------------- pure-JAX reference
def _ref_forward(layer, x):
    hp = lax.Precision.HIGHEST
    if layer.upsample:
        u = int(layer.upsample)
        x_up = jnp.repeat(x, u, axis=-1)
        rp = layer.kernel_size // 2
        x_pad = jnp.pad(x_up, ((0, 0), (0, 0), (rp, rp)))
        y = lax.conv_general_dilated(x_pad, layer.conv_w, (layer.stride,), 'VALID',
                                     dimension_numbers=('NCH', 'OIH', 'NCH'), precision=hp)
        return y + layer.conv_b[None, :, None]
    else:
        K, st, p, op = layer.kernel_size, layer.stride, layer.padding, layer.output_padding
        w = jnp.transpose(layer.tconv_w[:, :, ::-1], (1, 0, 2))         # (C_out, C_in, K)
        y = lax.conv_general_dilated(
            x, w, window_strides=(1,),
            padding=[(K - 1 - p, K - 1 - p + op)],
            lhs_dilation=(st,),
            dimension_numbers=('NCH', 'OIH', 'NCH'), precision=hp)
        return y + layer.tconv_b[None, :, None]


if __name__ == "__main__":
    key = jax.random.PRNGKey(0)
    kx, k1, k2, k3 = jax.random.split(key, 4)
    N, C_in, C_out, L, K = 2, 4, 8, 16, 25

    x = jax.random.normal(kx, (N, C_in, L), jnp.float32)

    # Path 1: upsample=2 -> nearest-Upsample -> ConstantPad1d(12) -> Conv1d(K=25, stride=1)
    layer_up = Transpose1dLayer(C_in, C_out, K, stride=1, upsample=2, key=k1)
    y_up = jax.block_until_ready(layer_up(x))
    assert y_up.shape == (N, C_out, 2 * L), y_up.shape
    assert jnp.allclose(y_up, _ref_forward(layer_up, x), atol=2e-2, rtol=2e-2)

    # Path 2: upsample=None -> ConvTranspose1d(K=25, stride=2, padding=11, output_padding=1)
    layer_tr = Transpose1dLayer(C_in, C_out, K, stride=2, padding=11,
                                upsample=None, output_padding=1, key=k2)
    y_tr = jax.block_until_ready(layer_tr(x))
    assert y_tr.shape == (N, C_out, (L - 1) * 2 - 2 * 11 + K + 1), y_tr.shape
    assert jnp.allclose(y_tr, _ref_forward(layer_tr, x), atol=2e-2, rtol=2e-2)

    # Path 3: upsample=2 with a strided Conv1d (exercises the stride->channel folding).
    layer_us = Transpose1dLayer(C_in, C_out, K, stride=2, upsample=2, key=k3)
    y_us = jax.block_until_ready(layer_us(x))
    assert y_us.shape == (N, C_out, (2 * L + 2 * (K // 2) - K) // 2 + 1), y_us.shape
    assert jnp.allclose(y_us, _ref_forward(layer_us, x), atol=2e-2, rtol=2e-2)

    print("KERNEL_OK")
</pallas_src>

<mosaic_0001>
module attributes {stable_mosaic.version = 11 : i64} {
  func.func @_conv1d_kernel(%arg0: i32, %arg1: i32, %arg2: memref<1x48x128xbf16, #tpu.memory_space<vmem>>, %arg3: memref<1x24x128xbf16, #tpu.memory_space<vmem>>, %arg4: memref<25x128x128xbf16, #tpu.memory_space<vmem>>, %arg5: memref<1x128xf32, #tpu.memory_space<vmem>>, %arg6: memref<1x48x128xf32, #tpu.memory_space<vmem>>, %arg7: memref<72x128xbf16, #tpu.memory_space<vmem>>, %arg8: memref<48x128xf32, #tpu.memory_space<vmem>>) attributes {dimension_semantics = [#tpu.dimension_semantics<parallel>, #tpu.dimension_semantics<parallel>], iteration_bounds = array<i64: 2, 1>, scalar_prefetch = 0 : i64, scratch_operands = 2 : i64, tpu.core_type = #tpu.core_type<tc>, window_params = [{transform_indices = @transform_0, window_bounds = array<i64: 1, 48, 128>}, {transform_indices = @transform_1, window_bounds = array<i64: 1, 24, 128>}, {pipeline_mode = #tpu.pipeline_mode<synchronous>, transform_indices = @transform_2, window_bounds = array<i64: 25, 128, 128>}, {pipeline_mode = #tpu.pipeline_mode<synchronous>, transform_indices = @transform_3, window_bounds = array<i64: 1, 128>}, {transform_indices = @transform_4, window_bounds = array<i64: 1, 48, 128>}]} {
    %c0 = arith.constant 0 : index
    %c0_0 = arith.constant 0 : index
    %c0_1 = arith.constant 0 : index
    %0 = vector.load %arg2[%c0, %c0_0, %c0_1] : memref<1x48x128xbf16, #tpu.memory_space<vmem>>, vector<1x48x128xbf16>
    %1 = vector.shape_cast %0 : vector<1x48x128xbf16> to vector<48x128xbf16>
    %c0_2 = arith.constant 0 : index
    %c0_3 = arith.constant 0 : index
    %2 = vector.load %arg7[%c0_2, %c0_3] : memref<72x128xbf16, #tpu.memory_space<vmem>>, vector<48x128xbf16>
    tpu.vector_store %arg7[%c0_2, %c0_3], %1 {strides = array<i32>} : memref<72x128xbf16, #tpu.memory_space<vmem>>, vector<48x128xbf16>,
    %c0_4 = arith.constant 0 : index
    %c0_5 = arith.constant 0 : index
    %c0_6 = arith.constant 0 : index
    %3 = vector.load %arg3[%c0_4, %c0_5, %c0_6] : memref<1x24x128xbf16, #tpu.memory_space<vmem>>, vector<1x24x128xbf16>
    %4 = vector.shape_cast %3 : vector<1x24x128xbf16> to vector<24x128xbf16>
    %c48 = arith.constant 48 : index
    %c0_7 = arith.constant 0 : index
    %5 = vector.load %arg7[%c48, %c0_7] : memref<72x128xbf16, #tpu.memory_space<vmem>>, vector<24x128xbf16>
    tpu.vector_store %arg7[%c48, %c0_7], %4 {strides = array<i32>} : memref<72x128xbf16, #tpu.memory_space<vmem>>, vector<24x128xbf16>,
    %c0_8 = arith.constant 0 : index
    %c0_9 = arith.constant 0 : index
    %6 = vector.load %arg7[%c0_8, %c0_9] : memref<72x128xbf16, #tpu.memory_space<vmem>>, vector<48x128xbf16>
    %c0_10 = arith.constant 0 : index
    %c0_11 = arith.constant 0 : index
    %c0_12 = arith.constant 0 : index
    %7 = vector.load %arg4[%c0_10, %c0_11, %c0_12] : memref<25x128x128xbf16, #tpu.memory_space<vmem>>, vector<1x128x128xbf16>
    %8 = vector.shape_cast %7 : vector<1x128x128xbf16> to vector<128x128xbf16>
    %cst = arith.constant dense<0.000000e+00> : vector<48x128xf32>
    %9 = tpu.matmul %6, %8, %cst {dimension_numbers = #tpu.dot_dimension_numbers<[1], [0], [0], [1], [0, 0, 1, 1], [], []>} : vector<48x128xbf16>, vector<128x128xbf16>, vector<48x128xf32> -> vector<48x128xf32>
    %c0_13 = arith.constant 0 : index
    %c0_14 = arith.constant 0 : index
    %10 = vector.load %arg8[%c0_13, %c0_14] : memref<48x128xf32, #tpu.memory_space<vmem>>, vector<48x128xf32>
    tpu.vector_store %arg8[%c0_13, %c0_14], %9 {strides = array<i32>} : memref<48x128xf32, #tpu.memory_space<vmem>>, vector<48x128xf32>,
    %c0_15 = arith.constant 0 : index
    %c0_16 = arith.constant 0 : index
    %11 = vector.load %arg8[%c0_15, %c0_16] : memref<48x128xf32, #tpu.memory_space<vmem>>, vector<48x128xf32>
    %c1 = arith.constant 1 : index
    %c0_17 = arith.constant 0 : index
    %12 = vector.load %arg7[%c1, %c0_17] : memref<72x128xbf16, #tpu.memory_space<vmem>>, vector<48x128xbf16>
    %c1_18 = arith.constant 1 : index
    %c0_19 = arith.constant 0 : index
    %c0_20 = arith.constant 0 : index
    %13 = vector.load %arg4[%c1_18, %c0_19, %c0_20] : memref<25x128x128xbf16, #tpu.memory_space<vmem>>, vector<1x128x128xbf16>
    %14 = vector.shape_cast %13 : vector<1x128x128xbf16> to vector<128x128xbf16>
    %cst_21 = arith.constant dense<0.000000e+00> : vector<48x128xf32>
    %15 = tpu.matmul %12, %14, %cst_21 {dimension_numbers = #tpu.dot_dimension_numbers<[1], [0], [0], [1], [0, 0, 1, 1], [], []>} : vector<48x128xbf16>, vector<128x128xbf16>, vector<48x128xf32> -> vector<48x128xf32>
    %16 = arith.addf %11, %15 : vector<48x128xf32>
    %c0_22 = arith.constant 0 : index
    %c0_23 = arith.constant 0 : index
    %17 = vector.load %arg8[%c0_22, %c0_23] : memref<48x128xf32, #tpu.memory_space<vmem>>, vector<48x128xf32>
    tpu.vector_store %arg8[%c0_22, %c0_23], %16 {strides = array<i32>} : memref<48x128xf32, #tpu.memory_space<vmem>>, vector<48x128xf32>,
    %c0_24 = arith.constant 0 : index
    %c0_25 = arith.constant 0 : index
    %18 = vector.load %arg8[%c0_24, %c0_25] : memref<48x128xf32, #tpu.memory_space<vmem>>, vector<48x128xf32>
    %c2 = arith.constant 2 : index
    %c0_26 = arith.constant 0 : index
    %19 = vector.load %arg7[%c2, %c0_26] : memref<72x128xbf16, #tpu.memory_space<vmem>>, vector<48x128xbf16>
    %c2_27 = arith.constant 2 : index
    %c0_28 = arith.constant 0 : index
    %c0_29 = arith.constant 0 : index
    %20 = vector.load %arg4[%c2_27, %c0_28, %c0_29] : memref<25x128x128xbf16, #tpu.memory_space<vmem>>, vector<1x128x128xbf16>
    %21 = vector.shape_cast %20 : vector<1x128x128xbf16> to vector<128x128xbf16>
    %cst_30 = arith.constant dense<0.000000e+00> : vector<48x128xf32>
    %22 = tpu.matmul %19, %21, %cst_30 {dimension_numbers = #tpu.dot_dimension_numbers<[1], [0], [0], [1], [0, 0, 1, 1], [], []>} : vector<48x128xbf16>, vector<128x128xbf16>, vector<48x128xf32> -> vector<48x128xf32>
    %23 = arith.addf %18, %22 : vector<48x128xf32>
    %c0_31 = arith.constant 0 : index
    %c0_32 = arith.constant 0 : index
    %24 = vector.load %arg8[%c0_31, %c0_32] : memref<48x128xf32, #tpu.memory_space<vmem>>, vector<48x128xf32>
    tpu.vector_store %arg8[%c0_31, %c0_32], %23 {strides = array<i32>} : memref<48x128xf32, #tpu.memory_space<vmem>>, vector<48x128xf32>,
    %c0_33 = arith.constant 0 : index
    %c0_34 = arith.constant 0 : index
    %25 = vector.load %arg8[%c0_33, %c0_34] : memref<48x128xf32, #tpu.memory_space<vmem>>, vector<48x128xf32>
    %c3 = arith.constant 3 : index
    %c0_35 = arith.constant 0 : index
    %26 = vector.load %arg7[%c3, %c0_35] : memref<72x128xbf16, #tpu.memory_space<vmem>>, vector<48x128xbf16>
    %c3_36 = arith.constant 3 : index
    %c0_37 = arith.constant 0 : index
    %c0_38 = arith.constant 0 : index
    %27 = vector.load %arg4[%c3_36, %c0_37, %c0_38] : memref<25x128x128xbf16, #tpu.memory_space<vmem>>, vector<1x128x128xbf16>
    %28 = vector.shape_cast %27 : vector<1x128x128xbf16> to vector<128x128xbf16>
    %cst_39 = arith.constant dense<0.000000e+00> : vector<48x128xf32>
    %29 = tpu.matmul %26, %28, %cst_39 {dimension_numbers = #tpu.dot_dimension_numbers<[1], [0], [0], [1], [0, 0, 1, 1], [], []>} : vector<48x128xbf16>, vector<128x128xbf16>, vector<48x128xf32> -> vector<48x128xf32>
    %30 = arith.addf %25, %29 : vector<48x128xf32>
    %c0_40 = arith.constant 0 : index
    %c0_41 = arith.constant 0 : index
    %31 = vector.load %arg8[%c0_40, %c0_41] : memref<48x128xf32, #tpu.memory_space<vmem>>, vector<48x128xf32>
    tpu.vector_store %arg8[%c0_40, %c0_41], %30 {strides = array<i32>} : memref<48x128xf32, #tpu.memory_space<vmem>>, vector<48x128xf32>,
    %c0_42 = arith.constant 0 : index
    %c0_43 = arith.constant 0 : index
    %32 = vector.load %arg8[%c0_42, %c0_43] : memref<48x128xf32, #tpu.memory_space<vmem>>, vector<48x128xf32>
    %c4 = arith.constant 4 : index
    %c0_44 = arith.constant 0 : index
    %33 = vector.load %arg7[%c4, %c0_44] : memref<72x128xbf16, #tpu.memory_space<vmem>>, vector<48x128xbf16>
    %c4_45 = arith.constant 4 : index
    %c0_46 = arith.constant 0 : index
    %c0_47 = arith.constant 0 : index
    %34 = vector.load %arg4[%c4_45, %c0_46, %c0_47] : memref<25x128x128xbf16, #tpu.memory_space<vmem>>, vector<1x128x128xbf16>
    %35 = vector.shape_cast %34 : vector<1x128x128xbf16> to vector<128x128xbf16>
    %cst_48 = arith.constant dense<0.000000e+00> : vector<48x128xf32>
    %36 = tpu.matmul %33, %35, %cst_48 {dimension_numbers = #tpu.dot_dimension_numbers<[1], [0], [0], [1], [0, 0, 1, 1], [], []>} : vector<48x128xbf16>, vector<128x128xbf16>, vector<48x128xf32> -> vector<48x128xf32>
    %37 = arith.addf %32, %36 : vector<48x128xf32>
    %c0_49 = arith.constant 0 : index
    %c0_50 = arith.constant 0 : index
    %38 = vector.load %arg8[%c0_49, %c0_50] : memref<48x128xf32, #tpu.memory_space<vmem>>, vector<48x128xf32>
    tpu.vector_store %arg8[%c0_49, %c0_50], %37 {strides = array<i32>} : memref<48x128xf32, #tpu.memory_space<vmem>>, vector<48x128xf32>,
    %c0_51 = arith.constant 0 : index
    %c0_52 = arith.constant 0 : index
    %39 = vector.load %arg8[%c0_51, %c0_52] : memref<48x128xf32, #tpu.memory_space<vmem>>, vector<48x128xf32>
    %c5 = arith.constant 5 : index
    %c0_53 = arith.constant 0 : index
    %40 = vector.load %arg7[%c5, %c0_53] : memref<72x128xbf16, #tpu.memory_space<vmem>>, vector<48x128xbf16>
    %c5_54 = arith.constant 5 : index
    %c0_55 = arith.constant 0 : index
    %c0_56 = arith.constant 0 : index
    %41 = vector.load %arg4[%c5_54, %c0_55, %c0_56] : memref<25x128x128xbf16, #tpu.memory_space<vmem>>, vector<1x128x128xbf16>
    %42 = vector.shape_cast %41 : vector<1x128x128xbf16> to vector<128x128xbf16>
    %cst_57 = arith.constant dense<0.000000e+00> : vector<48x128xf32>
    %43 = tpu.matmul %40, %42, %cst_57 {dimension_numbers = #tpu.dot_dimension_numbers<[1], [0], [0], [1], [0, 0, 1, 1], [], []>} : vector<48x128xbf16>, vector<128x128xbf16>, vector<48x128xf32> -> vector<48x128xf32>
    %44 = arith.addf %39, %43 : vector<48x128xf32>
    %c0_58 = arith.constant 0 : index
    %c0_59 = arith.constant 0 : index
    %45 = vector.load %arg8[%c0_58, %c0_59] : memref<48x128xf32, #tpu.memory_space<vmem>>, vector<48x128xf32>
    tpu.vector_store %arg8[%c0_58, %c0_59], %44 {strides = array<i32>} : memref<48x128xf32, #tpu.memory_space<vmem>>, vector<48x128xf32>,
    %c0_60 = arith.constant 0 : index
    %c0_61 = arith.constant 0 : index
    %46 = vector.load %arg8[%c0_60, %c0_61] : memref<48x128xf32, #tpu.memory_space<vmem>>, vector<48x128xf32>
    %c6 = arith.constant 6 : index
    %c0_62 = arith.constant 0 : index
    %47 = vector.load %arg7[%c6, %c0_62] : memref<72x128xbf16, #tpu.memory_space<vmem>>, vector<48x128xbf16>
    %c6_63 = arith.constant 6 : index
    %c0_64 = arith.constant 0 : index
    %c0_65 = arith.constant 0 : index
    %48 = vector.load %arg4[%c6_63, %c0_64, %c0_65] : memref<25x128x128xbf16, #tpu.memory_space<vmem>>, vector<1x128x128xbf16>
    %49 = vector.shape_cast %48 : vector<1x128x128xbf16> to vector<128x128xbf16>
    %cst_66 = arith.constant dense<0.000000e+00> : vector<48x128xf32>
    %50 = tpu.matmul %47, %49, %cst_66 {dimension_numbers = #tpu.dot_dimension_numbers<[1], [0], [0], [1], [0, 0, 1, 1], [], []>} : vector<48x128xbf16>, vector<128x128xbf16>, vector<48x128xf32> -> vector<48x128xf32>
    %51 = arith.addf %46, %50 : vector<48x128xf32>
    %c0_67 = arith.constant 0 : index
    %c0_68 = arith.constant 0 : index
    %52 = vector.load %arg8[%c0_67, %c0_68] : memref<48x128xf32, #tpu.memory_space<vmem>>, vector<48x128xf32>
    tpu.vector_store %arg8[%c0_67, %c0_68], %51 {strides = array<i32>} : memref<48x128xf32, #tpu.memory_space<vmem>>, vector<48x128xf32>,
    %c0_69 = arith.constant 0 : index
    %c0_70 = arith.constant 0 : index
    %53 = vector.load %arg8[%c0_69, %c0_70] : memref<48x128xf32, #tpu.memory_space<vmem>>, vector<48x128xf32>
    %c7 = arith.constant 7 : index
    %c0_71 = arith.constant 0 : index
    %54 = vector.load %arg7[%c7, %c0_71] : memref<72x128xbf16, #tpu.memory_space<vmem>>, vector<48x128xbf16>
    %c7_72 = arith.constant 7 : index
    %c0_73 = arith.constant 0 : index
    %c0_74 = arith.constant 0 : index
    %55 = vector.load %arg4[%c7_72, %c0_73, %c0_74] : memref<25x128x128xbf16, #tpu.memory_space<vmem>>, vector<1x128x128xbf16>
    %56 = vector.shape_cast %55 : vector<1x128x128xbf16> to vector<128x128xbf16>
    %cst_75 = arith.constant dense<0.000000e+00> : vector<48x128xf32>
    %57 = tpu.matmul %54, %56, %cst_75 {dimension_numbers = #tpu.dot_dimension_numbers<[1], [0], [0], [1], [0, 0, 1, 1], [], []>} : vector<48x128xbf16>, vector<128x128xbf16>, vector<48x128xf32> -> vector<48x128xf32>
    %58 = arith.addf %53, %57 : vector<48x128xf32>
    %c0_76 = arith.constant 0 : index
    %c0_77 = arith.constant 0 : index
    %59 = vector.load %arg8[%c0_76, %c0_77] : memref<48x128xf32, #tpu.memory_space<vmem>>, vector<48x128xf32>
    tpu.vector_store %arg8[%c0_76, %c0_77], %58 {strides = array<i32>} : memref<48x128xf32, #tpu.memory_space<vmem>>, vector<48x128xf32>,
    %c0_78 = arith.constant 0 : index
    %c0_79 = arith.constant 0 : index
    %60 = vector.load %arg8[%c0_78, %c0_79] : memref<48x128xf32, #tpu.memory_space<vmem>>, vector<48x128xf32>
    %c8 = arith.constant 8 : index
    %c0_80 = arith.constant 0 : index
    %61 = vector.load %arg7[%c8, %c0_80] : memref<72x128xbf16, #tpu.memory_space<vmem>>, vector<48x128xbf16>
    %c8_81 = arith.constant 8 : index
    %c0_82 = arith.constant 0 : index
    %c0_83 = arith.constant 0 : index
    %62 = vector.load %arg4[%c8_81, %c0_82, %c0_83] : memref<25x128x128xbf16, #tpu.memory_space<vmem>>, vector<1x128x128xbf16>
    %63 = vector.shape_cast %62 : vector<1x128x128xbf16> to vector<128x128xbf16>
    %cst_84 = arith.constant dense<0.000000e+00> : vector<48x128xf32>
    %64 = tpu.matmul %61, %63, %cst_84 {dimension_numbers = #tpu.dot_dimension_numbers<[1], [0], [0], [1], [0, 0, 1, 1], [], []>} : vector<48x128xbf16>, vector<128x128xbf16>, vector<48x128xf32> -> vector<48x128xf32>
    %65 = arith.addf %60, %64 : vector<48x128xf32>
    %c0_85 = arith.constant 0 : index
    %c0_86 = arith.constant 0 : index
    %66 = vector.load %arg8[%c0_85, %c0_86] : memref<48x128xf32, #tpu.memory_space<vmem>>, vector<48x128xf32>
    tpu.vector_store %arg8[%c0_85, %c0_86], %65 {strides = array<i32>} : memref<48x128xf32, #tpu.memory_space<vmem>>, vector<48x128xf32>,
    %c0_87 = arith.constant 0 : index
    %c0_88 = arith.constant 0 : index
    %67 = vector.load %arg8[%c0_87, %c0_88] : memref<48x128xf32, #tpu.memory_space<vmem>>, vector<48x128xf32>
    %c9 = arith.constant 9 : index
    %c0_89 = arith.constant 0 : index
    %68 = vector.load %arg7[%c9, %c0_89] : memref<72x128xbf16, #tpu.memory_space<vmem>>, vector<48x128xbf16>
    %c9_90 = arith.constant 9 : index
    %c0_91 = arith.constant 0 : index
    %c0_92 = arith.constant 0 : index
    %69 = vector.load %arg4[%c9_90, %c0_91, %c0_92] : memref<25x128x128xbf16, #tpu.memory_space<vmem>>, vector<1x128x128xbf16>
    %70 = vector.shape_cast %69 : vector<1x128x128xbf16> to vector<128x128xbf16>
    %cst_93 = arith.constant dense<0.000000e+00> : vector<48x128xf32>
    %71 = tpu.matmul %68, %70, %cst_93 {dimension_numbers = #tpu.dot_dimension_numbers<[1], [0], [0], [1], [0, 0, 1, 1], [], []>} : vector<48x128xbf16>, vector<128x128xbf16>, vector<48x128xf32> -> vector<48x128xf32>
    %72 = arith.addf %67, %71 : vector<48x128xf32>
    %c0_94 = arith.constant 0 : index
    %c0_95 = arith.constant 0 : index
    %73 = vector.load %arg8[%c0_94, %c0_95] : memref<48x128xf32, #tpu.memory_space<vmem>>, vector<48x128xf32>
    tpu.vector_store %arg8[%c0_94, %c0_95], %72 {strides = array<i32>} : memref<48x128xf32, #tpu.memory_space<vmem>>, vector<48x128xf32>,
    %c0_96 = arith.constant 0 : index
    %c0_97 = arith.constant 0 : index
    %74 = vector.load %arg8[%c0_96, %c0_97] : memref<48x128xf32, #tpu.memory_space<vmem>>, vector<48x128xf32>
    %c10 = arith.constant 10 : index
    %c0_98 = arith.constant 0 : index
    %75 = vector.load %arg7[%c10, %c0_98] : memref<72x128xbf16, #tpu.memory_space<vmem>>, vector<48x128xbf16>
    %c10_99 = arith.constant 10 : index
    %c0_100 = arith.constant 0 : index
    %c0_101 = arith.constant 0 : index
    %76 = vector.load %arg4[%c10_99, %c0_100, %c0_101] : memref<25x128x128xbf16, #tpu.memory_space<vmem>>, vector<1x128x128xbf16>
    %77 = vector.shape_cast %76 : vector<1x128x128xbf16> to vector<128x128xbf16>
    %cst_102 = arith.constant dense<0.000000e+00> : vector<48x128xf32>
    %78 = tpu.matmul %75, %77, %cst_102 {dimension_numbers = #tpu.dot_dimension_numbers<[1], [0], [0], [1], [0, 0, 1, 1], [], []>} : vector<48x128xbf16>, vector<128x128xbf16>, vector<48x128xf32> -> vector<48x128xf32>
    %79 = arith.addf %74, %78 : vector<48x128xf32>
    %c0_103 = arith.constant 0 : index
    %c0_104 = arith.constant 0 : index
    %80 = vector.load %arg8[%c0_103, %c0_104] : memref<48x128xf32, #tpu.memory_space<vmem>>, vector<48x128xf32>
    tpu.vector_store %arg8[%c0_103, %c0_104], %79 {strides = array<i32>} : memref<48x128xf32, #tpu.memory_space<vmem>>, vector<48x128xf32>,
    %c0_105 = arith.constant 0 : index
    %c0_106 = arith.constant 0 : index
    %81 = vector.load %arg8[%c0_105, %c0_106] : memref<48x128xf32, #tpu.memory_space<vmem>>, vector<48x128xf32>
    %c11 = arith.constant 11 : index
    %c0_107 = arith.constant 0 : index
    %82 = vector.load %arg7[%c11, %c0_107] : memref<72x128xbf16, #tpu.memory_space<vmem>>, vector<48x128xbf16>
    %c11_108 = arith.constant 11 : index
    %c0_109 = arith.constant 0 : index
    %c0_110 = arith.constant 0 : index
    %83 = vector.load %arg4[%c11_108, %c0_109, %c0_110] : memref<25x128x128xbf16, #tpu.memory_space<vmem>>, vector<1x128x128xbf16>
    %84 = vector.shape_cast %83 : vector<1x128x128xbf16> to vector<128x128xbf16>
    %cst_111 = arith.constant dense<0.000000e+00> : vector<48x128xf32>
    %85 = tpu.matmul %82, %84, %cst_111 {dimension_numbers = #tpu.dot_dimension_numbers<[1], [0], [0], [1], [0, 0, 1, 1], [], []>} : vector<48x128xbf16>, vector<128x128xbf16>, vector<48x128xf32> -> vector<48x128xf32>
    %86 = arith.addf %81, %85 : vector<48x128xf32>
    %c0_112 = arith.constant 0 : index
    %c0_113 = arith.constant 0 : index
    %87 = vector.load %arg8[%c0_112, %c0_113] : memref<48x128xf32, #tpu.memory_space<vmem>>, vector<48x128xf32>
    tpu.vector_store %arg8[%c0_112, %c0_113], %86 {strides = array<i32>} : memref<48x128xf32, #tpu.memory_space<vmem>>, vector<48x128xf32>,
    %c0_114 = arith.constant 0 : index
    %c0_115 = arith.constant 0 : index
    %88 = vector.load %arg8[%c0_114, %c0_115] : memref<48x128xf32, #tpu.memory_space<vmem>>, vector<48x128xf32>
    %c12 = arith.constant 12 : index
    %c0_116 = arith.constant 0 : index
    %89 = vector.load %arg7[%c12, %c0_116] : memref<72x128xbf16, #tpu.memory_space<vmem>>, vector<48x128xbf16>
    %c12_117 = arith.constant 12 : index
    %c0_118 = arith.constant 0 : index
    %c0_119 = arith.constant 0 : index
    %90 = vector.load %arg4[%c12_117, %c0_118, %c0_119] : memref<25x128x128xbf16, #tpu.memory_space<vmem>>, vector<1x128x128xbf16>
    %91 = vector.shape_cast %90 : vector<1x128x128xbf16> to vector<128x128xbf16>
    %cst_120 = arith.constant dense<0.000000e+00> : vector<48x128xf32>
    %92 = tpu.matmul %89, %91, %cst_120 {dimension_numbers = #tpu.dot_dimension_numbers<[1], [0], [0], [1], [0, 0, 1, 1], [], []>} : vector<48x128xbf16>, vector<128x128xbf16>, vector<48x128xf32> -> vector<48x128xf32>
    %93 = arith.addf %88, %92 : vector<48x128xf32>
    %c0_121 = arith.constant 0 : index
    %c0_122 = arith.constant 0 : index
    %94 = vector.load %arg8[%c0_121, %c0_122] : memref<48x128xf32, #tpu.memory_space<vmem>>, vector<48x128xf32>
    tpu.vector_store %arg8[%c0_121, %c0_122], %93 {strides = array<i32>} : memref<48x128xf32, #tpu.memory_space<vmem>>, vector<48x128xf32>,
    %c0_123 = arith.constant 0 : index
    %c0_124 = arith.constant 0 : index
    %95 = vector.load %arg8[%c0_123, %c0_124] : memref<48x128xf32, #tpu.memory_space<vmem>>, vector<48x128xf32>
    %c13 = arith.constant 13 : index
    %c0_125 = arith.constant 0 : index
    %96 = vector.load %arg7[%c13, %c0_125] : memref<72x128xbf16, #tpu.memory_space<vmem>>, vector<48x128xbf16>
    %c13_126 = arith.constant 13 : index
    %c0_127 = arith.constant 0 : index
    %c0_128 = arith.constant 0 : index
    %97 = vector.load %arg4[%c13_126, %c0_127, %c0_128] : memref<25x128x128xbf16, #tpu.memory_space<vmem>>, vector<1x128x128xbf16>
    %98 = vector.shape_cast %97 : vector<1x128x128xbf16> to vector<128x128xbf16>
    %cst_129 = arith.constant dense<0.000000e+00> : vector<48x128xf32>
    %99 = tpu.matmul %96, %98, %cst_129 {dimension_numbers = #tpu.dot_dimension_numbers<[1], [0], [0], [1], [0, 0, 1, 1], [], []>} : vector<48x128xbf16>, vector<128x128xbf16>, vector<48x128xf32> -> vector<48x128xf32>
    %100 = arith.addf %95, %99 : vector<48x128xf32>
    %c0_130 = arith.constant 0 : index
    %c0_131 = arith.constant 0 : index
    %101 = vector.load %arg8[%c0_130, %c0_131] : memref<48x128xf32, #tpu.memory_space<vmem>>, vector<48x128xf32>
    tpu.vector_store %arg8[%c0_130, %c0_131], %100 {strides = array<i32>} : memref<48x128xf32, #tpu.memory_space<vmem>>, vector<48x128xf32>,
    %c0_132 = arith.constant 0 : index
    %c0_133 = arith.constant 0 : index
    %102 = vector.load %arg8[%c0_132, %c0_133] : memref<48x128xf32, #tpu.memory_space<vmem>>, vector<48x128xf32>
    %c14 = arith.constant 14 : index
    %c0_134 = arith.constant 0 : index
    %103 = vector.load %arg7[%c14, %c0_134] : memref<72x128xbf16, #tpu.memory_space<vmem>>, vector<48x128xbf16>
    %c14_135 = arith.constant 14 : index
    %c0_136 = arith.constant 0 : index
    %c0_137 = arith.constant 0 : index
    %104 = vector.load %arg4[%c14_135, %c0_136, %c0_137] : memref<25x128x128xbf16, #tpu.memory_space<vmem>>, vector<1x128x128xbf16>
    %105 = vector.shape_cast %104 : vector<1x128x128xbf16> to vector<128x128xbf16>
    %cst_138 = arith.constant dense<0.000000e+00> : vector<48x128xf32>
    %106 = tpu.matmul %103, %105, %cst_138 {dimension_numbers = #tpu.dot_dimension_numbers<[1], [0], [0], [1], [0, 0, 1, 1], [], []>} : vector<48x128xbf16>, vector<128x128xbf16>, vector<48x128xf32> -> vector<48x128xf32>
    %107 = arith.addf %102, %106 : vector<48x128xf32>
    %c0_139 = arith.constant 0 : index
    %c0_140 = arith.constant 0 : index
    %108 = vector.load %arg8[%c0_139, %c0_140] : memref<48x128xf32, #tpu.memory_space<vmem>>, vector<48x128xf32>
    tpu.vector_store %arg8[%c0_139, %c0_140], %107 {strides = array<i32>} : memref<48x128xf32, #tpu.memory_space<vmem>>, vector<48x128xf32>,
    %c0_141 = arith.constant 0 : index
    %c0_142 = arith.constant 0 : index
    %109 = vector.load %arg8[%c0_141, %c0_142] : memref<48x128xf32, #tpu.memory_space<vmem>>, vector<48x128xf32>
    %c15 = arith.constant 15 : index
    %c0_143 = arith.constant 0 : index
    %110 = vector.load %arg7[%c15, %c0_143] : memref<72x128xbf16, #tpu.memory_space<vmem>>, vector<48x128xbf16>
    %c15_144 = arith.constant 15 : index
    %c0_145 = arith.constant 0 : index
    %c0_146 = arith.constant 0 : index
    %111 = vector.load %arg4[%c15_144, %c0_145, %c0_146] : memref<25x128x128xbf16, #tpu.memory_space<vmem>>, vector<1x128x128xbf16>
    %112 = vector.shape_cast %111 : vector<1x128x128xbf16> to vector<128x128xbf16>
    %cst_147 = arith.constant dense<0.000000e+00> : vector<48x128xf32>
    %113 = tpu.matmul %110, %112, %cst_147 {dimension_numbers = #tpu.dot_dimension_numbers<[1], [0], [0], [1], [0, 0, 1, 1], [], []>} : vector<48x128xbf16>, vector<128x128xbf16>, vector<48x128xf32> -> vector<48x128xf32>
    %114 = arith.addf %109, %113 : vector<48x128xf32>
    %c0_148 = arith.constant 0 : index
    %c0_149 = arith.constant 0 : index
    %115 = vector.load %arg8[%c0_148, %c0_149] : memref<48x128xf32, #tpu.memory_space<vmem>>, vector<48x128xf32>
    tpu.vector_store %arg8[%c0_148, %c0_149], %114 {strides = array<i32>} : memref<48x128xf32, #tpu.memory_space<vmem>>, vector<48x128xf32>,
    %c0_150 = arith.constant 0 : index
    %c0_151 = arith.constant 0 : index
    %116 = vector.load %arg8[%c0_150, %c0_151] : memref<48x128xf32, #tpu.memory_space<vmem>>, vector<48x128xf32>
    %c16 = arith.constant 16 : index
    %c0_152 = arith.constant 0 : index
    %117 = vector.load %arg7[%c16, %c0_152] : memref<72x128xbf16, #tpu.memory_space<vmem>>, vector<48x128xbf16>
    %c16_153 = arith.constant 16 : index
    %c0_154 = arith.constant 0 : index
    %c0_155 = arith.constant 0 : index
    %118 = vector.load %arg4[%c16_153, %c0_154, %c0_155] : memref<25x128x128xbf16, #tpu.memory_space<vmem>>, vector<1x128x128xbf16>
    %119 = vector.shape_cast %118 : vector<1x128x128xbf16> to vector<128x128xbf16>
    %cst_156 = arith.constant dense<0.000000e+00> : vector<48x128xf32>
    %120 = tpu.matmul %117, %119, %cst_156 {dimension_numbers = #tpu.dot_dimension_numbers<[1], [0], [0], [1], [0, 0, 1, 1], [], []>} : vector<48x128xbf16>, vector<128x128xbf16>, vector<48x128xf32> -> vector<48x128xf32>
    %121 = arith.addf %116, %120 : vector<48x128xf32>
    %c0_157 = arith.constant 0 : index
    %c0_158 = arith.constant 0 : index
    %122 = vector.load %arg8[%c0_157, %c0_158] : memref<48x128xf32, #tpu.memory_space<vmem>>, vector<48x128xf32>
    tpu.vector_store %arg8[%c0_157, %c0_158], %121 {strides = array<i32>} : memref<48x128xf32, #tpu.memory_space<vmem>>, vector<48x128xf32>,
    %c0_159 = arith.constant 0 : index
    %c0_160 = arith.constant 0 : index
    %123 = vector.load %arg8[%c0_159, %c0_160] : memref<48x128xf32, #tpu.memory_space<vmem>>, vector<48x128xf32>
    %c17 = arith.constant 17 : index
    %c0_161 = arith.constant 0 : index
    %124 = vector.load %arg7[%c17, %c0_161] : memref<72x128xbf16, #tpu.memory_space<vmem>>, vector<48x128xbf16>
    %c17_162 = arith.constant 17 : index
    %c0_163 = arith.constant 0 : index
    %c0_164 = arith.constant 0 : index
    %125 = vector.load %arg4[%c17_162, %c0_163, %c0_164] : memref<25x128x128xbf16, #tpu.memory_space<vmem>>, vector<1x128x128xbf16>
    %126 = vector.shape_cast %125 : vector<1x128x128xbf16> to vector<128x128xbf16>
    %cst_165 = arith.constant dense<0.000000e+00> : vector<48x128xf32>
    %127 = tpu.matmul %124, %126, %cst_165 {dimension_numbers = #tpu.dot_dimension_numbers<[1], [0], [0], [1], [0, 0, 1, 1], [], []>} : vector<48x128xbf16>, vector<128x128xbf16>, vector<48x128xf32> -> vector<48x128xf32>
    %128 = arith.addf %123, %127 : vector<48x128xf32>
    %c0_166 = arith.constant 0 : index
    %c0_167 = arith.constant 0 : index
    %129 = vector.load %arg8[%c0_166, %c0_167] : memref<48x128xf32, #tpu.memory_space<vmem>>, vector<48x128xf32>
    tpu.vector_store %arg8[%c0_166, %c0_167], %128 {strides = array<i32>} : memref<48x128xf32, #tpu.memory_space<vmem>>, vector<48x128xf32>,
    %c0_168 = arith.constant 0 : index
    %c0_169 = arith.constant 0 : index
    %130 = vector.load %arg8[%c0_168, %c0_169] : memref<48x128xf32, #tpu.memory_space<vmem>>, vector<48x128xf32>
    %c18 = arith.constant 18 : index
    %c0_170 = arith.constant 0 : index
    %131 = vector.load %arg7[%c18, %c0_170] : memref<72x128xbf16, #tpu.memory_space<vmem>>, vector<48x128xbf16>
    %c18_171 = arith.constant 18 : index
    %c0_172 = arith.constant 0 : index
    %c0_173 = arith.constant 0 : index
    %132 = vector.load %arg4[%c18_171, %c0_172, %c0_173] : memref<25x128x128xbf16, #tpu.memory_space<vmem>>, vector<1x128x128xbf16>
    %133 = vector.shape_cast %132 : vector<1x128x128xbf16> to vector<128x128xbf16>
    %cst_174 = arith.constant dense<0.000000e+00> : vector<48x128xf32>
    %134 = tpu.matmul %131, %133, %cst_174 {dimension_numbers = #tpu.dot_dimension_numbers<[1], [0], [0], [1], [0, 0, 1, 1], [], []>} : vector<48x128xbf16>, vector<128x128xbf16>, vector<48x128xf32> -> vector<48x128xf32>
    %135 = arith.addf %130, %134 : vector<48x128xf32>
    %c0_175 = arith.constant 0 : index
    %c0_176 = arith.constant 0 : index
    %136 = vector.load %arg8[%c0_175, %c0_176] : memref<48x128xf32, #tpu.memory_space<vmem>>, vector<48x128xf32>
    tpu.vector_store %arg8[%c0_175, %c0_176], %135 {strides = array<i32>} : memref<48x128xf32, #tpu.memory_space<vmem>>, vector<48x128xf32>,
    %c0_177 = arith.constant 0 : index
    %c0_178 = arith.constant 0 : index
    %137 = vector.load %arg8[%c0_177, %c0_178] : memref<48x128xf32, #tpu.memory_space<vmem>>, vector<48x128xf32>
    %c19 = arith.constant 19 : index
    %c0_179 = arith.constant 0 : index
    %138 = vector.load %arg7[%c19, %c0_179] : memref<72x128xbf16, #tpu.memory_space<vmem>>, vector<48x128xbf16>
    %c19_180 = arith.constant 19 : index
    %c0_181 = arith.constant 0 : index
    %c0_182 = arith.constant 0 : index
    %139 = vector.load %arg4[%c19_180, %c0_181, %c0_182] : memref<25x128x128xbf16, #tpu.memory_space<vmem>>, vector<1x128x128xbf16>
    %140 = vector.shape_cast %139 : vector<1x128x128xbf16> to vector<128x128xbf16>
    %cst_183 = arith.constant dense<0.000000e+00> : vector<48x128xf32>
    %141 = tpu.matmul %138, %140, %cst_183 {dimension_numbers = #tpu.dot_dimension_numbers<[1], [0], [0], [1], [0, 0, 1, 1], [], []>} : vector<48x128xbf16>, vector<128x128xbf16>, vector<48x128xf32> -> vector<48x128xf32>
    %142 = arith.addf %137, %141 : vector<48x128xf32>
    %c0_184 = arith.constant 0 : index
    %c0_185 = arith.constant 0 : index
    %143 = vector.load %arg8[%c0_184, %c0_185] : memref<48x128xf32, #tpu.memory_space<vmem>>, vector<48x128xf32>
    tpu.vector_store %arg8[%c0_184, %c0_185], %142 {strides = array<i32>} : memref<48x128xf32, #tpu.memory_space<vmem>>, vector<48x128xf32>,
    %c0_186 = arith.constant 0 : index
    %c0_187 = arith.constant 0 : index
    %144 = vector.load %arg8[%c0_186, %c0_187] : memref<48x128xf32, #tpu.memory_space<vmem>>, vector<48x128xf32>
    %c20 = arith.constant 20 : index
    %c0_188 = arith.constant 0 : index
    %145 = vector.load %arg7[%c20, %c0_188] : memref<72x128xbf16, #tpu.memory_space<vmem>>, vector<48x128xbf16>
    %c20_189 = arith.constant 20 : index
    %c0_190 = arith.constant 0 : index
    %c0_191 = arith.constant 0 : index
    %146 = vector.load %arg4[%c20_189, %c0_190, %c0_191] : memref<25x128x128xbf16, #tpu.memory_space<vmem>>, vector<1x128x128xbf16>
    %147 = vector.shape_cast %146 : vector<1x128x128xbf16> to vector<128x128xbf16>
    %cst_192 = arith.constant dense<0.000000e+00> : vector<48x128xf32>
    %148 = tpu.matmul %145, %147, %cst_192 {dimension_numbers = #tpu.dot_dimension_numbers<[1], [0], [0], [1], [0, 0, 1, 1], [], []>} : vector<48x128xbf16>, vector<128x128xbf16>, vector<48x128xf32> -> vector<48x128xf32>
    %149 = arith.addf %144, %148 : vector<48x128xf32>
    %c0_193 = arith.constant 0 : index
    %c0_194 = arith.constant 0 : index
    %150 = vector.load %arg8[%c0_193, %c0_194] : memref<48x128xf32, #tpu.memory_space<vmem>>, vector<48x128xf32>
    tpu.vector_store %arg8[%c0_193, %c0_194], %149 {strides = array<i32>} : memref<48x128xf32, #tpu.memory_space<vmem>>, vector<48x128xf32>,
    %c0_195 = arith.constant 0 : index
    %c0_196 = arith.constant 0 : index
    %151 = vector.load %arg8[%c0_195, %c0_196] : memref<48x128xf32, #tpu.memory_space<vmem>>, vector<48x128xf32>
    %c21 = arith.constant 21 : index
    %c0_197 = arith.constant 0 : index
    %152 = vector.load %arg7[%c21, %c0_197] : memref<72x128xbf16, #tpu.memory_space<vmem>>, vector<48x128xbf16>
    %c21_198 = arith.constant 21 : index
    %c0_199 = arith.constant 0 : index
    %c0_200 = arith.constant 0 : index
    %153 = vector.load %arg4[%c21_198, %c0_199, %c0_200] : memref<25x128x128xbf16, #tpu.memory_space<vmem>>, vector<1x128x128xbf16>
    %154 = vector.shape_cast %153 : vector<1x128x128xbf16> to vector<128x128xbf16>
    %cst_201 = arith.constant dense<0.000000e+00> : vector<48x128xf32>
    %155 = tpu.matmul %152, %154, %cst_201 {dimension_numbers = #tpu.dot_dimension_numbers<[1], [0], [0], [1], [0, 0, 1, 1], [], []>} : vector<48x128xbf16>, vector<128x128xbf16>, vector<48x128xf32> -> vector<48x128xf32>
    %156 = arith.addf %151, %155 : vector<48x128xf32>
    %c0_202 = arith.constant 0 : index
    %c0_203 = arith.constant 0 : index
    %157 = vector.load %arg8[%c0_202, %c0_203] : memref<48x128xf32, #tpu.memory_space<vmem>>, vector<48x128xf32>
    tpu.vector_store %arg8[%c0_202, %c0_203], %156 {strides = array<i32>} : memref<48x128xf32, #tpu.memory_space<vmem>>, vector<48x128xf32>,
    %c0_204 = arith.constant 0 : index
    %c0_205 = arith.constant 0 : index
    %158 = vector.load %arg8[%c0_204, %c0_205] : memref<48x128xf32, #tpu.memory_space<vmem>>, vector<48x128xf32>
    %c22 = arith.constant 22 : index
    %c0_206 = arith.constant 0 : index
    %159 = vector.load %arg7[%c22, %c0_206] : memref<72x128xbf16, #tpu.memory_space<vmem>>, vector<48x128xbf16>
    %c22_207 = arith.constant 22 : index
    %c0_208 = arith.constant 0 : index
    %c0_209 = arith.constant 0 : index
    %160 = vector.load %arg4[%c22_207, %c0_208, %c0_209] : memref<25x128x128xbf16, #tpu.memory_space<vmem>>, vector<1x128x128xbf16>
    %161 = vector.shape_cast %160 : vector<1x128x128xbf16> to vector<128x128xbf16>
    %cst_210 = arith.constant dense<0.000000e+00> : vector<48x128xf32>
    %162 = tpu.matmul %159, %161, %cst_210 {dimension_numbers = #tpu.dot_dimension_numbers<[1], [0], [0], [1], [0, 0, 1, 1], [], []>} : vector<48x128xbf16>, vector<128x128xbf16>, vector<48x128xf32> -> vector<48x128xf32>
    %163 = arith.addf %158, %162 : vector<48x128xf32>
    %c0_211 = arith.constant 0 : index
    %c0_212 = arith.constant 0 : index
    %164 = vector.load %arg8[%c0_211, %c0_212] : memref<48x128xf32, #tpu.memory_space<vmem>>, vector<48x128xf32>
    tpu.vector_store %arg8[%c0_211, %c0_212], %163 {strides = array<i32>} : memref<48x128xf32, #tpu.memory_space<vmem>>, vector<48x128xf32>,
    %c0_213 = arith.constant 0 : index
    %c0_214 = arith.constant 0 : index
    %165 = vector.load %arg8[%c0_213, %c0_214] : memref<48x128xf32, #tpu.memory_space<vmem>>, vector<48x128xf32>
    %c23 = arith.constant 23 : index
    %c0_215 = arith.constant 0 : index
    %166 = vector.load %arg7[%c23, %c0_215] : memref<72x128xbf16, #tpu.memory_space<vmem>>, vector<48x128xbf16>
    %c23_216 = arith.constant 23 : index
    %c0_217 = arith.constant 0 : index
    %c0_218 = arith.constant 0 : index
    %167 = vector.load %arg4[%c23_216, %c0_217, %c0_218] : memref<25x128x128xbf16, #tpu.memory_space<vmem>>, vector<1x128x128xbf16>
    %168 = vector.shape_cast %167 : vector<1x128x128xbf16> to vector<128x128xbf16>
    %cst_219 = arith.constant dense<0.000000e+00> : vector<48x128xf32>
    %169 = tpu.matmul %166, %168, %cst_219 {dimension_numbers = #tpu.dot_dimension_numbers<[1], [0], [0], [1], [0, 0, 1, 1], [], []>} : vector<48x128xbf16>, vector<128x128xbf16>, vector<48x128xf32> -> vector<48x128xf32>
    %170 = arith.addf %165, %169 : vector<48x128xf32>
    %c0_220 = arith.constant 0 : index
    %c0_221 = arith.constant 0 : index
    %171 = vector.load %arg8[%c0_220, %c0_221] : memref<48x128xf32, #tpu.memory_space<vmem>>, vector<48x128xf32>
    tpu.vector_store %arg8[%c0_220, %c0_221], %170 {strides = array<i32>} : memref<48x128xf32, #tpu.memory_space<vmem>>, vector<48x128xf32>,
    %c0_222 = arith.constant 0 : index
    %c0_223 = arith.constant 0 : index
    %172 = vector.load %arg8[%c0_222, %c0_223] : memref<48x128xf32, #tpu.memory_space<vmem>>, vector<48x128xf32>
    %c24 = arith.constant 24 : index
    %c0_224 = arith.constant 0 : index
    %173 = vector.load %arg7[%c24, %c0_224] : memref<72x128xbf16, #tpu.memory_space<vmem>>, vector<48x128xbf16>
    %c24_225 = arith.constant 24 : index
    %c0_226 = arith.constant 0 : index
    %c0_227 = arith.constant 0 : index
    %174 = vector.load %arg4[%c24_225, %c0_226, %c0_227] : memref<25x128x128xbf16, #tpu.memory_space<vmem>>, vector<1x128x128xbf16>
    %175 = vector.shape_cast %174 : vector<1x128x128xbf16> to vector<128x128xbf16>
    %cst_228 = arith.constant dense<0.000000e+00> : vector<48x128xf32>
    %176 = tpu.matmul %173, %175, %cst_228 {dimension_numbers = #tpu.dot_dimension_numbers<[1], [0], [0], [1], [0, 0, 1, 1], [], []>} : vector<48x128xbf16>, vector<128x128xbf16>, vector<48x128xf32> -> vector<48x128xf32>
    %177 = arith.addf %172, %176 : vector<48x128xf32>
    %c0_229 = arith.constant 0 : index
    %c0_230 = arith.constant 0 : index
    %178 = vector.load %arg8[%c0_229, %c0_230] : memref<48x128xf32, #tpu.memory_space<vmem>>, vector<48x128xf32>
    tpu.vector_store %arg8[%c0_229, %c0_230], %177 {strides = array<i32>} : memref<48x128xf32, #tpu.memory_space<vmem>>, vector<48x128xf32>,
    %c0_231 = arith.constant 0 : index
    %c0_232 = arith.constant 0 : index
    %179 = vector.load %arg8[%c0_231, %c0_232] : memref<48x128xf32, #tpu.memory_space<vmem>>, vector<48x128xf32>
    %c0_233 = arith.constant 0 : index
    %c0_234 = arith.constant 0 : index
    %180 = vector.load %arg5[%c0_233, %c0_234] : memref<1x128xf32, #tpu.memory_space<vmem>>, vector<1x128xf32>
    %181 = vector.broadcast %180 : vector<1x128xf32> to vector<48x128xf32>
    %182 = arith.addf %179, %181 : vector<48x128xf32>
    %c0_235 = arith.constant 0 : index
    %c0_236 = arith.constant 0 : index
    %c0_237 = arith.constant 0 : index
    %183 = vector.load %arg6[%c0_235, %c0_236, %c0_237] : memref<1x48x128xf32, #tpu.memory_space<vmem>>, vector<1x48x128xf32>
    %184 = vector.shape_cast %183 : vector<1x48x128xf32> to vector<48x128xf32>
    %185 = vector.shape_cast %182 : vector<48x128xf32> to vector<1x48x128xf32>
    tpu.vector_store %arg6[%c0_235, %c0_236, %c0_237], %185 {strides = array<i32>} : memref<1x48x128xf32, #tpu.memory_space<vmem>>, vector<1x48x128xf32>,
    return
  }
  func.func @transform_0(%arg0: i32, %arg1: i32) -> (i32, i32, i32) {
    %c0_i32 = arith.constant 0 : i32
    %c0_i32_0 = arith.constant 0 : i32
    return %arg0, %arg1, %c0_i32 : i32, i32, i32
  }
  func.func @transform_1(%arg0: i32, %arg1: i32) -> (i32, i32, i32) {
    %c1_i32 = arith.constant 1 : i32
    %0 = arith.addi %arg1, %c1_i32 : i32
    %c2_i32 = arith.constant 2 : i32
    %1 = arith.muli %0, %c2_i32 : i32
    %c0_i32 = arith.constant 0 : i32
    %c0_i32_0 = arith.constant 0 : i32
    return %arg0, %1, %c0_i32 : i32, i32, i32
  }
  func.func @transform_2(%arg0: i32, %arg1: i32) -> (i32, i32, i32) {
    %c0_i32 = arith.constant 0 : i32
    %c0_i32_0 = arith.constant 0 : i32
    %c0_i32_1 = arith.constant 0 : i32
    %c0_i32_2 = arith.constant 0 : i32
    return %c0_i32, %c0_i32_0, %c0_i32_1 : i32, i32, i32
  }
  func.func @transform_3(%arg0: i32, %arg1: i32) -> (i32, i32) {
    %c0_i32 = arith.constant 0 : i32
    %c0_i32_0 = arith.constant 0 : i32
    %c0_i32_1 = arith.constant 0 : i32
    return %c0_i32, %c0_i32_0 : i32, i32
  }
  func.func @transform_4(%arg0: i32, %arg1: i32) -> (i32, i32, i32) {
    %c0_i32 = arith.constant 0 : i32
    %c0_i32_0 = arith.constant 0 : i32
    return %arg0, %arg1, %c0_i32 : i32, i32, i32
  }
}

</mosaic_0001>

<llo_original>
// kernel: tpu_custom_call.1
$region0: #{tpu_custom_call.1}
  #allocation0 [shape = 'u32[]', space=smem, size = 0x4, offset = 0x4, fixed_abs, tag = 'smem constant byte address 0x4 - core index']
  #allocation1 [shape = 'u32[144,128]{1,0:T(1,128)}', space=vmem, size = 0x12000, scoped, tag = 'internal scratch']
  #allocation2 [shape = 'bf16[72,128]{1,0:T(8,128)(2,1)}', space=vmem, size = 0x4800, scoped, tag = 'scratch operand']
  #allocation3 [shape = 'f32[48,128]{1,0:T(8,128)}', space=vmem, size = 0x6000, scoped, tag = 'scratch operand']
  %s0 = inlined_call_operand.hbm [shape: bf16[2,72,128], index: 0, kind: input, shape index: {}]
  %s1 = inlined_call_operand.hbm [shape: bf16[2,72,128], index: 1, kind: input, shape index: {}]
  %s2 = inlined_call_operand.hbm [shape: bf16[25,128,128], index: 2, kind: input, shape index: {}]
  %s3 = inlined_call_operand.vmem [shape: f32[1,128], index: 3, kind: input, shape index: {}]
  %s4 = inlined_call_operand.hbm [shape: f32[2,48,128], index: 4, kind: output, shape index: {}]
  %s5 = sld [smem:[#allocation0]]
  $region61: #{tpu_custom_call.1} parent=0
    _
  %s7 = ssub.s32 1, %s5
  %s8 = scalar_select 0, %s7, %s5
  $region1: #{tpu_custom_call.1} parent=0
    #allocation4 [shape = 'u8[24576]{0}', space=vmem, size = 0x6000, scoped, tag = 'input window, operand 0']
    #allocation5 [shape = 's32[2]{0}', space=sflag, size = 0x8, scoped, tag = 'scoped memory for tpu_custom_call.1']
    #allocation6 [shape = 's32[2]{0}', space=sflag, size = 0x8, scoped, tag = 'scoped memory for tpu_custom_call.1']
    #allocation7 [shape = 'u8[12288]{0}', space=vmem, size = 0x3000, scoped, tag = 'input window, operand 1']
    #allocation8 [shape = 's32[2]{0}', space=sflag, size = 0x8, scoped, tag = 'scoped memory for tpu_custom_call.1']
    #allocation9 [shape = 'u8[819200]{0}', space=vmem, size = 0xc8000, scoped, tag = 'input window, operand 2, single buffered']
    #allocation10 [shape = 'u8[49152]{0}', space=vmem, size = 0xc000, scoped, tag = 'output window, operand 0']
    %9 = vsyncpa [#allocation5], 0
    %s10 = scalar_lea.sflag [#allocation5], 1
    %11 = vsyncpa %s10, 0
    %12 = vsyncpa [#allocation8], 0
    %s13 = scalar_lea.sflag [#allocation8], 1
    %14 = vsyncpa %s13, 0
    %15 = vsyncpa [#allocation6], 0
    %s16 = scalar_lea.sflag [#allocation6], 1
    %17 = vsyncpa %s16, 0
    loop: start=0, step=1, limit=4
    $region2: #{tpu_custom_call.1} parent=1 // loop_pre_header
      _
    $region3: #{tpu_custom_call.1} parent=1 // loop_header
      %s19 = sphi 0, %s23
      %p20 = scmp.ge.s32.totalorder %s19, 4
      %s26 = sphi 0, %s38
      %s27 = sphi 0, %s34
      %s28 = sphi 0, %s26
      %s29 = sphi 0, %s27
      %s30 = sphi 0, %s28
      %s31 = sphi 0, %s29
      %s43 = sphi 0, %s45
      %s46 = sphi 0, %s43
      %s47 = sphi 0, %s46
      %s63 = sphi 0, %s47
      %s75 = sphi 0, %s77
      %s78 = sphi 0, %s75
      %s79 = sphi 0, %s78
      %s95 = sphi 0, %s79
      %s99 = sphi 0, %s99
      %s101 = sphi 0, %s99
      %s102 = sphi 0, %s101
      %s116 = sphi 0, %s102
      %s120 = sphi 0, %s120
      %s122 = sphi 0, %s120
      %s123 = sphi 0, %s122
      %s137 = sphi 0, %s123
      %s145 = sphi 0, %s147
      %s148 = sphi 0, %s145
      %s149 = sphi 0, %s148
      %s165 = sphi 0, %s149
    $region4: #{tpu_custom_call.1} parent=1 // loop_header_branch
      %22 = sbr.rel (%p20) target = $region8
    $region5: #{tpu_custom_call.1} parent=1 // loop_body
      %s24 = ssub.s32 %s19, 1
      %s25 = ssub.s32 %s19, 2
      %s32 = sadd.s32 1, %s27
      %p33 = scmp.ge.s32.totalorder %s32, 1
      %s34 = scalar_select %p33, 0, %s32
      %s35 = sadd.s32 1, %s26
      %s36 = scalar_select %p33, %s35, %s26
      %p37 = scmp.ge.s32.totalorder %s36, 2
      %s38 = scalar_select %p37, 0, %s36
      %s39 = ssub.s32 %s26, %s38
      %s40 = ssub.s32 %s27, %s34
      %s41 = sor.u32 %s39, %s40
      %p42 = scmp.eq.s32.totalorder %s41, 0
      %s44 = sadd.s32 %s43, 1
      %s45 = scalar_select %p42, %s43, %s44
      %p48 = pneg %p42
      %p49 = scmp.eq.s32.totalorder %s19, 1
      %p50 = por %p48, %p49
      %p51 = scmp.ne.s32.totalorder %s43, %s46
      %p52 = scmp.eq.s32.totalorder %s19, 0
      %p53 = por %p51, %p52
      %p54 = scmp.ne.s32.totalorder %s43, %s46
      %p55 = scmp.eq.s32.totalorder %s24, 1
      %p56 = por %p54, %p55
      %p57 = scmp.ne.s32.totalorder %s46, %s47
      %p58 = scmp.eq.s32.totalorder %s24, 0
      %p59 = por %p57, %p58
      %p60 = scmp.ne.s32.totalorder %s46, %s47
      %p61 = scmp.eq.s32.totalorder %s25, 1
      %p62 = por %p60, %p61
      %p64 = scmp.ne.s32.totalorder %s47, %s63
      %p65 = scmp.eq.s32.totalorder %s25, 0
      %p66 = por %p64, %p65
      %s67 = sadd.s32 %s27, 1
      %s68 = smul.u32 %s67, 2
      %s69 = sadd.s32 %s34, 1
      %s70 = smul.u32 %s69, 2
      %s71 = ssub.s32 %s26, %s38
      %s72 = ssub.s32 %s68, %s70
      %s73 = sor.u32 %s71, %s72
      %p74 = scmp.eq.s32.totalorder %s73, 0
      %s76 = sadd.s32 %s75, 1
      %s77 = scalar_select %p74, %s75, %s76
      %p80 = pneg %p74
      %p81 = scmp.eq.s32.totalorder %s19, 1
      %p82 = por %p80, %p81
      %p83 = scmp.ne.s32.totalorder %s75, %s78
      %p84 = scmp.eq.s32.totalorder %s19, 0
      %p85 = por %p83, %p84
      %p86 = scmp.ne.s32.totalorder %s75, %s78
      %p87 = scmp.eq.s32.totalorder %s24, 1
      %p88 = por %p86, %p87
      %p89 = scmp.ne.s32.totalorder %s78, %s79
      %p90 = scmp.eq.s32.totalorder %s24, 0
      %p91 = por %p89, %p90
      %p92 = scmp.ne.s32.totalorder %s78, %s79
      %p93 = scmp.eq.s32.totalorder %s25, 1
      %p94 = por %p92, %p93
      %p96 = scmp.ne.s32.totalorder %s79, %s95
      %p97 = scmp.eq.s32.totalorder %s25, 0
      %p98 = por %p96, %p97
      %s100 = sadd.s32 %s99, 1
      %p103 = scmp.eq.s32.totalorder %s19, 1
      %p104 = scmp.ne.s32.totalorder %s99, %s101
      %p105 = scmp.eq.s32.totalorder %s19, 0
      %p106 = por %p104, %p105
      %p107 = scmp.ne.s32.totalorder %s99, %s101
      %p108 = scmp.eq.s32.totalorder %s24, 1
      %p109 = por %p107, %p108
      %p110 = scmp.ne.s32.totalorder %s101, %s102
      %p111 = scmp.eq.s32.totalorder %s24, 0
      %p112 = por %p110, %p111
      %p113 = scmp.ne.s32.totalorder %s101, %s102
      %p114 = scmp.eq.s32.totalorder %s25, 1
      %p115 = por %p113, %p114
      %p117 = scmp.ne.s32.totalorder %s102, %s116
      %p118 = scmp.eq.s32.totalorder %s25, 0
      %p119 = por %p117, %p118
      %s121 = sadd.s32 %s120, 1
      %p124 = scmp.eq.s32.totalorder %s19, 1
      %p125 = scmp.ne.s32.totalorder %s120, %s122
      %p126 = scmp.eq.s32.totalorder %s19, 0
      %p127 = por %p125, %p126
      %p128 = scmp.ne.s32.totalorder %s120, %s122
      %p129 = scmp.eq.s32.totalorder %s24, 1
      %p130 = por %p128, %p129
      %p131 = scmp.ne.s32.totalorder %s122, %s123
      %p132 = scmp.eq.s32.totalorder %s24, 0
      %p133 = por %p131, %p132
      %p134 = scmp.ne.s32.totalorder %s122, %s123
      %p135 = scmp.eq.s32.totalorder %s25, 1
      %p136 = por %p134, %p135
      %p138 = scmp.ne.s32.totalorder %s123, %s137
      %p139 = scmp.eq.s32.totalorder %s25, 0
      %p140 = por %p138, %p139
      %s141 = ssub.s32 %s26, %s38
      %s142 = ssub.s32 %s27, %s34
      %s143 = sor.u32 %s141, %s142
      %p144 = scmp.eq.s32.totalorder %s143, 0
      %s146 = sadd.s32 %s145, 1
      %s147 = scalar_select %p144, %s145, %s146
      %p150 = pneg %p144
      %p151 = scmp.eq.s32.totalorder %s19, 1
      %p152 = por %p150, %p151
      %p153 = scmp.ne.s32.totalorder %s145, %s148
      %p154 = scmp.eq.s32.totalorder %s19, 0
      %p155 = por %p153, %p154
      %p156 = scmp.ne.s32.totalorder %s145, %s148
      %p157 = scmp.eq.s32.totalorder %s24, 1
      %p158 = por %p156, %p157
      %p159 = scmp.ne.s32.totalorder %s148, %s149
      %p160 = scmp.eq.s32.totalorder %s24, 0
      %p161 = por %p159, %p160
      %p162 = scmp.ne.s32.totalorder %s148, %s149
      %p163 = scmp.eq.s32.totalorder %s25, 1
      %p164 = por %p162, %p163
      %p166 = scmp.ne.s32.totalorder %s149, %s165
      %p167 = scmp.eq.s32.totalorder %s25, 0
      %p168 = por %p166, %p167
      %p169 = scmp.le.s32.totalorder 1, %s19
      %p170 = scmp.lt.s32.totalorder %s19, 3
      %p171 = pnand %p169, %p170
      %p172 = pneg %p171
      // Predicated region
      $region9: #{tpu_custom_call.1} parent=5 // pred_check
        _
      $region10: #{tpu_custom_call.1} parent=5 // pred_check_branch
        %174 = sbr.rel (%p171) target = $region12
      $region11: #{tpu_custom_call.1} parent=5 // pred_region
        %s175 = ssub.s32 %s19, 1
        // Predicated region
        $region13: #{tpu_custom_call.1} parent=11 // pred_check
          %p176 = pneg %p112
        $region14: #{tpu_custom_call.1} parent=11 // pred_check_branch
          %178 = sbr.rel (%p176) target = $region16
        $region15: #{tpu_custom_call.1} parent=11 // pred_region
          %s180 = ssub.s32 25600, 25600
          %181 = vsyncadd [#allocation8], %s180
          %s182 = sshll.u32 [#allocation9], 4
          %s183 = int_to_ptr.vmem [resolvable:$true] %s182
          %188 = dma.hbm_to_vmem [thread:$0]  %s2, 25600, %s183, [#allocation8], 64, 64, 4
        $region16: #{tpu_custom_call.1} parent=11 // pred_fallthru
          _
        // Predicated region
        $region17: #{tpu_custom_call.1} parent=11 // pred_check
          %p189 = pneg %p133
        $region18: #{tpu_custom_call.1} parent=11 // pred_check_branch
          %191 = sbr.rel (%p189) target = $region20
        $region19: #{tpu_custom_call.1} parent=11 // pred_region
          _
        $region20: #{tpu_custom_call.1} parent=11 // pred_fallthru
          _
      $region12: #{tpu_custom_call.1} parent=5 // pred_fallthru
        _
      %p192 = scmp.lt.s32.totalorder %s19, 2
      // Predicated region
      $region21: #{tpu_custom_call.1} parent=5 // pred_check
        %p193 = pneg %p192
      $region22: #{tpu_custom_call.1} parent=5 // pred_check_branch
        %195 = sbr.rel (%p193) target = $region24
      $region23: #{tpu_custom_call.1} parent=5 // pred_region
        // Predicated region
        $region25: #{tpu_custom_call.1} parent=23 // pred_check
          %p196 = pneg %p53
        $region26: #{tpu_custom_call.1} parent=23 // pred_check_branch
          %198 = sbr.rel (%p196) target = $region28
        $region27: #{tpu_custom_call.1} parent=23 // pred_region
          %s199 = sand.u32 %s43, 1
          %s200 = scalar_lea.sflag [#allocation5], %s199
          %s201 = sand.u32 %s43, 1
          %s202 = smul.addr %s201, 24
          %s203 = scalar_lea.vmem [#allocation4], %s202
          %s204 = smul.u32 6, %s27
          %s205 = ssub.s32 9, %s204
          %p206 = scmp.lt.s32.totalorder %s205, 6
          %s207 = scalar_select %p206, %s205, 6
          %s208 = smul.u32 64, %s207
          %s210 = ssub.s32 384, %s208
          %211 = vsyncadd %s200, %s210
          %p212 = scmp.ne.s32.totalorder 0, %s208
          %s213 = smul.addr %s26, 9
          %s214 = sadd.s32 %s204, %s213
          %s215 = smul.addr %s214, 64
          %s216 = scalar_lea.hbm %s0, %s215
          %s217 = smul.u32 4, %s207
          %s218 = sshll.u32 %s203, 4
          %s219 = int_to_ptr.vmem [resolvable:$true] %s218
          %s220 = sshll.u32 %s217, 4
          %224 = dma.hbm_to_vmem [thread:$0]  (%p212), %s216, %s220, %s219, %s200, 64, 64, 4
        $region28: #{tpu_custom_call.1} parent=23 // pred_fallthru
          _
        // Predicated region
        $region29: #{tpu_custom_call.1} parent=23 // pred_check
          %p225 = pneg %p85
        $region30: #{tpu_custom_call.1} parent=23 // pred_check_branch
          %227 = sbr.rel (%p225) target = $region32
        $region31: #{tpu_custom_call.1} parent=23 // pred_region
          %s228 = sand.u32 %s19, 1
          %s229 = scalar_lea.sflag [#allocation8], %s228
          %s230 = sand.u32 %s75, 1
          %s231 = smul.addr %s230, 12
          %s232 = scalar_lea.vmem [#allocation7], %s231
          %s233 = sadd.s32 %s27, 1
          %s234 = smul.u32 %s233, 2
          %s235 = smul.u32 3, %s234
          %s237 = ssub.s32 192, 192
          %238 = vsyncadd %s229, %s237
          %s239 = smul.addr %s26, 9
          %s240 = sadd.s32 %s235, %s239
          %s241 = smul.addr %s240, 64
          %s242 = scalar_lea.hbm %s1, %s241
          %s243 = sshll.u32 %s232, 4
          %s244 = int_to_ptr.vmem [resolvable:$true] %s243
          %249 = dma.hbm_to_vmem [thread:$0]  %s242, 192, %s244, %s229, 64, 64, 4
        $region32: #{tpu_custom_call.1} parent=23 // pred_fallthru
          _
      $region24: #{tpu_custom_call.1} parent=5 // pred_fallthru
        _
      %p250 = scmp.le.s32.totalorder 1, %s19
      %p251 = scmp.lt.s32.totalorder %s19, 3
      %p252 = pnand %p250, %p251
      %p253 = pneg %p252
      // Predicated region
      $region33: #{tpu_custom_call.1} parent=5 // pred_check
        _
      $region34: #{tpu_custom_call.1} parent=5 // pred_check_branch
        %255 = sbr.rel (%p252) target = $region36
      $region35: #{tpu_custom_call.1} parent=5 // pred_region
        %s256 = ssub.s32 %s19, 1
        %s257 = sand.u32 %s46, 1
        %s258 = scalar_lea.sflag [#allocation5], %s257
        %s259 = sand.u32 %s46, 1
        %s260 = smul.addr %s259, 24
        %s261 = scalar_lea.vmem [#allocation4], %s260
        // Predicated region
        $region37: #{tpu_custom_call.1} parent=35 // pred_check
          %p262 = pneg %p59
        $region38: #{tpu_custom_call.1} parent=35 // pred_check_branch
          %264 = sbr.rel (%p262) target = $region40
        $region39: #{tpu_custom_call.1} parent=35 // pred_region
          %265 = dma.done %s258, 384
        $region40: #{tpu_custom_call.1} parent=35 // pred_fallthru
          _
        %s266 = sand.u32 %s24, 1
        %s267 = scalar_lea.sflag [#allocation8], %s266
        %s268 = sand.u32 %s78, 1
        %s269 = smul.addr %s268, 12
        %s270 = scalar_lea.vmem [#allocation7], %s269
        // Predicated region
        $region41: #{tpu_custom_call.1} parent=35 // pred_check
          %p271 = pneg %p91
        $region42: #{tpu_custom_call.1} parent=35 // pred_check_branch
          %273 = sbr.rel (%p271) target = $region44
        $region43: #{tpu_custom_call.1} parent=35 // pred_region
          %274 = dma.done %s267, 192
        $region44: #{tpu_custom_call.1} parent=35 // pred_fallthru
          _
        // Predicated region
        $region45: #{tpu_custom_call.1} parent=35 // pred_check
          %p275 = pneg %p112
        $region46: #{tpu_custom_call.1} parent=35 // pred_check_branch
          %277 = sbr.rel (%p275) target = $region48
        $region47: #{tpu_custom_call.1} parent=35 // pred_region
          %278 = dma.done [#allocation8], 25600
        $region48: #{tpu_custom_call.1} parent=35 // pred_fallthru
          _
        %s279 = sand.u32 %s46, 1
        %s280 = scalar_lea.sflag [#allocation5], %s279
        %s281 = sand.u32 %s46, 1
        %s282 = smul.addr %s281, 24
        %s283 = scalar_lea.vmem [#allocation4], %s282
        %p284 = pneg %p59
        %p285 = pneg %p56
        %s286 = sand.u32 %s24, 1
        %s287 = scalar_lea.sflag [#allocation8], %s286
        %s288 = sand.u32 %s78, 1
        %s289 = smul.addr %s288, 12
        %s290 = scalar_lea.vmem [#allocation7], %s289
        %p291 = pneg %p91
        %p292 = pneg %p88
        %p293 = pneg %p112
        %p294 = pneg %p109
        %p295 = pneg %p133
        %p296 = pneg %p130
        %p297 = pneg %p161
        %p298 = pneg %p158
        %s299 = sand.u32 %s148, 1
        %s300 = scalar_lea.sflag [#allocation6], %s299
        %s301 = sand.u32 %s148, 1
        %s302 = smul.addr %s301, 48
        %s303 = scalar_lea.vmem [#allocation10], %s302
        %s304 = smul.u32 6, %s29
        %s305 = ssub.s32 9, %s304
        %p306 = scmp.lt.s32.totalorder %s305, 6
        %s307 = scalar_select %p306, %s305, 6
        %s308 = smul.u32 64, %s307
        %s309 = sadd.s32 %s29, 1
        %s310 = smul.u32 %s309, 2
        %s311 = smul.u32 3, %s310
        %s312 = smul.u32 6, %s29
        %v314 = vld [vmem:[%s261] sm:$0xf]
        %v315 = vld [vmem:[%s261 + $0x4] sm:$0xf]
        %v316 = vld [vmem:[%s261 + $0x8] sm:$0xf]
        %v317 = vld [vmem:[%s261 + $0xc] sm:$0xf]
        %v318 = vld [vmem:[%s261 + $0x10] sm:$0xf]
        %v319 = vld [vmem:[%s261 + $0x14] sm:$0xf]
        %320 = vst [vmem:[#allocation2] sm:$0xf] %v314
        %321 = vst [vmem:[#allocation2 + $0x4] sm:$0xf] %v315
        %322 = vst [vmem:[#allocation2 + $0x8] sm:$0xf] %v316
        %323 = vst [vmem:[#allocation2 + $0xc] sm:$0xf] %v317
        %324 = vst [vmem:[#allocation2 + $0x10] sm:$0xf] %v318
        %325 = vst [vmem:[#allocation2 + $0x14] sm:$0xf] %v319
        %v326 = vld [vmem:[%s270] sm:$0xf]
        %v327 = vld [vmem:[%s270 + $0x4] sm:$0xf]
        %v328 = vld [vmem:[%s270 + $0x8] sm:$0xf]
        %329 = vst [vmem:[#allocation2 + $0x18] sm:$0xf] %v326
        %330 = vst [vmem:[#allocation2 + $0x1c] sm:$0xf] %v327
        %331 = vst [vmem:[#allocation2 + $0x20] sm:$0xf] %v328
        %v332 = vld [vmem:[#allocation2] sm:$0xf]
        %v333 = vld [vmem:[#allocation2 + $0x4] sm:$0xf]
        %v334 = vld [vmem:[#allocation2 + $0x8] sm:$0xf]
        %v335 = vld [vmem:[#allocation2 + $0xc] sm:$0xf]
        %v336 = vld [vmem:[#allocation2 + $0x10] sm:$0xf]
        %v337 = vld [vmem:[#allocation2 + $0x14] sm:$0xf]
        %v338 = vld [vmem:[#allocation9] sm:$0xf]
        %v339 = vld [vmem:[#allocation9 + $0x4] sm:$0xf]
        %v340 = vld [vmem:[#allocation9 + $0x8] sm:$0xf]
        %v341 = vld [vmem:[#allocation9 + $0xc] sm:$0xf]
        %v342 = vld [vmem:[#allocation9 + $0x10] sm:$0xf]
        %v343 = vld [vmem:[#allocation9 + $0x14] sm:$0xf]
        %v344 = vld [vmem:[#allocation9 + $0x18] sm:$0xf]
        %v345 = vld [vmem:[#allocation9 + $0x1c] sm:$0xf]
        %v346 = vld [vmem:[#allocation9 + $0x20] sm:$0xf]
        %v347 = vld [vmem:[#allocation9 + $0x24] sm:$0xf]
        %v348 = vld [vmem:[#allocation9 + $0x28] sm:$0xf]
        %v349 = vld [vmem:[#allocation9 + $0x2c] sm:$0xf]
        %v350 = vld [vmem:[#allocation9 + $0x30] sm:$0xf]
        %v351 = vld [vmem:[#allocation9 + $0x34] sm:$0xf]
        %v352 = vld [vmem:[#allocation9 + $0x38] sm:$0xf]
        %v353 = vld [vmem:[#allocation9 + $0x3c] sm:$0xf]
        %v360 = vunpack.c.l.b16 %v332
        %v361 = vunpack.c.l.b16 %v333
        %v362 = vunpack.c.l.b16 %v334
        %v363 = vunpack.c.l.b16 %v335
        %v364 = vunpack.c.l.b16 %v336
        %v365 = vunpack.c.l.b16 %v337
        %v366 = vpack.c.b16 %v361, %v360
        %v367 = vpack.c.b16 %v363, %v362
        %v368 = vpack.c.b16 %v365, %v364
        %v388 = vunpack.c.l.b16 %v338
        %v389 = vunpack.c.l.b16 %v339
        %v390 = vunpack.c.l.b16 %v340
        %v391 = vunpack.c.l.b16 %v341
        %v392 = vunpack.c.l.b16 %v342
        %v393 = vunpack.c.l.b16 %v343
        %v394 = vunpack.c.l.b16 %v344
        %v395 = vunpack.c.l.b16 %v345
        %v396 = vunpack.c.l.b16 %v346
        %v397 = vunpack.c.l.b16 %v347
        %v398 = vunpack.c.l.b16 %v348
        %v399 = vunpack.c.l.b16 %v349
        %v400 = vunpack.c.l.b16 %v350
        %v401 = vunpack.c.l.b16 %v351
        %v402 = vunpack.c.l.b16 %v352
        %v403 = vunpack.c.l.b16 %v353
        %v404 = vpack.c.b16 %v389, %v388
        %v405 = vpack.c.b16 %v391, %v390
        %v406 = vpack.c.b16 %v393, %v392
        %v407 = vpack.c.b16 %v395, %v394
        %v408 = vpack.c.b16 %v397, %v396
        %v409 = vpack.c.b16 %v399, %v398
        %v410 = vpack.c.b16 %v401, %v400
        %v411 = vpack.c.b16 %v403, %v402
        %420 = vmatprep.subr.bf16.mxu0 0
        %421 = vmatpush1.bf16.msra.mxu0 %v404
        %422 = vmatprep.subr.bf16.mxu0 0
        %423 = vmatpush1.bf16.msra.mxu0 %v405
        %424 = vmatprep.subr.bf16.mxu0 0
        %425 = vmatpush1.bf16.msra.mxu0 %v406
        %426 = vmatprep.subr.bf16.mxu0 0
        %427 = vmatpush1.bf16.msra.mxu0 %v407
        %428 = vmatprep.subr.bf16.mxu0 0
        %429 = vmatpush1.bf16.msra.mxu0 %v408
        %430 = vmatprep.subr.bf16.mxu0 0
        %431 = vmatpush1.bf16.msra.mxu0 %v409
        %432 = vmatprep.subr.bf16.mxu0 0
        %433 = vmatpush1.bf16.msra.mxu0 %v410
        %434 = vmatprep.subr.bf16.mxu0 0
        %435 = vmatpush1.bf16.msra.mxu0 %v411
        %436 = vmatprep.subr.bf16.mxu0 0
        %437 = vmatpush1.bf16.msra.mxu0 0
        %438 = vmatprep.subr.bf16.mxu0 0
        %439 = vmatpush1.bf16.msra.mxu0 0
        %440 = vmatprep.subr.bf16.mxu0 0
        %441 = vmatpush1.bf16.msra.mxu0 0
        %442 = vmatprep.subr.bf16.mxu0 0
        %443 = vmatpush1.bf16.msra.mxu0 0
        %444 = vmatprep.subr.bf16.mxu0 0
        %445 = vmatpush1.bf16.msra.mxu0 0
        %446 = vmatprep.subr.bf16.mxu0 0
        %447 = vmatpush1.bf16.msra.mxu0 0
        %448 = vmatprep.subr.bf16.mxu0 0
        %449 = vmatpush1.bf16.msra.mxu0 0
        %450 = vmatprep.subr.bf16.mxu0 0
        %451 = vmatpush1.bf16.msra.mxu0 0
        %452 = vmatprep.mubr.bf16.mxu0 0
        %453 = vmatmul.mubr.bf16.gmra.mrb[0].mxu0 %v366
        %v454 = vpop.f32.mrb[0].mxu0
        %v455 = vadd.f32 0.0, %v454
        %v456 = vpop.f32.mrb[0].mxu0
        %v457 = vpop.f32.mrb[0].mxu0
        %v458 = vadd.f32 0.0, %v457
        %v459 = vpop.f32.mrb[0].mxu0
        %460 = vmatprep.mubr.bf16.mxu0 0
        %461 = vmatmul.mubr.bf16.gmra.mrb[0].mxu0 %v367
        %v462 = vpop.f32.mrb[0].mxu0
        %v463 = vadd.f32 0.0, %v462
        %v464 = vpop.f32.mrb[0].mxu0
        %v465 = vpop.f32.mrb[0].mxu0
        %v466 = vadd.f32 0.0, %v465
        %v467 = vpop.f32.mrb[0].mxu0
        %468 = vmatprep.mubr.bf16.mxu0 0
        %469 = vmatmul.mubr.bf16.gmra.mrb[0].mxu0 %v368
        %v470 = vpop.f32.mrb[0].mxu0
        %v471 = vadd.f32 0.0, %v470
        %v472 = vpop.f32.mrb[0].mxu0
        %v473 = vpop.f32.mrb[0].mxu0
        %v474 = vadd.f32 0.0, %v473
        %v475 = vpop.f32.mrb[0].mxu0
        %476 = vdwg.mxu0
        %477 = vst [vmem:[#allocation3] sm:$0xff] %v455
        %478 = vst [vmem:[#allocation3 + $0x8] sm:$0xff] %v458
        %479 = vst [vmem:[#allocation3 + $0x10] sm:$0xff] %v463
        %480 = vst [vmem:[#allocation3 + $0x18] sm:$0xff] %v466
        %481 = vst [vmem:[#allocation3 + $0x20] sm:$0xff] %v471
        %482 = vst [vmem:[#allocation3 + $0x28] sm:$0xff] %v474
        %v483 = vld [vmem:[#allocation3] sm:$0xff]
        %v484 = vld [vmem:[#allocation3 + $0x8] sm:$0xff]
        %v485 = vld [vmem:[#allocation3 + $0x10] sm:$0xff]
        %v486 = vld [vmem:[#allocation3 + $0x18] sm:$0xff]
        %v487 = vld [vmem:[#allocation3 + $0x20] sm:$0xff]
        %v488 = vld [vmem:[#allocation3 + $0x28] sm:$0xff]
        %v489 = vld [vmem:[#allocation2] sm:$0xf]
        %v490 = vld [vmem:[#allocation2 + $0x4] sm:$0xf]
        %v491 = vld [vmem:[#allocation2 + $0x8] sm:$0xf]
        %v492 = vld [vmem:[#allocation2 + $0xc] sm:$0xf]
        %v493 = vld [vmem:[#allocation2 + $0x10] sm:$0xf]
        %v494 = vld [vmem:[#allocation2 + $0x14] sm:$0xf]
        %v495 = vld [vmem:[#allocation2 + $0x18] sm:$0x1]
        %s496 = scalar_lea.vmem [#allocation9], 64
        %v497 = vld [vmem:[%s496] sm:$0xf]
        %v498 = vld [vmem:[%s496 + $0x4] sm:$0xf]
        %v499 = vld [vmem:[%s496 + $0x8] sm:$0xf]
        %v500 = vld [vmem:[%s496 + $0xc] sm:$0xf]
        %v501 = vld [vmem:[%s496 + $0x10] sm:$0xf]
        %v502 = vld [vmem:[%s496 + $0x14] sm:$0xf]
        %v503 = vld [vmem:[%s496 + $0x18] sm:$0xf]
        %v504 = vld [vmem:[%s496 + $0x1c] sm:$0xf]
        %v505 = vld [vmem:[%s496 + $0x20] sm:$0xf]
        %v506 = vld [vmem:[%s496 + $0x24] sm:$0xf]
        %v507 = vld [vmem:[%s496 + $0x28] sm:$0xf]
        %v508 = vld [vmem:[%s496 + $0x2c] sm:$0xf]
        %v509 = vld [vmem:[%s496 + $0x30] sm:$0xf]
        %v510 = vld [vmem:[%s496 + $0x34] sm:$0xf]
        %v511 = vld [vmem:[%s496 + $0x38] sm:$0xf]
        %v512 = vld [vmem:[%s496 + $0x3c] sm:$0xf]
        %v520 = vunpack.c.l.b16 %v489
        %v521 = vunpack.c.l.b16 %v490
        %v522 = vunpack.c.l.b16 %v491
        %v523 = vunpack.c.l.b16 %v492
        %v524 = vunpack.c.l.b16 %v493
        %v525 = vunpack.c.l.b16 %v494
        %v526 = vunpack.c.l.b16 %v495
        %v527 = vpack.c.b16 %v521, %v520
        %v528 = vpack.c.b16 %v523, %v522
        %v529 = vpack.c.b16 %v525, %v524
        %v530 = vpack.c.b16 %v526, %v526
        %vm531 = vsmask.f32 7424
        %v533 = vshrl.u32 %v527, 16
        %v535 = vshll.u32 %v527, 16
        %v537 = vrot.slane %v535, 1
        %v538 = vor.u32 %v533, %v537
        %v540 = vshll.u32 %v528, 16
        %v542 = vrot.slane %v540, 1
        %v543 = vsel %vm531, %v538, %v542
        %v544 = vshrl.u32 %v528, 16
        %v546 = vor.u32 %v544, %v542
        %v548 = vshll.u32 %v529, 16
        %v550 = vrot.slane %v548, 1
        %v551 = vsel %vm531, %v546, %v550
        %v552 = vshrl.u32 %v529, 16
        %v554 = vor.u32 %v552, %v550
        %v556 = vshll.u32 %v530, 16
        %v558 = vrot.slane %v556, 1
        %v559 = vsel %vm531, %v554, %v558
        %v579 = vunpack.c.l.b16 %v497
        %v580 = vunpack.c.l.b16 %v498
        %v581 = vunpack.c.l.b16 %v499
        %v582 = vunpack.c.l.b16 %v500
        %v583 = vunpack.c.l.b16 %v501
        %v584 = vunpack.c.l.b16 %v502
        %v585 = vunpack.c.l.b16 %v503
        %v586 = vunpack.c.l.b16 %v504
        %v587 = vunpack.c.l.b16 %v505
        %v588 = vunpack.c.l.b16 %v506
        %v589 = vunpack.c.l.b16 %v507
        %v590 = vunpack.c.l.b16 %v508
        %v591 = vunpack.c.l.b16 %v509
        %v592 = vunpack.c.l.b16 %v510
        %v593 = vunpack.c.l.b16 %v511
        %v594 = vunpack.c.l.b16 %v512
        %v595 = vpack.c.b16 %v580, %v579
        %v596 = vpack.c.b16 %v582, %v581
        %v597 = vpack.c.b16 %v584, %v583
        %v598 = vpack.c.b16 %v586, %v585
        %v599 = vpack.c.b16 %v588, %v587
        %v600 = vpack.c.b16 %v590, %v589
        %v601 = vpack.c.b16 %v592, %v591
        %v602 = vpack.c.b16 %v594, %v593
        %611 = vmatprep.subr.bf16.mxu0 0
        %612 = vmatpush1.bf16.msra.mxu0 %v595
        %613 = vmatprep.subr.bf16.mxu0 0
        %614 = vmatpush1.bf16.msra.mxu0 %v596
        %615 = vmatprep.subr.bf16.mxu0 0
        %616 = vmatpush1.bf16.msra.mxu0 %v597
        %617 = vmatprep.subr.bf16.mxu0 0
        %618 = vmatpush1.bf16.msra.mxu0 %v598
        %619 = vmatprep.subr.bf16.mxu0 0
        %620 = vmatpush1.bf16.msra.mxu0 %v599
        %621 = vmatprep.subr.bf16.mxu0 0
        %622 = vmatpush1.bf16.msra.mxu0 %v600
        %623 = vmatprep.subr.bf16.mxu0 0
        %624 = vmatpush1.bf16.msra.mxu0 %v601
        %625 = vmatprep.subr.bf16.mxu0 0
        %626 = vmatpush1.bf16.msra.mxu0 %v602
        %627 = vmatprep.subr.bf16.mxu0 0
        %628 = vmatpush1.bf16.msra.mxu0 0
        %629 = vmatprep.subr.bf16.mxu0 0
        %630 = vmatpush1.bf16.msra.mxu0 0
        %631 = vmatprep.subr.bf16.mxu0 0
        %632 = vmatpush1.bf16.msra.mxu0 0
        %633 = vmatprep.subr.bf16.mxu0 0
        %634 = vmatpush1.bf16.msra.mxu0 0
        %635 = vmatprep.subr.bf16.mxu0 0
        %636 = vmatpush1.bf16.msra.mxu0 0
        %637 = vmatprep.subr.bf16.mxu0 0
        %638 = vmatpush1.bf16.msra.mxu0 0
        %639 = vmatprep.subr.bf16.mxu0 0
        %640 = vmatpush1.bf16.msra.mxu0 0
        %641 = vmatprep.subr.bf16.mxu0 0
        %642 = vmatpush1.bf16.msra.mxu0 0
        %643 = vmatprep.mubr.bf16.mxu0 0
        %644 = vmatmul.mubr.bf16.gmra.mrb[0].mxu0 %v543
        %v645 = vpop.f32.mrb[0].mxu0
        %v646 = vadd.f32 0.0, %v645
        %v647 = vpop.f32.mrb[0].mxu0
        %v648 = vpop.f32.mrb[0].mxu0
        %v649 = vadd.f32 0.0, %v648
        %v650 = vpop.f32.mrb[0].mxu0
        %651 = vmatprep.mubr.bf16.mxu0 0
        %652 = vmatmul.mubr.bf16.gmra.mrb[0].mxu0 %v551
        %v653 = vpop.f32.mrb[0].mxu0
        %v654 = vadd.f32 0.0, %v653
        %v655 = vpop.f32.mrb[0].mxu0
        %v656 = vpop.f32.mrb[0].mxu0
        %v657 = vadd.f32 0.0, %v656
        %v658 = vpop.f32.mrb[0].mxu0
        %659 = vmatprep.mubr.bf16.mxu0 0
        %660 = vmatmul.mubr.bf16.gmra.mrb[0].mxu0 %v559
        %v661 = vpop.f32.mrb[0].mxu0
        %v662 = vadd.f32 0.0, %v661
        %v663 = vpop.f32.mrb[0].mxu0
        %v664 = vpop.f32.mrb[0].mxu0
        %v665 = vadd.f32 0.0, %v664
        %v666 = vpop.f32.mrb[0].mxu0
        %667 = vdwg.mxu0
        %v668 = vadd.f32 %v483, %v646
        %v669 = vadd.f32 %v484, %v649
        %v670 = vadd.f32 %v485, %v654
        %v671 = vadd.f32 %v486, %v657
        %v672 = vadd.f32 %v487, %v662
        %v673 = vadd.f32 %v488, %v665
        %674 = vst [vmem:[#allocation3] sm:$0xff] %v668
        %675 = vst [vmem:[#allocation3 + $0x8] sm:$0xff] %v669
        %676 = vst [vmem:[#allocation3 + $0x10] sm:$0xff] %v670
        %677 = vst [vmem:[#allocation3 + $0x18] sm:$0xff] %v671
        %678 = vst [vmem:[#allocation3 + $0x20] sm:$0xff] %v672
        %679 = vst [vmem:[#allocation3 + $0x28] sm:$0xff] %v673
        %v680 = vld [vmem:[#allocation3] sm:$0xff]
        %v681 = vld [vmem:[#allocation3 + $0x8] sm:$0xff]
        %v682 = vld [vmem:[#allocation3 + $0x10] sm:$0xff]
        %v683 = vld [vmem:[#allocation3 + $0x18] sm:$0xff]
        %v684 = vld [vmem:[#allocation3 + $0x20] sm:$0xff]
        %v685 = vld [vmem:[#allocation3 + $0x28] sm:$0xff]
        %v686 = vld [vmem:[#allocation2] sm:$0xe]
        %v687 = vld [vmem:[#allocation2 + $0x4] sm:$0xf]
        %v688 = vld [vmem:[#allocation2 + $0x8] sm:$0xf]
        %v689 = vld [vmem:[#allocation2 + $0xc] sm:$0xf]
        %v690 = vld [vmem:[#allocation2 + $0x10] sm:$0xf]
        %v691 = vld [vmem:[#allocation2 + $0x14] sm:$0xf]
        %v692 = vld [vmem:[#allocation2 + $0x18] sm:$0x1]
        %s693 = scalar_lea.vmem [#allocation9], 128
        %v694 = vld [vmem:[%s693] sm:$0xf]
        %v695 = vld [vmem:[%s693 + $0x4] sm:$0xf]
        %v696 = vld [vmem:[%s693 + $0x8] sm:$0xf]
        %v697 = vld [vmem:[%s693 + $0xc] sm:$0xf]
        %v698 = vld [vmem:[%s693 + $0x10] sm:$0xf]
        %v699 = vld [vmem:[%s693 + $0x14] sm:$0xf]
        %v700 = vld [vmem:[%s693 + $0x18] sm:$0xf]
        %v701 = vld [vmem:[%s693 + $0x1c] sm:$0xf]
        %v702 = vld [vmem:[%s693 + $0x20] sm:$0xf]
        %v703 = vld [vmem:[%s693 + $0x24] sm:$0xf]
        %v704 = vld [vmem:[%s693 + $0x28] sm:$0xf]
        %v705 = vld [vmem:[%s693 + $0x2c] sm:$0xf]
        %v706 = vld [vmem:[%s693 + $0x30] sm:$0xf]
        %v707 = vld [vmem:[%s693 + $0x34] sm:$0xf]
        %v708 = vld [vmem:[%s693 + $0x38] sm:$0xf]
        %v709 = vld [vmem:[%s693 + $0x3c] sm:$0xf]
        %v717 = vunpack.c.l.b16 %v686
        %v718 = vunpack.c.l.b16 %v687
        %v719 = vunpack.c.l.b16 %v688
        %v720 = vunpack.c.l.b16 %v689
        %v721 = vunpack.c.l.b16 %v690
        %v722 = vunpack.c.l.b16 %v691
        %v723 = vunpack.c.l.b16 %v692
        %v724 = vpack.c.b16 %v718, %v717
        %v725 = vpack.c.b16 %v720, %v719
        %v726 = vpack.c.b16 %v722, %v721
        %v727 = vpack.c.b16 %v723, %v723
        %vm728 = vcmask 1046528
        %v729 = vrot.slane %v724, 1
        %v730 = vrot.slane %v725, 1
        %v731 = vsel %vm728, %v729, %v730
        %v732 = vrot.slane %v726, 1
        %v733 = vsel %vm728, %v730, %v732
        %v734 = vrot.slane %v727, 1
        %v735 = vsel %vm728, %v732, %v734
        %v755 = vunpack.c.l.b16 %v694
        %v756 = vunpack.c.l.b16 %v695
        %v757 = vunpack.c.l.b16 %v696
        %v758 = vunpack.c.l.b16 %v697
        %v759 = vunpack.c.l.b16 %v698
        %v760 = vunpack.c.l.b16 %v699
        %v761 = vunpack.c.l.b16 %v700
        %v762 = vunpack.c.l.b16 %v701
        %v763 = vunpack.c.l.b16 %v702
        %v764 = vunpack.c.l.b16 %v703
        %v765 = vunpack.c.l.b16 %v704
        %v766 = vunpack.c.l.b16 %v705
        %v767 = vunpack.c.l.b16 %v706
        %v768 = vunpack.c.l.b16 %v707
        %v769 = vunpack.c.l.b16 %v708
        %v770 = vunpack.c.l.b16 %v709
        %v771 = vpack.c.b16 %v756, %v755
        %v772 = vpack.c.b16 %v758, %v757
        %v773 = vpack.c.b16 %v760, %v759
        %v774 = vpack.c.b16 %v762, %v761
        %v775 = vpack.c.b16 %v764, %v763
        %v776 = vpack.c.b16 %v766, %v765
        %v777 = vpack.c.b16 %v768, %v767
        %v778 = vpack.c.b16 %v770, %v769
        %787 = vmatprep.subr.bf16.mxu0 0
        %788 = vmatpush1.bf16.msra.mxu0 %v771
        %789 = vmatprep.subr.bf16.mxu0 0
        %790 = vmatpush1.bf16.msra.mxu0 %v772
        %791 = vmatprep.subr.bf16.mxu0 0
        %792 = vmatpush1.bf16.msra.mxu0 %v773
        %793 = vmatprep.subr.bf16.mxu0 0
        %794 = vmatpush1.bf16.msra.mxu0 %v774
        %795 = vmatprep.subr.bf16.mxu0 0
        %796 = vmatpush1.bf16.msra.mxu0 %v775
        %797 = vmatprep.subr.bf16.mxu0 0
        %798 = vmatpush1.bf16.msra.mxu0 %v776
        %799 = vmatprep.subr.bf16.mxu0 0
        %800 = vmatpush1.bf16.msra.mxu0 %v777
        %801 = vmatprep.subr.bf16.mxu0 0
        %802 = vmatpush1.bf16.msra.mxu0 %v778
        %803 = vmatprep.subr.bf16.mxu0 0
        %804 = vmatpush1.bf16.msra.mxu0 0
        %805 = vmatprep.subr.bf16.mxu0 0
        %806 = vmatpush1.bf16.msra.mxu0 0
        %807 = vmatprep.subr.bf16.mxu0 0
        %808 = vmatpush1.bf16.msra.mxu0 0
        %809 = vmatprep.subr.bf16.mxu0 0
        %810 = vmatpush1.bf16.msra.mxu0 0
        %811 = vmatprep.subr.bf16.mxu0 0
        %812 = vmatpush1.bf16.msra.mxu0 0
        %813 = vmatprep.subr.bf16.mxu0 0
        %814 = vmatpush1.bf16.msra.mxu0 0
        %815 = vmatprep.subr.bf16.mxu0 0
        %816 = vmatpush1.bf16.msra.mxu0 0
        %817 = vmatprep.subr.bf16.mxu0 0
        %818 = vmatpush1.bf16.msra.mxu0 0
        %819 = vmatprep.mubr.bf16.mxu0 0
        %820 = vmatmul.mubr.bf16.gmra.mrb[0].mxu0 %v731
        %v821 = vpop.f32.mrb[0].mxu0
        %v822 = vadd.f32 0.0, %v821
        %v823 = vpop.f32.mrb[0].mxu0
        %v824 = vpop.f32.mrb[0].mxu0
        %v825 = vadd.f32 0.0, %v824
        %v826 = vpop.f32.mrb[0].mxu0
        %827 = vmatprep.mubr.bf16.mxu0 0
        %828 = vmatmul.mubr.bf16.gmra.mrb[0].mxu0 %v733
        %v829 = vpop.f32.mrb[0].mxu0
        %v830 = vadd.f32 0.0, %v829
        %v831 = vpop.f32.mrb[0].mxu0
        %v832 = vpop.f32.mrb[0].mxu0
        %v833 = vadd.f32 0.0, %v832
        %v834 = vpop.f32.mrb[0].mxu0
        %835 = vmatprep.mubr.bf16.mxu0 0
        %836 = vmatmul.mubr.bf16.gmra.mrb[0].mxu0 %v735
        %v837 = vpop.f32.mrb[0].mxu0
        %v838 = vadd.f32 0.0, %v837
        %v839 = vpop.f32.mrb[0].mxu0
        %v840 = vpop.f32.mrb[0].mxu0
        %v841 = vadd.f32 0.0, %v840
        %v842 = vpop.f32.mrb[0].mxu0
        %843 = vdwg.mxu0
        %v844 = vadd.f32 %v680, %v822
        %v845 = vadd.f32 %v681, %v825
        %v846 = vadd.f32 %v682, %v830
        %v847 = vadd.f32 %v683, %v833
        %v848 = vadd.f32 %v684, %v838
        %v849 = vadd.f32 %v685, %v841
        %850 = vst [vmem:[#allocation3] sm:$0xff] %v844
        %851 = vst [vmem:[#allocation3 + $0x8] sm:$0xff] %v845
        %852 = vst [vmem:[#allocation3 + $0x10] sm:$0xff] %v846
        %853 = vst [vmem:[#allocation3 + $0x18] sm:$0xff] %v847
        %854 = vst [vmem:[#allocation3 + $0x20] sm:$0xff] %v848
        %855 = vst [vmem:[#allocation3 + $0x28] sm:$0xff] %v849
        %v856 = vld [vmem:[#allocation3] sm:$0xff]
        %v857 = vld [vmem:[#allocation3 + $0x8] sm:$0xff]
        %v858 = vld [vmem:[#allocation3 + $0x10] sm:$0xff]
        %v859 = vld [vmem:[#allocation3 + $0x18] sm:$0xff]
        %v860 = vld [vmem:[#allocation3 + $0x20] sm:$0xff]
        %v861 = vld [vmem:[#allocation3 + $0x28] sm:$0xff]
        %v862 = vld [vmem:[#allocation2] sm:$0xe]
        %v863 = vld [vmem:[#allocation2 + $0x4] sm:$0xf]
        %v864 = vld [vmem:[#allocation2 + $0x8] sm:$0xf]
        %v865 = vld [vmem:[#allocation2 + $0xc] sm:$0xf]
        %v866 = vld [vmem:[#allocation2 + $0x10] sm:$0xf]
        %v867 = vld [vmem:[#allocation2 + $0x14] sm:$0xf]
        %v868 = vld [vmem:[#allocation2 + $0x18] sm:$0x3]
        %s869 = scalar_lea.vmem [#allocation9], 192
        %v870 = vld [vmem:[%s869] sm:$0xf]
        %v871 = vld [vmem:[%s869 + $0x4] sm:$0xf]
        %v872 = vld [vmem:[%s869 + $0x8] sm:$0xf]
        %v873 = vld [vmem:[%s869 + $0xc] sm:$0xf]
        %v874 = vld [vmem:[%s869 + $0x10] sm:$0xf]
        %v875 = vld [vmem:[%s869 + $0x14] sm:$0xf]
        %v876 = vld [vmem:[%s869 + $0x18] sm:$0xf]
        %v877 = vld [vmem:[%s869 + $0x1c] sm:$0xf]
        %v878 = vld [vmem:[%s869 + $0x20] sm:$0xf]
        %v879 = vld [vmem:[%s869 + $0x24] sm:$0xf]
        %v880 = vld [vmem:[%s869 + $0x28] sm:$0xf]
        %v881 = vld [vmem:[%s869 + $0x2c] sm:$0xf]
        %v882 = vld [vmem:[%s869 + $0x30] sm:$0xf]
        %v883 = vld [vmem:[%s869 + $0x34] sm:$0xf]
        %v884 = vld [vmem:[%s869 + $0x38] sm:$0xf]
        %v885 = vld [vmem:[%s869 + $0x3c] sm:$0xf]
        %v893 = vunpack.c.l.b16 %v862
        %v894 = vunpack.c.l.b16 %v863
        %v895 = vunpack.c.l.b16 %v864
        %v896 = vunpack.c.l.b16 %v865
        %v897 = vunpack.c.l.b16 %v866
        %v898 = vunpack.c.l.b16 %v867
        %v899 = vunpack.c.l.b16 %v868
        %v900 = vpack.c.b16 %v894, %v893
        %v901 = vpack.c.b16 %v896, %v895
        %v902 = vpack.c.b16 %v898, %v897
        %v903 = vpack.c.b16 %v899, %v899
        %vm904 = vsmask.f32 6400
        %v906 = vshrl.u32 %v900, 16
        %v908 = vrot.slane %v906, 1
        %v909 = vshll.u32 %v900, 16
        %v911 = vrot.slane %v909, 2
        %v912 = vor.u32 %v908, %v911
        %v914 = vshrl.u32 %v901, 16
        %v916 = vrot.slane %v914, 1
        %v917 = vshll.u32 %v901, 16
        %v919 = vrot.slane %v917, 2
        %v920 = vor.u32 %v916, %v919
        %v921 = vsel %vm904, %v912, %v920
        %v923 = vshrl.u32 %v902, 16
        %v925 = vrot.slane %v923, 1
        %v926 = vshll.u32 %v902, 16
        %v928 = vrot.slane %v926, 2
        %v929 = vor.u32 %v925, %v928
        %v930 = vsel %vm904, %v920, %v929
        %v932 = vshrl.u32 %v903, 16
        %v934 = vrot.slane %v932, 1
        %v935 = vshll.u32 %v903, 16
        %v937 = vrot.slane %v935, 2
        %v938 = vor.u32 %v934, %v937
        %v939 = vsel %vm904, %v929, %v938
        %v959 = vunpack.c.l.b16 %v870
        %v960 = vunpack.c.l.b16 %v871
        %v961 = vunpack.c.l.b16 %v872
        %v962 = vunpack.c.l.b16 %v873
        %v963 = vunpack.c.l.b16 %v874
        %v964 = vunpack.c.l.b16 %v875
        %v965 = vunpack.c.l.b16 %v876
        %v966 = vunpack.c.l.b16 %v877
        %v967 = vunpack.c.l.b16 %v878
        %v968 = vunpack.c.l.b16 %v879
        %v969 = vunpack.c.l.b16 %v880
        %v970 = vunpack.c.l.b16 %v881
        %v971 = vunpack.c.l.b16 %v882
        %v972 = vunpack.c.l.b16 %v883
        %v973 = vunpack.c.l.b16 %v884
        %v974 = vunpack.c.l.b16 %v885
        %v975 = vpack.c.b16 %v960, %v959
        %v976 = vpack.c.b16 %v962, %v961
        %v977 = vpack.c.b16 %v964, %v963
        %v978 = vpack.c.b16 %v966, %v965
        %v979 = vpack.c.b16 %v968, %v967
        %v980 = vpack.c.b16 %v970, %v969
        %v981 = vpack.c.b16 %v972, %v971
        %v982 = vpack.c.b16 %v974, %v973
        %991 = vmatprep.subr.bf16.mxu0 0
        %992 = vmatpush1.bf16.msra.mxu0 %v975
        %993 = vmatprep.subr.bf16.mxu0 0
        %994 = vmatpush1.bf16.msra.mxu0 %v976
        %995 = vmatprep.subr.bf16.mxu0 0
        %996 = vmatpush1.bf16.msra.mxu0 %v977
        %997 = vmatprep.subr.bf16.mxu0 0
        %998 = vmatpush1.bf16.msra.mxu0 %v978
        %999 = vmatprep.subr.bf16.mxu0 0
        %1000 = vmatpush1.bf16.msra.mxu0 %v979
        %1001 = vmatprep.subr.bf16.mxu0 0
        %1002 = vmatpush1.bf16.msra.mxu0 %v980
        %1003 = vmatprep.subr.bf16.mxu0 0
        %1004 = vmatpush1.bf16.msra.mxu0 %v981
        %1005 = vmatprep.subr.bf16.mxu0 0
        %1006 = vmatpush1.bf16.msra.mxu0 %v982
        %1007 = vmatprep.subr.bf16.mxu0 0
        %1008 = vmatpush1.bf16.msra.mxu0 0
        %1009 = vmatprep.subr.bf16.mxu0 0
        %1010 = vmatpush1.bf16.msra.mxu0 0
        %1011 = vmatprep.subr.bf16.mxu0 0
        %1012 = vmatpush1.bf16.msra.mxu0 0
        %1013 = vmatprep.subr.bf16.mxu0 0
        %1014 = vmatpush1.bf16.msra.mxu0 0
        %1015 = vmatprep.subr.bf16.mxu0 0
        %1016 = vmatpush1.bf16.msra.mxu0 0
        %1017 = vmatprep.subr.bf16.mxu0 0
        %1018 = vmatpush1.bf16.msra.mxu0 0
        %1019 = vmatprep.subr.bf16.mxu0 0
        %1020 = vmatpush1.bf16.msra.mxu0 0
        %1021 = vmatprep.subr.bf16.mxu0 0
        %1022 = vmatpush1.bf16.msra.mxu0 0
        %1023 = vmatprep.mubr.bf16.mxu0 0
        %1024 = vmatmul.mubr.bf16.gmra.mrb[0].mxu0 %v921
        %v1025 = vpop.f32.mrb[0].mxu0
        %v1026 = vadd.f32 0.0, %v1025
        %v1027 = vpop.f32.mrb[0].mxu0
        %v1028 = vpop.f32.mrb[0].mxu0
        %v1029 = vadd.f32 0.0, %v1028
        %v1030 = vpop.f32.mrb[0].mxu0
        %1031 = vmatprep.mubr.bf16.mxu0 0
        %1032 = vmatmul.mubr.bf16.gmra.mrb[0].mxu0 %v930
        %v1033 = vpop.f32.mrb[0].mxu0
        %v1034 = vadd.f32 0.0, %v1033
        %v1035 = vpop.f32.mrb[0].mxu0
        %v1036 = vpop.f32.mrb[0].mxu0
        %v1037 = vadd.f32 0.0, %v1036
        %v1038 = vpop.f32.mrb[0].mxu0
        %1039 = vmatprep.mubr.bf16.mxu0 0
        %1040 = vmatmul.mubr.bf16.gmra.mrb[0].mxu0 %v939
        %v1041 = vpop.f32.mrb[0].mxu0
        %v1042 = vadd.f32 0.0, %v1041
        %v1043 = vpop.f32.mrb[0].mxu0
        %v1044 = vpop.f32.mrb[0].mxu0
        %v1045 = vadd.f32 0.0, %v1044
        %v1046 = vpop.f32.mrb[0].mxu0
        %1047 = vdwg.mxu0
        %v1048 = vadd.f32 %v856, %v1026
        %v1049 = vadd.f32 %v857, %v1029
        %v1050 = vadd.f32 %v858, %v1034
        %v1051 = vadd.f32 %v859, %v1037
        %v1052 = vadd.f32 %v860, %v1042
        %v1053 = vadd.f32 %v861, %v1045
        %1054 = vst [vmem:[#allocation3] sm:$0xff] %v1048
        %1055 = vst [vmem:[#allocation3 + $0x8] sm:$0xff] %v1049
        %1056 = vst [vmem:[#allocation3 + $0x10] sm:$0xff] %v1050
        %1057 = vst [vmem:[#allocation3 + $0x18] sm:$0xff] %v1051
        %1058 = vst [vmem:[#allocation3 + $0x20] sm:$0xff] %v1052
        %1059 = vst [vmem:[#allocation3 + $0x28] sm:$0xff] %v1053
        %v1060 = vld [vmem:[#allocation3] sm:$0xff]
        %v1061 = vld [vmem:[#allocation3 + $0x8] sm:$0xff]
        %v1062 = vld [vmem:[#allocation3 + $0x10] sm:$0xff]
        %v1063 = vld [vmem:[#allocation3 + $0x18] sm:$0xff]
        %v1064 = vld [vmem:[#allocation3 + $0x20] sm:$0xff]
        %v1065 = vld [vmem:[#allocation3 + $0x28] sm:$0xff]
        %v1066 = vld [vmem:[#allocation2] sm:$0xc]
        %v1067 = vld [vmem:[#allocation2 + $0x4] sm:$0xf]
        %v1068 = vld [vmem:[#allocation2 + $0x8] sm:$0xf]
        %v1069 = vld [vmem:[#allocation2 + $0xc] sm:$0xf]
        %v1070 = vld [vmem:[#allocation2 + $0x10] sm:$0xf]
        %v1071 = vld [vmem:[#allocation2 + $0x14] sm:$0xf]
        %v1072 = vld [vmem:[#allocation2 + $0x18] sm:$0x3]
        %s1073 = scalar_lea.vmem [#allocation9], 256
        %v1074 = vld [vmem:[%s1073] sm:$0xf]
        %v1075 = vld [vmem:[%s1073 + $0x4] sm:$0xf]
        %v1076 = vld [vmem:[%s1073 + $0x8] sm:$0xf]
        %v1077 = vld [vmem:[%s1073 + $0xc] sm:$0xf]
        %v1078 = vld [vmem:[%s1073 + $0x10] sm:$0xf]
        %v1079 = vld [vmem:[%s1073 + $0x14] sm:$0xf]
        %v1080 = vld [vmem:[%s1073 + $0x18] sm:$0xf]
        %v1081 = vld [vmem:[%s1073 + $0x1c] sm:$0xf]
        %v1082 = vld [vmem:[%s1073 + $0x20] sm:$0xf]
        %v1083 = vld [vmem:[%s1073 + $0x24] sm:$0xf]
        %v1084 = vld [vmem:[%s1073 + $0x28] sm:$0xf]
        %v1085 = vld [vmem:[%s1073 + $0x2c] sm:$0xf]
        %v1086 = vld [vmem:[%s1073 + $0x30] sm:$0xf]
        %v1087 = vld [vmem:[%s1073 + $0x34] sm:$0xf]
        %v1088 = vld [vmem:[%s1073 + $0x38] sm:$0xf]
        %v1089 = vld [vmem:[%s1073 + $0x3c] sm:$0xf]
        %v1097 = vunpack.c.l.b16 %v1066
        %v1098 = vunpack.c.l.b16 %v1067
        %v1099 = vunpack.c.l.b16 %v1068
        %v1100 = vunpack.c.l.b16 %v1069
        %v1101 = vunpack.c.l.b16 %v1070
        %v1102 = vunpack.c.l.b16 %v1071
        %v1103 = vunpack.c.l.b16 %v1072
        %v1104 = vpack.c.b16 %v1098, %v1097
        %v1105 = vpack.c.b16 %v1100, %v1099
        %v1106 = vpack.c.b16 %v1102, %v1101
        %v1107 = vpack.c.b16 %v1103, %v1103
        %vm1108 = vcmask 1045504
        %v1109 = vrot.slane %v1104, 2
        %v1110 = vrot.slane %v1105, 2
        %v1111 = vsel %vm1108, %v1109, %v1110
        %v1112 = vrot.slane %v1106, 2
        %v1113 = vsel %vm1108, %v1110, %v1112
        %v1114 = vrot.slane %v1107, 2
        %v1115 = vsel %vm1108, %v1112, %v1114
        %v1135 = vunpack.c.l.b16 %v1074
        %v1136 = vunpack.c.l.b16 %v1075
        %v1137 = vunpack.c.l.b16 %v1076
        %v1138 = vunpack.c.l.b16 %v1077
        %v1139 = vunpack.c.l.b16 %v1078
        %v1140 = vunpack.c.l.b16 %v1079
        %v1141 = vunpack.c.l.b16 %v1080
        %v1142 = vunpack.c.l.b16 %v1081
        %v1143 = vunpack.c.l.b16 %v1082
        %v1144 = vunpack.c.l.b16 %v1083
        %v1145 = vunpack.c.l.b16 %v1084
        %v1146 = vunpack.c.l.b16 %v1085
        %v1147 = vunpack.c.l.b16 %v1086
        %v1148 = vunpack.c.l.b16 %v1087
        %v1149 = vunpack.c.l.b16 %v1088
        %v1150 = vunpack.c.l.b16 %v1089
        %v1151 = vpack.c.b16 %v1136, %v1135
        %v1152 = vpack.c.b16 %v1138, %v1137
        %v1153 = vpack.c.b16 %v1140, %v1139
        %v1154 = vpack.c.b16 %v1142, %v1141
        %v1155 = vpack.c.b16 %v1144, %v1143
        %v1156 = vpack.c.b16 %v1146, %v1145
        %v1157 = vpack.c.b16 %v1148, %v1147
        %v1158 = vpack.c.b16 %v1150, %v1149
        %1167 = vmatprep.subr.bf16.mxu0 0
        %1168 = vmatpush1.bf16.msra.mxu0 %v1151
        %1169 = vmatprep.subr.bf16.mxu0 0
        %1170 = vmatpush1.bf16.msra.mxu0 %v1152
        %1171 = vmatprep.subr.bf16.mxu0 0
        %1172 = vmatpush1.bf16.msra.mxu0 %v1153
        %1173 = vmatprep.subr.bf16.mxu0 0
        %1174 = vmatpush1.bf16.msra.mxu0 %v1154
        %1175 = vmatprep.subr.bf16.mxu0 0
        %1176 = vmatpush1.bf16.msra.mxu0 %v1155
        %1177 = vmatprep.subr.bf16.mxu0 0
        %1178 = vmatpush1.bf16.msra.mxu0 %v1156
        %1179 = vmatprep.subr.bf16.mxu0 0
        %1180 = vmatpush1.bf16.msra.mxu0 %v1157
        %1181 = vmatprep.subr.bf16.mxu0 0
        %1182 = vmatpush1.bf16.msra.mxu0 %v1158
        %1183 = vmatprep.subr.bf16.mxu0 0
        %1184 = vmatpush1.bf16.msra.mxu0 0
        %1185 = vmatprep.subr.bf16.mxu0 0
        %1186 = vmatpush1.bf16.msra.mxu0 0
        %1187 = vmatprep.subr.bf16.mxu0 0
        %1188 = vmatpush1.bf16.msra.mxu0 0
        %1189 = vmatprep.subr.bf16.mxu0 0
        %1190 = vmatpush1.bf16.msra.mxu0 0
        %1191 = vmatprep.subr.bf16.mxu0 0
        %1192 = vmatpush1.bf16.msra.mxu0 0
        %1193 = vmatprep.subr.bf16.mxu0 0
        %1194 = vmatpush1.bf16.msra.mxu0 0
        %1195 = vmatprep.subr.bf16.mxu0 0
        %1196 = vmatpush1.bf16.msra.mxu0 0
        %1197 = vmatprep.subr.bf16.mxu0 0
        %1198 = vmatpush1.bf16.msra.mxu0 0
        %1199 = vmatprep.mubr.bf16.mxu0 0
        %1200 = vmatmul.mubr.bf16.gmra.mrb[0].mxu0 %v1111
        %v1201 = vpop.f32.mrb[0].mxu0
        %v1202 = vadd.f32 0.0, %v1201
        %v1203 = vpop.f32.mrb[0].mxu0
        %v1204 = vpop.f32.mrb[0].mxu0
        %v1205 = vadd.f32 0.0, %v1204
        %v1206 = vpop.f32.mrb[0].mxu0
        %1207 = vmatprep.mubr.bf16.mxu0 0
        %1208 = vmatmul.mubr.bf16.gmra.mrb[0].mxu0 %v1113
        %v1209 = vpop.f32.mrb[0].mxu0
        %v1210 = vadd.f32 0.0, %v1209
        %v1211 = vpop.f32.mrb[0].mxu0
        %v1212 = vpop.f32.mrb[0].mxu0
        %v1213 = vadd.f32 0.0, %v1212
        %v1214 = vpop.f32.mrb[0].mxu0
        %1215 = vmatprep.mubr.bf16.mxu0 0
        %1216 = vmatmul.mubr.bf16.gmra.mrb[0].mxu0 %v1115
        %v1217 = vpop.f32.mrb[0].mxu0
        %v1218 = vadd.f32 0.0, %v1217
        %v1219 = vpop.f32.mrb[0].mxu0
        %v1220 = vpop.f32.mrb[0].mxu0
        %v1221 = vadd.f32 0.0, %v1220
        %v1222 = vpop.f32.mrb[0].mxu0
        %1223 = vdwg.mxu0
        %v1224 = vadd.f32 %v1060, %v1202
        %v1225 = vadd.f32 %v1061, %v1205
        %v1226 = vadd.f32 %v1062, %v1210
        %v1227 = vadd.f32 %v1063, %v1213
        %v1228 = vadd.f32 %v1064, %v1218
        %v1229 = vadd.f32 %v1065, %v1221
        %1230 = vst [vmem:[#allocation3] sm:$0xff] %v1224
        %1231 = vst [vmem:[#allocation3 + $0x8] sm:$0xff] %v1225
        %1232 = vst [vmem:[#allocation3 + $0x10] sm:$0xff] %v1226
        %1233 = vst [vmem:[#allocation3 + $0x18] sm:$0xff] %v1227
        %1234 = vst [vmem:[#allocation3 + $0x20] sm:$0xff] %v1228
        %1235 = vst [vmem:[#allocation3 + $0x28] sm:$0xff] %v1229
        %v1236 = vld [vmem:[#allocation3] sm:$0xff]
        %v1237 = vld [vmem:[#allocation3 + $0x8] sm:$0xff]
        %v1238 = vld [vmem:[#allocation3 + $0x10] sm:$0xff]
        %v1239 = vld [vmem:[#allocation3 + $0x18] sm:$0xff]
        %v1240 = vld [vmem:[#allocation3 + $0x20] sm:$0xff]
        %v1241 = vld [vmem:[#allocation3 + $0x28] sm:$0xff]
        %v1242 = vld [vmem:[#allocation2] sm:$0xc]
        %v1243 = vld [vmem:[#allocation2 + $0x4] sm:$0xf]
        %v1244 = vld [vmem:[#allocation2 + $0x8] sm:$0xf]
        %v1245 = vld [vmem:[#allocation2 + $0xc] sm:$0xf]
        %v1246 = vld [vmem:[#allocation2 + $0x10] sm:$0xf]
        %v1247 = vld [vmem:[#allocation2 + $0x14] sm:$0xf]
        %v1248 = vld [vmem:[#allocation2 + $0x18] sm:$0x7]
        %s1249 = scalar_lea.vmem [#allocation9], 320
        %v1250 = vld [vmem:[%s1249] sm:$0xf]
        %v1251 = vld [vmem:[%s1249 + $0x4] sm:$0xf]
        %v1252 = vld [vmem:[%s1249 + $0x8] sm:$0xf]
        %v1253 = vld [vmem:[%s1249 + $0xc] sm:$0xf]
        %v1254 = vld [vmem:[%s1249 + $0x10] sm:$0xf]
        %v1255 = vld [vmem:[%s1249 + $0x14] sm:$0xf]
        %v1256 = vld [vmem:[%s1249 + $0x18] sm:$0xf]
        %v1257 = vld [vmem:[%s1249 + $0x1c] sm:$0xf]
        %v1258 = vld [vmem:[%s1249 + $0x20] sm:$0xf]
        %v1259 = vld [vmem:[%s1249 + $0x24] sm:$0xf]
        %v1260 = vld [vmem:[%s1249 + $0x28] sm:$0xf]
        %v1261 = vld [vmem:[%s1249 + $0x2c] sm:$0xf]
        %v1262 = vld [vmem:[%s1249 + $0x30] sm:$0xf]
        %v1263 = vld [vmem:[%s1249 + $0x34] sm:$0xf]
        %v1264 = vld [vmem:[%s1249 + $0x38] sm:$0xf]
        %v1265 = vld [vmem:[%s1249 + $0x3c] sm:$0xf]
        %v1273 = vunpack.c.l.b16 %v1242
        %v1274 = vunpack.c.l.b16 %v1243
        %v1275 = vunpack.c.l.b16 %v1244
        %v1276 = vunpack.c.l.b16 %v1245
        %v1277 = vunpack.c.l.b16 %v1246
        %v1278 = vunpack.c.l.b16 %v1247
        %v1279 = vunpack.c.l.b16 %v1248
        %v1280 = vpack.c.b16 %v1274, %v1273
        %v1281 = vpack.c.b16 %v1276, %v1275
        %v1282 = vpack.c.b16 %v1278, %v1277
        %v1283 = vpack.c.b16 %v1279, %v1279
        %vm1284 = vsmask.f32 5376
        %v1286 = vshrl.u32 %v1280, 16
        %v1288 = vrot.slane %v1286, 2
        %v1289 = vshll.u32 %v1280, 16
        %v1291 = vrot.slane %v1289, 3
        %v1292 = vor.u32 %v1288, %v1291
        %v1294 = vshrl.u32 %v1281, 16
        %v1296 = vrot.slane %v1294, 2
        %v1297 = vshll.u32 %v1281, 16
        %v1299 = vrot.slane %v1297, 3
        %v1300 = vor.u32 %v1296, %v1299
        %v1301 = vsel %vm1284, %v1292, %v1300
        %v1303 = vshrl.u32 %v1282, 16
        %v1305 = vrot.slane %v1303, 2
        %v1306 = vshll.u32 %v1282, 16
        %v1308 = vrot.slane %v1306, 3
        %v1309 = vor.u32 %v1305, %v1308
        %v1310 = vsel %vm1284, %v1300, %v1309
        %v1312 = vshrl.u32 %v1283, 16
        %v1314 = vrot.slane %v1312, 2
        %v1315 = vshll.u32 %v1283, 16
        %v1317 = vrot.slane %v1315, 3
        %v1318 = vor.u32 %v1314, %v1317
        %v1319 = vsel %vm1284, %v1309, %v1318
        %v1339 = vunpack.c.l.b16 %v1250
        %v1340 = vunpack.c.l.b16 %v1251
        %v1341 = vunpack.c.l.b16 %v1252
        %v1342 = vunpack.c.l.b16 %v1253
        %v1343 = vunpack.c.l.b16 %v1254
        %v1344 = vunpack.c.l.b16 %v1255
        %v1345 = vunpack.c.l.b16 %v1256
        %v1346 = vunpack.c.l.b16 %v1257
        %v1347 = vunpack.c.l.b16 %v1258
        %v1348 = vunpack.c.l.b16 %v1259
        %v1349 = vunpack.c.l.b16 %v1260
        %v1350 = vunpack.c.l.b16 %v1261
        %v1351 = vunpack.c.l.b16 %v1262
        %v1352 = vunpack.c.l.b16 %v1263
        %v1353 = vunpack.c.l.b16 %v1264
        %v1354 = vunpack.c.l.b16 %v1265
        %v1355 = vpack.c.b16 %v1340, %v1339
        %v1356 = vpack.c.b16 %v1342, %v1341
        %v1357 = vpack.c.b16 %v1344, %v1343
        %v1358 = vpack.c.b16 %v1346, %v1345
        %v1359 = vpack.c.b16 %v1348, %v1347
        %v1360 = vpack.c.b16 %v1350, %v1349
        %v1361 = vpack.c.b16 %v1352, %v1351
        %v1362 = vpack.c.b16 %v1354, %v1353
        %1371 = vmatprep.subr.bf16.mxu0 0
        %1372 = vmatpush1.bf16.msra.mxu0 %v1355
        %1373 = vmatprep.subr.bf16.mxu0 0
        %1374 = vmatpush1.bf16.msra.mxu0 %v1356
        %1375 = vmatprep.subr.bf16.mxu0 0
        %1376 = vmatpush1.bf16.msra.mxu0 %v1357
        %1377 = vmatprep.subr.bf16.mxu0 0
        %1378 = vmatpush1.bf16.msra.mxu0 %v1358
        %1379 = vmatprep.subr.bf16.mxu0 0
        %1380 = vmatpush1.bf16.msra.mxu0 %v1359
        %1381 = vmatprep.subr.bf16.mxu0 0
        %1382 = vmatpush1.bf16.msra.mxu0 %v1360
        %1383 = vmatprep.subr.bf16.mxu0 0
        %1384 = vmatpush1.bf16.msra.mxu0 %v1361
        %1385 = vmatprep.subr.bf16.mxu0 0
        %1386 = vmatpush1.bf16.msra.mxu0 %v1362
        %1387 = vmatprep.subr.bf16.mxu0 0
        %1388 = vmatpush1.bf16.msra.mxu0 0
        %1389 = vmatprep.subr.bf16.mxu0 0
        %1390 = vmatpush1.bf16.msra.mxu0 0
        %1391 = vmatprep.subr.bf16.mxu0 0
        %1392 = vmatpush1.bf16.msra.mxu0 0
        %1393 = vmatprep.subr.bf16.mxu0 0
        %1394 = vmatpush1.bf16.msra.mxu0 0
        %1395 = vmatprep.subr.bf16.mxu0 0
        %1396 = vmatpush1.bf16.msra.mxu0 0
        %1397 = vmatprep.subr.bf16.mxu0 0
        %1398 = vmatpush1.bf16.msra.mxu0 0
        %1399 = vmatprep.subr.bf16.mxu0 0
        %1400 = vmatpush1.bf16.msra.mxu0 0
        %1401 = vmatprep.subr.bf16.mxu0 0
        %1402 = vmatpush1.bf16.msra.mxu0 0
        %1403 = vmatprep.mubr.bf16.mxu0 0
        %1404 = vmatmul.mubr.bf16.gmra.mrb[0].mxu0 %v1301
        %v1405 = vpop.f32.mrb[0].mxu0
        %v1406 = vadd.f32 0.0, %v1405
        %v1407 = vpop.f32.mrb[0].mxu0
        %v1408 = vpop.f32.mrb[0].mxu0
        %v1409 = vadd.f32 0.0, %v1408
        %v1410 = vpop.f32.mrb[0].mxu0
        %1411 = vmatprep.mubr.bf16.mxu0 0
        %1412 = vmatmul.mubr.bf16.gmra.mrb[0].mxu0 %v1310
        %v1413 = vpop.f32.mrb[0].mxu0
        %v1414 = vadd.f32 0.0, %v1413
        %v1415 = vpop.f32.mrb[0].mxu0
        %v1416 = vpop.f32.mrb[0].mxu0
        %v1417 = vadd.f32 0.0, %v1416
        %v1418 = vpop.f32.mrb[0].mxu0
        %1419 = vmatprep.mubr.bf16.mxu0 0
        %1420 = vmatmul.mubr.bf16.gmra.mrb[0].mxu0 %v1319
        %v1421 = vpop.f32.mrb[0].mxu0
        %v1422 = vadd.f32 0.0, %v1421
        %v1423 = vpop.f32.mrb[0].mxu0
        %v1424 = vpop.f32.mrb[0].mxu0
        %v1425 = vadd.f32 0.0, %v1424
        %v1426 = vpop.f32.mrb[0].mxu0
        %1427 = vdwg.mxu0
        %v1428 = vadd.f32 %v1236, %v1406
        %v1429 = vadd.f32 %v1237, %v1409
        %v1430 = vadd.f32 %v1238, %v1414
        %v1431 = vadd.f32 %v1239, %v1417
        %v1432 = vadd.f32 %v1240, %v1422
        %v1433 = vadd.f32 %v1241, %v1425
        %1434 = vst [vmem:[#allocation3] sm:$0xff] %v1428
        %1435 = vst [vmem:[#allocation3 + $0x8] sm:$0xff] %v1429
        %1436 = vst [vmem:[#allocation3 + $0x10] sm:$0xff] %v1430
        %1437 = vst [vmem:[#allocation3 + $0x18] sm:$0xff] %v1431
        %1438 = vst [vmem:[#allocation3 + $0x20] sm:$0xff] %v1432
        %1439 = vst [vmem:[#allocation3 + $0x28] sm:$0xff] %v1433
        %v1440 = vld [vmem:[#allocation3] sm:$0xff]
        %v1441 = vld [vmem:[#allocation3 + $0x8] sm:$0xff]
        %v1442 = vld [vmem:[#allocation3 + $0x10] sm:$0xff]
        %v1443 = vld [vmem:[#allocation3 + $0x18] sm:$0xff]
        %v1444 = vld [vmem:[#allocation3 + $0x20] sm:$0xff]
        %v1445 = vld [vmem:[#allocation3 + $0x28] sm:$0xff]
        %v1446 = vld [vmem:[#allocation2] sm:$0x8]
        %v1447 = vld [vmem:[#allocation2 + $0x4] sm:$0xf]
        %v1448 = vld [vmem:[#allocation2 + $0x8] sm:$0xf]
        %v1449 = vld [vmem:[#allocation2 + $0xc] sm:$0xf]
        %v1450 = vld [vmem:[#allocation2 + $0x10] sm:$0xf]
        %v1451 = vld [vmem:[#allocation2 + $0x14] sm:$0xf]
        %v1452 = vld [vmem:[#allocation2 + $0x18] sm:$0x7]
        %s1453 = scalar_lea.vmem [#allocation9], 384
        %v1454 = vld [vmem:[%s1453] sm:$0xf]
        %v1455 = vld [vmem:[%s1453 + $0x4] sm:$0xf]
        %v1456 = vld [vmem:[%s1453 + $0x8] sm:$0xf]
        %v1457 = vld [vmem:[%s1453 + $0xc] sm:$0xf]
        %v1458 = vld [vmem:[%s1453 + $0x10] sm:$0xf]
        %v1459 = vld [vmem:[%s1453 + $0x14] sm:$0xf]
        %v1460 = vld [vmem:[%s1453 + $0x18] sm:$0xf]
        %v1461 = vld [vmem:[%s1453 + $0x1c] sm:$0xf]
        %v1462 = vld [vmem:[%s1453 + $0x20] sm:$0xf]
        %v1463 = vld [vmem:[%s1453 + $0x24] sm:$0xf]
        %v1464 = vld [vmem:[%s1453 + $0x28] sm:$0xf]
        %v1465 = vld [vmem:[%s1453 + $0x2c] sm:$0xf]
        %v1466 = vld [vmem:[%s1453 + $0x30] sm:$0xf]
        %v1467 = vld [vmem:[%s1453 + $0x34] sm:$0xf]
        %v1468 = vld [vmem:[%s1453 + $0x38] sm:$0xf]
        %v1469 = vld [vmem:[%s1453 + $0x3c] sm:$0xf]
        %v1477 = vunpack.c.l.b16 %v1446
        %v1478 = vunpack.c.l.b16 %v1447
        %v1479 = vunpack.c.l.b16 %v1448
        %v1480 = vunpack.c.l.b16 %v1449
        %v1481 = vunpack.c.l.b16 %v1450
        %v1482 = vunpack.c.l.b16 %v1451
        %v1483 = vunpack.c.l.b16 %v1452
        %v1484 = vpack.c.b16 %v1478, %v1477
        %v1485 = vpack.c.b16 %v1480, %v1479
        %v1486 = vpack.c.b16 %v1482, %v1481
        %v1487 = vpack.c.b16 %v1483, %v1483
        %vm1488 = vcmask 1044480
        %v1489 = vrot.slane %v1484, 3
        %v1490 = vrot.slane %v1485, 3
        %v1491 = vsel %vm1488, %v1489, %v1490
        %v1492 = vrot.slane %v1486, 3
        %v1493 = vsel %vm1488, %v1490, %v1492
        %v1494 = vrot.slane %v1487, 3
        %v1495 = vsel %vm1488, %v1492, %v1494
        %v1515 = vunpack.c.l.b16 %v1454
        %v1516 = vunpack.c.l.b16 %v1455
        %v1517 = vunpack.c.l.b16 %v1456
        %v1518 = vunpack.c.l.b16 %v1457
        %v1519 = vunpack.c.l.b16 %v1458
        %v1520 = vunpack.c.l.b16 %v1459
        %v1521 = vunpack.c.l.b16 %v1460
        %v1522 = vunpack.c.l.b16 %v1461
        %v1523 = vunpack.c.l.b16 %v1462
        %v1524 = vunpack.c.l.b16 %v1463
        %v1525 = vunpack.c.l.b16 %v1464
        %v1526 = vunpack.c.l.b16 %v1465
        %v1527 = vunpack.c.l.b16 %v1466
        %v1528 = vunpack.c.l.b16 %v1467
        %v1529 = vunpack.c.l.b16 %v1468
        %v1530 = vunpack.c.l.b16 %v1469
        %v1531 = vpack.c.b16 %v1516, %v1515
        %v1532 = vpack.c.b16 %v1518, %v1517
        %v1533 = vpack.c.b16 %v1520, %v1519
        %v1534 = vpack.c.b16 %v1522, %v1521
        %v1535 = vpack.c.b16 %v1524, %v1523
        %v1536 = vpack.c.b16 %v1526, %v1525
        %v1537 = vpack.c.b16 %v1528, %v1527
        %v1538 = vpack.c.b16 %v1530, %v1529
        %1547 = vmatprep.subr.bf16.mxu0 0
        %1548 = vmatpush1.bf16.msra.mxu0 %v1531
        %1549 = vmatprep.subr.bf16.mxu0 0
        %1550 = vmatpush1.bf16.msra.mxu0 %v1532
        %1551 = vmatprep.subr.bf16.mxu0 0
        %1552 = vmatpush1.bf16.msra.mxu0 %v1533
        %1553 = vmatprep.subr.bf16.mxu0 0
        %1554 = vmatpush1.bf16.msra.mxu0 %v1534
        %1555 = vmatprep.subr.bf16.mxu0 0
        %1556 = vmatpush1.bf16.msra.mxu0 %v1535
        %1557 = vmatprep.subr.bf16.mxu0 0
        %1558 = vmatpush1.bf16.msra.mxu0 %v1536
        %1559 = vmatprep.subr.bf16.mxu0 0
        %1560 = vmatpush1.bf16.msra.mxu0 %v1537
        %1561 = vmatprep.subr.bf16.mxu0 0
        %1562 = vmatpush1.bf16.msra.mxu0 %v1538
        %1563 = vmatprep.subr.bf16.mxu0 0
        %1564 = vmatpush1.bf16.msra.mxu0 0
        %1565 = vmatprep.subr.bf16.mxu0 0
        %1566 = vmatpush1.bf16.msra.mxu0 0
        %1567 = vmatprep.subr.bf16.mxu0 0
        %1568 = vmatpush1.bf16.msra.mxu0 0
        %1569 = vmatprep.subr.bf16.mxu0 0
        %1570 = vmatpush1.bf16.msra.mxu0 0
        %1571 = vmatprep.subr.bf16.mxu0 0
        %1572 = vmatpush1.bf16.msra.mxu0 0
        %1573 = vmatprep.subr.bf16.mxu0 0
        %1574 = vmatpush1.bf16.msra.mxu0 0
        %1575 = vmatprep.subr.bf16.mxu0 0
        %1576 = vmatpush1.bf16.msra.mxu0 0
        %1577 = vmatprep.subr.bf16.mxu0 0
        %1578 = vmatpush1.bf16.msra.mxu0 0
        %1579 = vmatprep.mubr.bf16.mxu0 0
        %1580 = vmatmul.mubr.bf16.gmra.mrb[0].mxu0 %v1491
        %v1581 = vpop.f32.mrb[0].mxu0
        %v1582 = vadd.f32 0.0, %v1581
        %v1583 = vpop.f32.mrb[0].mxu0
        %v1584 = vpop.f32.mrb[0].mxu0
        %v1585 = vadd.f32 0.0, %v1584
        %v1586 = vpop.f32.mrb[0].mxu0
        %1587 = vmatprep.mubr.bf16.mxu0 0
        %1588 = vmatmul.mubr.bf16.gmra.mrb[0].mxu0 %v1493
        %v1589 = vpop.f32.mrb[0].mxu0
        %v1590 = vadd.f32 0.0, %v1589
        %v1591 = vpop.f32.mrb[0].mxu0
        %v1592 = vpop.f32.mrb[0].mxu0
        %v1593 = vadd.f32 0.0, %v1592
        %v1594 = vpop.f32.mrb[0].mxu0
        %1595 = vmatprep.mubr.bf16.mxu0 0
        %1596 = vmatmul.mubr.bf16.gmra.mrb[0].mxu0 %v1495
        %v1597 = vpop.f32.mrb[0].mxu0
        %v1598 = vadd.f32 0.0, %v1597
        %v1599 = vpop.f32.mrb[0].mxu0
        %v1600 = vpop.f32.mrb[0].mxu0
        %v1601 = vadd.f32 0.0, %v1600
        %v1602 = vpop.f32.mrb[0].mxu0
        %1603 = vdwg.mxu0
        %v1604 = vadd.f32 %v1440, %v1582
        %v1605 = vadd.f32 %v1441, %v1585
        %v1606 = vadd.f32 %v1442, %v1590
        %v1607 = vadd.f32 %v1443, %v1593
        %v1608 = vadd.f32 %v1444, %v1598
        %v1609 = vadd.f32 %v1445, %v1601
        %1610 = vst [vmem:[#allocation3] sm:$0xff] %v1604
        %1611 = vst [vmem:[#allocation3 + $0x8] sm:$0xff] %v1605
        %1612 = vst [vmem:[#allocation3 + $0x10] sm:$0xff] %v1606
        %1613 = vst [vmem:[#allocation3 + $0x18] sm:$0xff] %v1607
        %1614 = vst [vmem:[#allocation3 + $0x20] sm:$0xff] %v1608
        %1615 = vst [vmem:[#allocation3 + $0x28] sm:$0xff] %v1609
        %v1616 = vld [vmem:[#allocation3] sm:$0xff]
        %v1617 = vld [vmem:[#allocation3 + $0x8] sm:$0xff]
        %v1618 = vld [vmem:[#allocation3 + $0x10] sm:$0xff]
        %v1619 = vld [vmem:[#allocation3 + $0x18] sm:$0xff]
        %v1620 = vld [vmem:[#allocation3 + $0x20] sm:$0xff]
        %v1621 = vld [vmem:[#allocation3 + $0x28] sm:$0xff]
        %v1622 = vld [vmem:[#allocation2] sm:$0x8]
        %v1623 = vld [vmem:[#allocation2 + $0x4] sm:$0xf]
        %v1624 = vld [vmem:[#allocation2 + $0x8] sm:$0xf]
        %v1625 = vld [vmem:[#allocation2 + $0xc] sm:$0xf]
        %v1626 = vld [vmem:[#allocation2 + $0x10] sm:$0xf]
        %v1627 = vld [vmem:[#allocation2 + $0x14] sm:$0xf]
        %v1628 = vld [vmem:[#allocation2 + $0x18] sm:$0xf]
        %s1629 = scalar_lea.vmem [#allocation9], 448
        %v1630 = vld [vmem:[%s1629] sm:$0xf]
        %v1631 = vld [vmem:[%s1629 + $0x4] sm:$0xf]
        %v1632 = vld [vmem:[%s1629 + $0x8] sm:$0xf]
        %v1633 = vld [vmem:[%s1629 + $0xc] sm:$0xf]
        %v1634 = vld [vmem:[%s1629 + $0x10] sm:$0xf]
        %v1635 = vld [vmem:[%s1629 + $0x14] sm:$0xf]
        %v1636 = vld [vmem:[%s1629 + $0x18] sm:$0xf]
        %v1637 = vld [vmem:[%s1629 + $0x1c] sm:$0xf]
        %v1638 = vld [vmem:[%s1629 + $0x20] sm:$0xf]
        %v1639 = vld [vmem:[%s1629 + $0x24] sm:$0xf]
        %v1640 = vld [vmem:[%s1629 + $0x28] sm:$0xf]
        %v1641 = vld [vmem:[%s1629 + $0x2c] sm:$0xf]
        %v1642 = vld [vmem:[%s1629 + $0x30] sm:$0xf]
        %v1643 = vld [vmem:[%s1629 + $0x34] sm:$0xf]
        %v1644 = vld [vmem:[%s1629 + $0x38] sm:$0xf]
        %v1645 = vld [vmem:[%s1629 + $0x3c] sm:$0xf]
        %v1653 = vunpack.c.l.b16 %v1622
        %v1654 = vunpack.c.l.b16 %v1623
        %v1655 = vunpack.c.l.b16 %v1624
        %v1656 = vunpack.c.l.b16 %v1625
        %v1657 = vunpack.c.l.b16 %v1626
        %v1658 = vunpack.c.l.b16 %v1627
        %v1659 = vunpack.c.l.b16 %v1628
        %v1660 = vpack.c.b16 %v1654, %v1653
        %v1661 = vpack.c.b16 %v1656, %v1655
        %v1662 = vpack.c.b16 %v1658, %v1657
        %v1663 = vpack.c.b16 %v1659, %v1659
        %vm1664 = vsmask.f32 4352
        %v1666 = vshrl.u32 %v1660, 16
        %v1668 = vrot.slane %v1666, 3
        %v1669 = vshll.u32 %v1660, 16
        %v1671 = vrot.slane %v1669, 4
        %v1672 = vor.u32 %v1668, %v1671
        %v1674 = vshrl.u32 %v1661, 16
        %v1676 = vrot.slane %v1674, 3
        %v1677 = vshll.u32 %v1661, 16
        %v1679 = vrot.slane %v1677, 4
        %v1680 = vor.u32 %v1676, %v1679
        %v1681 = vsel %vm1664, %v1672, %v1680
        %v1683 = vshrl.u32 %v1662, 16
        %v1685 = vrot.slane %v1683, 3
        %v1686 = vshll.u32 %v1662, 16
        %v1688 = vrot.slane %v1686, 4
        %v1689 = vor.u32 %v1685, %v1688
        %v1690 = vsel %vm1664, %v1680, %v1689
        %v1692 = vshrl.u32 %v1663, 16
        %v1694 = vrot.slane %v1692, 3
        %v1695 = vshll.u32 %v1663, 16
        %v1697 = vrot.slane %v1695, 4
        %v1698 = vor.u32 %v1694, %v1697
        %v1699 = vsel %vm1664, %v1689, %v1698
        %v1719 = vunpack.c.l.b16 %v1630
        %v1720 = vunpack.c.l.b16 %v1631
        %v1721 = vunpack.c.l.b16 %v1632
        %v1722 = vunpack.c.l.b16 %v1633
        %v1723 = vunpack.c.l.b16 %v1634
        %v1724 = vunpack.c.l.b16 %v1635
        %v1725 = vunpack.c.l.b16 %v1636
        %v1726 = vunpack.c.l.b16 %v1637
        %v1727 = vunpack.c.l.b16 %v1638
        %v1728 = vunpack.c.l.b16 %v1639
        %v1729 = vunpack.c.l.b16 %v1640
        %v1730 = vunpack.c.l.b16 %v1641
        %v1731 = vunpack.c.l.b16 %v1642
        %v1732 = vunpack.c.l.b16 %v1643
        %v1733 = vunpack.c.l.b16 %v1644
        %v1734 = vunpack.c.l.b16 %v1645
        %v1735 = vpack.c.b16 %v1720, %v1719
        %v1736 = vpack.c.b16 %v1722, %v1721
        %v1737 = vpack.c.b16 %v1724, %v1723
        %v1738 = vpack.c.b16 %v1726, %v1725
        %v1739 = vpack.c.b16 %v1728, %v1727
        %v1740 = vpack.c.b16 %v1730, %v1729
        %v1741 = vpack.c.b16 %v1732, %v1731
        %v1742 = vpack.c.b16 %v1734, %v1733
        %1751 = vmatprep.subr.bf16.mxu0 0
        %1752 = vmatpush1.bf16.msra.mxu0 %v1735
        %1753 = vmatprep.subr.bf16.mxu0 0
        %1754 = vmatpush1.bf16.msra.mxu0 %v1736
        %1755 = vmatprep.subr.bf16.mxu0 0
        %1756 = vmatpush1.bf16.msra.mxu0 %v1737
        %1757 = vmatprep.subr.bf16.mxu0 0
        %1758 = vmatpush1.bf16.msra.mxu0 %v1738
        %1759 = vmatprep.subr.bf16.mxu0 0
        %1760 = vmatpush1.bf16.msra.mxu0 %v1739
        %1761 = vmatprep.subr.bf16.mxu0 0
        %1762 = vmatpush1.bf16.msra.mxu0 %v1740
        %1763 = vmatprep.subr.bf16.mxu0 0
        %1764 = vmatpush1.bf16.msra.mxu0 %v1741
        %1765 = vmatprep.subr.bf16.mxu0 0
        %1766 = vmatpush1.bf16.msra.mxu0 %v1742
        %1767 = vmatprep.subr.bf16.mxu0 0
        %1768 = vmatpush1.bf16.msra.mxu0 0
        %1769 = vmatprep.subr.bf16.mxu0 0
        %1770 = vmatpush1.bf16.msra.mxu0 0
        %1771 = vmatprep.subr.bf16.mxu0 0
        %1772 = vmatpush1.bf16.msra.mxu0 0
        %1773 = vmatprep.subr.bf16.mxu0 0
        %1774 = vmatpush1.bf16.msra.mxu0 0
        %1775 = vmatprep.subr.bf16.mxu0 0
        %1776 = vmatpush1.bf16.msra.mxu0 0
        %1777 = vmatprep.subr.bf16.mxu0 0
        %1778 = vmatpush1.bf16.msra.mxu0 0
        %1779 = vmatprep.subr.bf16.mxu0 0
        %1780 = vmatpush1.bf16.msra.mxu0 0
        %1781 = vmatprep.subr.bf16.mxu0 0
        %1782 = vmatpush1.bf16.msra.mxu0 0
        %1783 = vmatprep.mubr.bf16.mxu0 0
        %1784 = vmatmul.mubr.bf16.gmra.mrb[0].mxu0 %v1681
        %v1785 = vpop.f32.mrb[0].mxu0
        %v1786 = vadd.f32 0.0, %v1785
        %v1787 = vpop.f32.mrb[0].mxu0
        %v1788 = vpop.f32.mrb[0].mxu0
        %v1789 = vadd.f32 0.0, %v1788
        %v1790 = vpop.f32.mrb[0].mxu0
        %1791 = vmatprep.mubr.bf16.mxu0 0
        %1792 = vmatmul.mubr.bf16.gmra.mrb[0].mxu0 %v1690
        %v1793 = vpop.f32.mrb[0].mxu0
        %v1794 = vadd.f32 0.0, %v1793
        %v1795 = vpop.f32.mrb[0].mxu0
        %v1796 = vpop.f32.mrb[0].mxu0
        %v1797 = vadd.f32 0.0, %v1796
        %v1798 = vpop.f32.mrb[0].mxu0
        %1799 = vmatprep.mubr.bf16.mxu0 0
        %1800 = vmatmul.mubr.bf16.gmra.mrb[0].mxu0 %v1699
        %v1801 = vpop.f32.mrb[0].mxu0
        %v1802 = vadd.f32 0.0, %v1801
        %v1803 = vpop.f32.mrb[0].mxu0
        %v1804 = vpop.f32.mrb[0].mxu0
        %v1805 = vadd.f32 0.0, %v1804
        %v1806 = vpop.f32.mrb[0].mxu0
        %1807 = vdwg.mxu0
        %v1808 = vadd.f32 %v1616, %v1786
        %v1809 = vadd.f32 %v1617, %v1789
        %v1810 = vadd.f32 %v1618, %v1794
        %v1811 = vadd.f32 %v1619, %v1797
        %v1812 = vadd.f32 %v1620, %v1802
        %v1813 = vadd.f32 %v1621, %v1805
        %1814 = vst [vmem:[#allocation3] sm:$0xff] %v1808
        %1815 = vst [vmem:[#allocation3 + $0x8] sm:$0xff] %v1809
        %1816 = vst [vmem:[#allocation3 + $0x10] sm:$0xff] %v1810
        %1817 = vst [vmem:[#allocation3 + $0x18] sm:$0xff] %v1811
        %1818 = vst [vmem:[#allocation3 + $0x20] sm:$0xff] %v1812
        %1819 = vst [vmem:[#allocation3 + $0x28] sm:$0xff] %v1813
        %v1820 = vld [vmem:[#allocation3] sm:$0xff]
        %v1821 = vld [vmem:[#allocation3 + $0x8] sm:$0xff]
        %v1822 = vld [vmem:[#allocation3 + $0x10] sm:$0xff]
        %v1823 = vld [vmem:[#allocation3 + $0x18] sm:$0xff]
        %v1824 = vld [vmem:[#allocation3 + $0x20] sm:$0xff]
        %v1825 = vld [vmem:[#allocation3 + $0x28] sm:$0xff]
        %v1826 = vld [vmem:[#allocation2 + $0x4] sm:$0xf]
        %v1827 = vld [vmem:[#allocation2 + $0x8] sm:$0xf]
        %v1828 = vld [vmem:[#allocation2 + $0xc] sm:$0xf]
        %v1829 = vld [vmem:[#allocation2 + $0x10] sm:$0xf]
        %v1830 = vld [vmem:[#allocation2 + $0x14] sm:$0xf]
        %v1831 = vld [vmem:[#allocation2 + $0x18] sm:$0xf]
        %s1832 = scalar_lea.vmem [#allocation9], 512
        %v1833 = vld [vmem:[%s1832] sm:$0xf]
        %v1834 = vld [vmem:[%s1832 + $0x4] sm:$0xf]
        %v1835 = vld [vmem:[%s1832 + $0x8] sm:$0xf]
        %v1836 = vld [vmem:[%s1832 + $0xc] sm:$0xf]
        %v1837 = vld [vmem:[%s1832 + $0x10] sm:$0xf]
        %v1838 = vld [vmem:[%s1832 + $0x14] sm:$0xf]
        %v1839 = vld [vmem:[%s1832 + $0x18] sm:$0xf]
        %v1840 = vld [vmem:[%s1832 + $0x1c] sm:$0xf]
        %v1841 = vld [vmem:[%s1832 + $0x20] sm:$0xf]
        %v1842 = vld [vmem:[%s1832 + $0x24] sm:$0xf]
        %v1843 = vld [vmem:[%s1832 + $0x28] sm:$0xf]
        %v1844 = vld [vmem:[%s1832 + $0x2c] sm:$0xf]
        %v1845 = vld [vmem:[%s1832 + $0x30] sm:$0xf]
        %v1846 = vld [vmem:[%s1832 + $0x34] sm:$0xf]
        %v1847 = vld [vmem:[%s1832 + $0x38] sm:$0xf]
        %v1848 = vld [vmem:[%s1832 + $0x3c] sm:$0xf]
        %v1855 = vunpack.c.l.b16 %v1826
        %v1856 = vunpack.c.l.b16 %v1827
        %v1857 = vunpack.c.l.b16 %v1828
        %v1858 = vunpack.c.l.b16 %v1829
        %v1859 = vunpack.c.l.b16 %v1830
        %v1860 = vunpack.c.l.b16 %v1831
        %v1861 = vpack.c.b16 %v1856, %v1855
        %v1862 = vpack.c.b16 %v1858, %v1857
        %v1863 = vpack.c.b16 %v1860, %v1859
        %v1883 = vunpack.c.l.b16 %v1833
        %v1884 = vunpack.c.l.b16 %v1834
        %v1885 = vunpack.c.l.b16 %v1835
        %v1886 = vunpack.c.l.b16 %v1836
        %v1887 = vunpack.c.l.b16 %v1837
        %v1888 = vunpack.c.l.b16 %v1838
        %v1889 = vunpack.c.l.b16 %v1839
        %v1890 = vunpack.c.l.b16 %v1840
        %v1891 = vunpack.c.l.b16 %v1841
        %v1892 = vunpack.c.l.b16 %v1842
        %v1893 = vunpack.c.l.b16 %v1843
        %v1894 = vunpack.c.l.b16 %v1844
        %v1895 = vunpack.c.l.b16 %v1845
        %v1896 = vunpack.c.l.b16 %v1846
        %v1897 = vunpack.c.l.b16 %v1847
        %v1898 = vunpack.c.l.b16 %v1848
        %v1899 = vpack.c.b16 %v1884, %v1883
        %v1900 = vpack.c.b16 %v1886, %v1885
        %v1901 = vpack.c.b16 %v1888, %v1887
        %v1902 = vpack.c.b16 %v1890, %v1889
        %v1903 = vpack.c.b16 %v1892, %v1891
        %v1904 = vpack.c.b16 %v1894, %v1893
        %v1905 = vpack.c.b16 %v1896, %v1895
        %v1906 = vpack.c.b16 %v1898, %v1897
        %1915 = vmatprep.subr.bf16.mxu0 0
        %1916 = vmatpush1.bf16.msra.mxu0 %v1899
        %1917 = vmatprep.subr.bf16.mxu0 0
        %1918 = vmatpush1.bf16.msra.mxu0 %v1900
        %1919 = vmatprep.subr.bf16.mxu0 0
        %1920 = vmatpush1.bf16.msra.mxu0 %v1901
        %1921 = vmatprep.subr.bf16.mxu0 0
        %1922 = vmatpush1.bf16.msra.mxu0 %v1902
        %1923 = vmatprep.subr.bf16.mxu0 0
        %1924 = vmatpush1.bf16.msra.mxu0 %v1903
        %1925 = vmatprep.subr.bf16.mxu0 0
        %1926 = vmatpush1.bf16.msra.mxu0 %v1904
        %1927 = vmatprep.subr.bf16.mxu0 0
        %1928 = vmatpush1.bf16.msra.mxu0 %v1905
        %1929 = vmatprep.subr.bf16.mxu0 0
        %1930 = vmatpush1.bf16.msra.mxu0 %v1906
        %1931 = vmatprep.subr.bf16.mxu0 0
        %1932 = vmatpush1.bf16.msra.mxu0 0
        %1933 = vmatprep.subr.bf16.mxu0 0
        %1934 = vmatpush1.bf16.msra.mxu0 0
        %1935 = vmatprep.subr.bf16.mxu0 0
        %1936 = vmatpush1.bf16.msra.mxu0 0
        %1937 = vmatprep.subr.bf16.mxu0 0
        %1938 = vmatpush1.bf16.msra.mxu0 0
        %1939 = vmatprep.subr.bf16.mxu0 0
        %1940 = vmatpush1.bf16.msra.mxu0 0
        %1941 = vmatprep.subr.bf16.mxu0 0
        %1942 = vmatpush1.bf16.msra.mxu0 0
        %1943 = vmatprep.subr.bf16.mxu0 0
        %1944 = vmatpush1.bf16.msra.mxu0 0
        %1945 = vmatprep.subr.bf16.mxu0 0
        %1946 = vmatpush1.bf16.msra.mxu0 0
        %1947 = vmatprep.mubr.bf16.mxu0 0
        %1948 = vmatmul.mubr.bf16.gmra.mrb[0].mxu0 %v1861
        %v1949 = vpop.f32.mrb[0].mxu0
        %v1950 = vadd.f32 0.0, %v1949
        %v1951 = vpop.f32.mrb[0].mxu0
        %v1952 = vpop.f32.mrb[0].mxu0
        %v1953 = vadd.f32 0.0, %v1952
        %v1954 = vpop.f32.mrb[0].mxu0
        %1955 = vmatprep.mubr.bf16.mxu0 0
        %1956 = vmatmul.mubr.bf16.gmra.mrb[0].mxu0 %v1862
        %v1957 = vpop.f32.mrb[0].mxu0
        %v1958 = vadd.f32 0.0, %v1957
        %v1959 = vpop.f32.mrb[0].mxu0
        %v1960 = vpop.f32.mrb[0].mxu0
        %v1961 = vadd.f32 0.0, %v1960
        %v1962 = vpop.f32.mrb[0].mxu0
        %1963 = vmatprep.mubr.bf16.mxu0 0
        %1964 = vmatmul.mubr.bf16.gmra.mrb[0].mxu0 %v1863
        %v1965 = vpop.f32.mrb[0].mxu0
        %v1966 = vadd.f32 0.0, %v1965
        %v1967 = vpop.f32.mrb[0].mxu0
        %v1968 = vpop.f32.mrb[0].mxu0
        %v1969 = vadd.f32 0.0, %v1968
        %v1970 = vpop.f32.mrb[0].mxu0
        %1971 = vdwg.mxu0
        %v1972 = vadd.f32 %v1820, %v1950
        %v1973 = vadd.f32 %v1821, %v1953
        %v1974 = vadd.f32 %v1822, %v1958
        %v1975 = vadd.f32 %v1823, %v1961
        %v1976 = vadd.f32 %v1824, %v1966
        %v1977 = vadd.f32 %v1825, %v1969
        %1978 = vst [vmem:[#allocation3] sm:$0xff] %v1972
        %1979 = vst [vmem:[#allocation3 + $0x8] sm:$0xff] %v1973
        %1980 = vst [vmem:[#allocation3 + $0x10] sm:$0xff] %v1974
        %1981 = vst [vmem:[#allocation3 + $0x18] sm:$0xff] %v1975
        %1982 = vst [vmem:[#allocation3 + $0x20] sm:$0xff] %v1976
        %1983 = vst [vmem:[#allocation3 + $0x28] sm:$0xff] %v1977
        %v1984 = vld [vmem:[#allocation3] sm:$0xff]
        %v1985 = vld [vmem:[#allocation3 + $0x8] sm:$0xff]
        %v1986 = vld [vmem:[#allocation3 + $0x10] sm:$0xff]
        %v1987 = vld [vmem:[#allocation3 + $0x18] sm:$0xff]
        %v1988 = vld [vmem:[#allocation3 + $0x20] sm:$0xff]
        %v1989 = vld [vmem:[#allocation3 + $0x28] sm:$0xff]
        %v1990 = vld [vmem:[#allocation2 + $0x4] sm:$0xf]
        %v1991 = vld [vmem:[#allocation2 + $0x8] sm:$0xf]
        %v1992 = vld [vmem:[#allocation2 + $0xc] sm:$0xf]
        %v1993 = vld [vmem:[#allocation2 + $0x10] sm:$0xf]
        %v1994 = vld [vmem:[#allocation2 + $0x14] sm:$0xf]
        %v1995 = vld [vmem:[#allocation2 + $0x18] sm:$0xf]
        %v1996 = vld [vmem:[#allocation2 + $0x1c] sm:$0x1]
        %s1997 = scalar_lea.vmem [#allocation9], 576
        %v1998 = vld [vmem:[%s1997] sm:$0xf]
        %v1999 = vld [vmem:[%s1997 + $0x4] sm:$0xf]
        %v2000 = vld [vmem:[%s1997 + $0x8] sm:$0xf]
        %v2001 = vld [vmem:[%s1997 + $0xc] sm:$0xf]
        %v2002 = vld [vmem:[%s1997 + $0x10] sm:$0xf]
        %v2003 = vld [vmem:[%s1997 + $0x14] sm:$0xf]
        %v2004 = vld [vmem:[%s1997 + $0x18] sm:$0xf]
        %v2005 = vld [vmem:[%s1997 + $0x1c] sm:$0xf]
        %v2006 = vld [vmem:[%s1997 + $0x20] sm:$0xf]
        %v2007 = vld [vmem:[%s1997 + $0x24] sm:$0xf]
        %v2008 = vld [vmem:[%s1997 + $0x28] sm:$0xf]
        %v2009 = vld [vmem:[%s1997 + $0x2c] sm:$0xf]
        %v2010 = vld [vmem:[%s1997 + $0x30] sm:$0xf]
        %v2011 = vld [vmem:[%s1997 + $0x34] sm:$0xf]
        %v2012 = vld [vmem:[%s1997 + $0x38] sm:$0xf]
        %v2013 = vld [vmem:[%s1997 + $0x3c] sm:$0xf]
        %v2021 = vunpack.c.l.b16 %v1990
        %v2022 = vunpack.c.l.b16 %v1991
        %v2023 = vunpack.c.l.b16 %v1992
        %v2024 = vunpack.c.l.b16 %v1993
        %v2025 = vunpack.c.l.b16 %v1994
        %v2026 = vunpack.c.l.b16 %v1995
        %v2027 = vunpack.c.l.b16 %v1996
        %v2028 = vpack.c.b16 %v2022, %v2021
        %v2029 = vpack.c.b16 %v2024, %v2023
        %v2030 = vpack.c.b16 %v2026, %v2025
        %v2031 = vpack.c.b16 %v2027, %v2027
        %v2033 = vshrl.u32 %v2028, 16
        %v2035 = vshll.u32 %v2028, 16
        %v2037 = vrot.slane %v2035, 1
        %v2038 = vor.u32 %v2033, %v2037
        %v2040 = vshll.u32 %v2029, 16
        %v2042 = vrot.slane %v2040, 1
        %v2043 = vsel %vm531, %v2038, %v2042
        %v2044 = vshrl.u32 %v2029, 16
        %v2046 = vor.u32 %v2044, %v2042
        %v2048 = vshll.u32 %v2030, 16
        %v2050 = vrot.slane %v2048, 1
        %v2051 = vsel %vm531, %v2046, %v2050
        %v2052 = vshrl.u32 %v2030, 16
        %v2054 = vor.u32 %v2052, %v2050
        %v2056 = vshll.u32 %v2031, 16
        %v2058 = vrot.slane %v2056, 1
        %v2059 = vsel %vm531, %v2054, %v2058
        %v2079 = vunpack.c.l.b16 %v1998
        %v2080 = vunpack.c.l.b16 %v1999
        %v2081 = vunpack.c.l.b16 %v2000
        %v2082 = vunpack.c.l.b16 %v2001
        %v2083 = vunpack.c.l.b16 %v2002
        %v2084 = vunpack.c.l.b16 %v2003
        %v2085 = vunpack.c.l.b16 %v2004
        %v2086 = vunpack.c.l.b16 %v2005
        %v2087 = vunpack.c.l.b16 %v2006
        %v2088 = vunpack.c.l.b16 %v2007
        %v2089 = vunpack.c.l.b16 %v2008
        %v2090 = vunpack.c.l.b16 %v2009
        %v2091 = vunpack.c.l.b16 %v2010
        %v2092 = vunpack.c.l.b16 %v2011
        %v2093 = vunpack.c.l.b16 %v2012
        %v2094 = vunpack.c.l.b16 %v2013
        %v2095 = vpack.c.b16 %v2080, %v2079
        %v2096 = vpack.c.b16 %v2082, %v2081
        %v2097 = vpack.c.b16 %v2084, %v2083
        %v2098 = vpack.c.b16 %v2086, %v2085
        %v2099 = vpack.c.b16 %v2088, %v2087
        %v2100 = vpack.c.b16 %v2090, %v2089
        %v2101 = vpack.c.b16 %v2092, %v2091
        %v2102 = vpack.c.b16 %v2094, %v2093
        %2111 = vmatprep.subr.bf16.mxu0 0
        %2112 = vmatpush1.bf16.msra.mxu0 %v2095
        %2113 = vmatprep.subr.bf16.mxu0 0
        %2114 = vmatpush1.bf16.msra.mxu0 %v2096
        %2115 = vmatprep.subr.bf16.mxu0 0
        %2116 = vmatpush1.bf16.msra.mxu0 %v2097
        %2117 = vmatprep.subr.bf16.mxu0 0
        %2118 = vmatpush1.bf16.msra.mxu0 %v2098
        %2119 = vmatprep.subr.bf16.mxu0 0
        %2120 = vmatpush1.bf16.msra.mxu0 %v2099
        %2121 = vmatprep.subr.bf16.mxu0 0
        %2122 = vmatpush1.bf16.msra.mxu0 %v2100
        %2123 = vmatprep.subr.bf16.mxu0 0
        %2124 = vmatpush1.bf16.msra.mxu0 %v2101
        %2125 = vmatprep.subr.bf16.mxu0 0
        %2126 = vmatpush1.bf16.msra.mxu0 %v2102
        %2127 = vmatprep.subr.bf16.mxu0 0
        %2128 = vmatpush1.bf16.msra.mxu0 0
        %2129 = vmatprep.subr.bf16.mxu0 0
        %2130 = vmatpush1.bf16.msra.mxu0 0
        %2131 = vmatprep.subr.bf16.mxu0 0
        %2132 = vmatpush1.bf16.msra.mxu0 0
        %2133 = vmatprep.subr.bf16.mxu0 0
        %2134 = vmatpush1.bf16.msra.mxu0 0
        %2135 = vmatprep.subr.bf16.mxu0 0
        %2136 = vmatpush1.bf16.msra.mxu0 0
        %2137 = vmatprep.subr.bf16.mxu0 0
        %2138 = vmatpush1.bf16.msra.mxu0 0
        %2139 = vmatprep.subr.bf16.mxu0 0
        %2140 = vmatpush1.bf16.msra.mxu0 0
        %2141 = vmatprep.subr.bf16.mxu0 0
        %2142 = vmatpush1.bf16.msra.mxu0 0
        %2143 = vmatprep.mubr.bf16.mxu0 0
        %2144 = vmatmul.mubr.bf16.gmra.mrb[0].mxu0 %v2043
        %v2145 = vpop.f32.mrb[0].mxu0
        %v2146 = vadd.f32 0.0, %v2145
        %v2147 = vpop.f32.mrb[0].mxu0
        %v2148 = vpop.f32.mrb[0].mxu0
        %v2149 = vadd.f32 0.0, %v2148
        %v2150 = vpop.f32.mrb[0].mxu0
        %2151 = vmatprep.mubr.bf16.mxu0 0
        %2152 = vmatmul.mubr.bf16.gmra.mrb[0].mxu0 %v2051
        %v2153 = vpop.f32.mrb[0].mxu0
        %v2154 = vadd.f32 0.0, %v2153
        %v2155 = vpop.f32.mrb[0].mxu0
        %v2156 = vpop.f32.mrb[0].mxu0
        %v2157 = vadd.f32 0.0, %v2156
        %v2158 = vpop.f32.mrb[0].mxu0
        %2159 = vmatprep.mubr.bf16.mxu0 0
        %2160 = vmatmul.mubr.bf16.gmra.mrb[0].mxu0 %v2059
        %v2161 = vpop.f32.mrb[0].mxu0
        %v2162 = vadd.f32 0.0, %v2161
        %v2163 = vpop.f32.mrb[0].mxu0
        %v2164 = vpop.f32.mrb[0].mxu0
        %v2165 = vadd.f32 0.0, %v2164
        %v2166 = vpop.f32.mrb[0].mxu0
        %2167 = vdwg.mxu0
        %v2168 = vadd.f32 %v1984, %v2146
        %v2169 = vadd.f32 %v1985, %v2149
        %v2170 = vadd.f32 %v1986, %v2154
        %v2171 = vadd.f32 %v1987, %v2157
        %v2172 = vadd.f32 %v1988, %v2162
        %v2173 = vadd.f32 %v1989, %v2165
        %2174 = vst [vmem:[#allocation3] sm:$0xff] %v2168
        %2175 = vst [vmem:[#allocation3 + $0x8] sm:$0xff] %v2169
        %2176 = vst [vmem:[#allocation3 + $0x10] sm:$0xff] %v2170
        %2177 = vst [vmem:[#allocation3 + $0x18] sm:$0xff] %v2171
        %2178 = vst [vmem:[#allocation3 + $0x20] sm:$0xff] %v2172
        %2179 = vst [vmem:[#allocation3 + $0x28] sm:$0xff] %v2173
        %v2180 = vld [vmem:[#allocation3] sm:$0xff]
        %v2181 = vld [vmem:[#allocation3 + $0x8] sm:$0xff]
        %v2182 = vld [vmem:[#allocation3 + $0x10] sm:$0xff]
        %v2183 = vld [vmem:[#allocation3 + $0x18] sm:$0xff]
        %v2184 = vld [vmem:[#allocation3 + $0x20] sm:$0xff]
        %v2185 = vld [vmem:[#allocation3 + $0x28] sm:$0xff]
        %v2186 = vld [vmem:[#allocation2 + $0x4] sm:$0xe]
        %v2187 = vld [vmem:[#allocation2 + $0x8] sm:$0xf]
        %v2188 = vld [vmem:[#allocation2 + $0xc] sm:$0xf]
        %v2189 = vld [vmem:[#allocation2 + $0x10] sm:$0xf]
        %v2190 = vld [vmem:[#allocation2 + $0x14] sm:$0xf]
        %v2191 = vld [vmem:[#allocation2 + $0x18] sm:$0xf]
        %v2192 = vld [vmem:[#allocation2 + $0x1c] sm:$0x1]
        %s2193 = scalar_lea.vmem [#allocation9], 640
        %v2194 = vld [vmem:[%s2193] sm:$0xf]
        %v2195 = vld [vmem:[%s2193 + $0x4] sm:$0xf]
        %v2196 = vld [vmem:[%s2193 + $0x8] sm:$0xf]
        %v2197 = vld [vmem:[%s2193 + $0xc] sm:$0xf]
        %v2198 = vld [vmem:[%s2193 + $0x10] sm:$0xf]
        %v2199 = vld [vmem:[%s2193 + $0x14] sm:$0xf]
        %v2200 = vld [vmem:[%s2193 + $0x18] sm:$0xf]
        %v2201 = vld [vmem:[%s2193 + $0x1c] sm:$0xf]
        %v2202 = vld [vmem:[%s2193 + $0x20] sm:$0xf]
        %v2203 = vld [vmem:[%s2193 + $0x24] sm:$0xf]
        %v2204 = vld [vmem:[%s2193 + $0x28] sm:$0xf]
        %v2205 = vld [vmem:[%s2193 + $0x2c] sm:$0xf]
        %v2206 = vld [vmem:[%s2193 + $0x30] sm:$0xf]
        %v2207 = vld [vmem:[%s2193 + $0x34] sm:$0xf]
        %v2208 = vld [vmem:[%s2193 + $0x38] sm:$0xf]
        %v2209 = vld [vmem:[%s2193 + $0x3c] sm:$0xf]
        %v2217 = vunpack.c.l.b16 %v2186
        %v2218 = vunpack.c.l.b16 %v2187
        %v2219 = vunpack.c.l.b16 %v2188
        %v2220 = vunpack.c.l.b16 %v2189
        %v2221 = vunpack.c.l.b16 %v2190
        %v2222 = vunpack.c.l.b16 %v2191
        %v2223 = vunpack.c.l.b16 %v2192
        %v2224 = vpack.c.b16 %v2218, %v2217
        %v2225 = vpack.c.b16 %v2220, %v2219
        %v2226 = vpack.c.b16 %v2222, %v2221
        %v2227 = vpack.c.b16 %v2223, %v2223
        %v2228 = vrot.slane %v2224, 1
        %v2229 = vrot.slane %v2225, 1
        %v2230 = vsel %vm728, %v2228, %v2229
        %v2231 = vrot.slane %v2226, 1
        %v2232 = vsel %vm728, %v2229, %v2231
        %v2233 = vrot.slane %v2227, 1
        %v2234 = vsel %vm728, %v2231, %v2233
        %v2254 = vunpack.c.l.b16 %v2194
        %v2255 = vunpack.c.l.b16 %v2195
        %v2256 = vunpack.c.l.b16 %v2196
        %v2257 = vunpack.c.l.b16 %v2197
        %v2258 = vunpack.c.l.b16 %v2198
        %v2259 = vunpack.c.l.b16 %v2199
        %v2260 = vunpack.c.l.b16 %v2200
        %v2261 = vunpack.c.l.b16 %v2201
        %v2262 = vunpack.c.l.b16 %v2202
        %v2263 = vunpack.c.l.b16 %v2203
        %v2264 = vunpack.c.l.b16 %v2204
        %v2265 = vunpack.c.l.b16 %v2205
        %v2266 = vunpack.c.l.b16 %v2206
        %v2267 = vunpack.c.l.b16 %v2207
        %v2268 = vunpack.c.l.b16 %v2208
        %v2269 = vunpack.c.l.b16 %v2209
        %v2270 = vpack.c.b16 %v2255, %v2254
        %v2271 = vpack.c.b16 %v2257, %v2256
        %v2272 = vpack.c.b16 %v2259, %v2258
        %v2273 = vpack.c.b16 %v2261, %v2260
        %v2274 = vpack.c.b16 %v2263, %v2262
        %v2275 = vpack.c.b16 %v2265, %v2264
        %v2276 = vpack.c.b16 %v2267, %v2266
        %v2277 = vpack.c.b16 %v2269, %v2268
        %2286 = vmatprep.subr.bf16.mxu0 0
        %2287 = vmatpush1.bf16.msra.mxu0 %v2270
        %2288 = vmatprep.subr.bf16.mxu0 0
        %2289 = vmatpush1.bf16.msra.mxu0 %v2271
        %2290 = vmatprep.subr.bf16.mxu0 0
        %2291 = vmatpush1.bf16.msra.mxu0 %v2272
        %2292 = vmatprep.subr.bf16.mxu0 0
        %2293 = vmatpush1.bf16.msra.mxu0 %v2273
        %2294 = vmatprep.subr.bf16.mxu0 0
        %2295 = vmatpush1.bf16.msra.mxu0 %v2274
        %2296 = vmatprep.subr.bf16.mxu0 0
        %2297 = vmatpush1.bf16.msra.mxu0 %v2275
        %2298 = vmatprep.subr.bf16.mxu0 0
        %2299 = vmatpush1.bf16.msra.mxu0 %v2276
        %2300 = vmatprep.subr.bf16.mxu0 0
        %2301 = vmatpush1.bf16.msra.mxu0 %v2277
        %2302 = vmatprep.subr.bf16.mxu0 0
        %2303 = vmatpush1.bf16.msra.mxu0 0
        %2304 = vmatprep.subr.bf16.mxu0 0
        %2305 = vmatpush1.bf16.msra.mxu0 0
        %2306 = vmatprep.subr.bf16.mxu0 0
        %2307 = vmatpush1.bf16.msra.mxu0 0
        %2308 = vmatprep.subr.bf16.mxu0 0
        %2309 = vmatpush1.bf16.msra.mxu0 0
        %2310 = vmatprep.subr.bf16.mxu0 0
        %2311 = vmatpush1.bf16.msra.mxu0 0
        %2312 = vmatprep.subr.bf16.mxu0 0
        %2313 = vmatpush1.bf16.msra.mxu0 0
        %2314 = vmatprep.subr.bf16.mxu0 0
        %2315 = vmatpush1.bf16.msra.mxu0 0
        %2316 = vmatprep.subr.bf16.mxu0 0
        %2317 = vmatpush1.bf16.msra.mxu0 0
        %2318 = vmatprep.mubr.bf16.mxu0 0
        %2319 = vmatmul.mubr.bf16.gmra.mrb[0].mxu0 %v2230
        %v2320 = vpop.f32.mrb[0].mxu0
        %v2321 = vadd.f32 0.0, %v2320
        %v2322 = vpop.f32.mrb[0].mxu0
        %v2323 = vpop.f32.mrb[0].mxu0
        %v2324 = vadd.f32 0.0, %v2323
        %v2325 = vpop.f32.mrb[0].mxu0
        %2326 = vmatprep.mubr.bf16.mxu0 0
        %2327 = vmatmul.mubr.bf16.gmra.mrb[0].mxu0 %v2232
        %v2328 = vpop.f32.mrb[0].mxu0
        %v2329 = vadd.f32 0.0, %v2328
        %v2330 = vpop.f32.mrb[0].mxu0
        %v2331 = vpop.f32.mrb[0].mxu0
        %v2332 = vadd.f32 0.0, %v2331
        %v2333 = vpop.f32.mrb[0].mxu0
        %2334 = vmatprep.mubr.bf16.mxu0 0
        %2335 = vmatmul.mubr.bf16.gmra.mrb[0].mxu0 %v2234
        %v2336 = vpop.f32.mrb[0].mxu0
        %v2337 = vadd.f32 0.0, %v2336
        %v2338 = vpop.f32.mrb[0].mxu0
        %v2339 = vpop.f32.mrb[0].mxu0
        %v2340 = vadd.f32 0.0, %v2339
        %v2341 = vpop.f32.mrb[0].mxu0
        %2342 = vdwg.mxu0
        %v2343 = vadd.f32 %v2180, %v2321
        %v2344 = vadd.f32 %v2181, %v2324
        %v2345 = vadd.f32 %v2182, %v2329
        %v2346 = vadd.f32 %v2183, %v2332
        %v2347 = vadd.f32 %v2184, %v2337
        %v2348 = vadd.f32 %v2185, %v2340
        %2349 = vst [vmem:[#allocation3] sm:$0xff] %v2343
        %2350 = vst [vmem:[#allocation3 + $0x8] sm:$0xff] %v2344
        %2351 = vst [vmem:[#allocation3 + $0x10] sm:$0xff] %v2345
        %2352 = vst [vmem:[#allocation3 + $0x18] sm:$0xff] %v2346
        %2353 = vst [vmem:[#allocation3 + $0x20] sm:$0xff] %v2347
        %2354 = vst [vmem:[#allocation3 + $0x28] sm:$0xff] %v2348
        %v2355 = vld [vmem:[#allocation3] sm:$0xff]
        %v2356 = vld [vmem:[#allocation3 + $0x8] sm:$0xff]
        %v2357 = vld [vmem:[#allocation3 + $0x10] sm:$0xff]
        %v2358 = vld [vmem:[#allocation3 + $0x18] sm:$0xff]
        %v2359 = vld [vmem:[#allocation3 + $0x20] sm:$0xff]
        %v2360 = vld [vmem:[#allocation3 + $0x28] sm:$0xff]
        %v2361 = vld [vmem:[#allocation2 + $0x4] sm:$0xe]
        %v2362 = vld [vmem:[#allocation2 + $0x8] sm:$0xf]
        %v2363 = vld [vmem:[#allocation2 + $0xc] sm:$0xf]
        %v2364 = vld [vmem:[#allocation2 + $0x10] sm:$0xf]
        %v2365 = vld [vmem:[#allocation2 + $0x14] sm:$0xf]
        %v2366 = vld [vmem:[#allocation2 + $0x18] sm:$0xf]
        %v2367 = vld [vmem:[#allocation2 + $0x1c] sm:$0x3]
        %s2368 = scalar_lea.vmem [#allocation9], 704
        %v2369 = vld [vmem:[%s2368] sm:$0xf]
        %v2370 = vld [vmem:[%s2368 + $0x4] sm:$0xf]
        %v2371 = vld [vmem:[%s2368 + $0x8] sm:$0xf]
        %v2372 = vld [vmem:[%s2368 + $0xc] sm:$0xf]
        %v2373 = vld [vmem:[%s2368 + $0x10] sm:$0xf]
        %v2374 = vld [vmem:[%s2368 + $0x14] sm:$0xf]
        %v2375 = vld [vmem:[%s2368 + $0x18] sm:$0xf]
        %v2376 = vld [vmem:[%s2368 + $0x1c] sm:$0xf]
        %v2377 = vld [vmem:[%s2368 + $0x20] sm:$0xf]
        %v2378 = vld [vmem:[%s2368 + $0x24] sm:$0xf]
        %v2379 = vld [vmem:[%s2368 + $0x28] sm:$0xf]
        %v2380 = vld [vmem:[%s2368 + $0x2c] sm:$0xf]
        %v2381 = vld [vmem:[%s2368 + $0x30] sm:$0xf]
        %v2382 = vld [vmem:[%s2368 + $0x34] sm:$0xf]
        %v2383 = vld [vmem:[%s2368 + $0x38] sm:$0xf]
        %v2384 = vld [vmem:[%s2368 + $0x3c] sm:$0xf]
        %v2392 = vunpack.c.l.b16 %v2361
        %v2393 = vunpack.c.l.b16 %v2362
        %v2394 = vunpack.c.l.b16 %v2363
        %v2395 = vunpack.c.l.b16 %v2364
        %v2396 = vunpack.c.l.b16 %v2365
        %v2397 = vunpack.c.l.b16 %v2366
        %v2398 = vunpack.c.l.b16 %v2367
        %v2399 = vpack.c.b16 %v2393, %v2392
        %v2400 = vpack.c.b16 %v2395, %v2394
        %v2401 = vpack.c.b16 %v2397, %v2396
        %v2402 = vpack.c.b16 %v2398, %v2398
        %v2404 = vshrl.u32 %v2399, 16
        %v2406 = vrot.slane %v2404, 1
        %v2407 = vshll.u32 %v2399, 16
        %v2409 = vrot.slane %v2407, 2
        %v2410 = vor.u32 %v2406, %v2409
        %v2412 = vshrl.u32 %v2400, 16
        %v2414 = vrot.slane %v2412, 1
        %v2415 = vshll.u32 %v2400, 16
        %v2417 = vrot.slane %v2415, 2
        %v2418 = vor.u32 %v2414, %v2417
        %v2419 = vsel %vm904, %v2410, %v2418
        %v2421 = vshrl.u32 %v2401, 16
        %v2423 = vrot.slane %v2421, 1
        %v2424 = vshll.u32 %v2401, 16
        %v2426 = vrot.slane %v2424, 2
        %v2427 = vor.u32 %v2423, %v2426
        %v2428 = vsel %vm904, %v2418, %v2427
        %v2430 = vshrl.u32 %v2402, 16
        %v2432 = vrot.slane %v2430, 1
        %v2433 = vshll.u32 %v2402, 16
        %v2435 = vrot.slane %v2433, 2
        %v2436 = vor.u32 %v2432, %v2435
        %v2437 = vsel %vm904, %v2427, %v2436
        %v2457 = vunpack.c.l.b16 %v2369
        %v2458 = vunpack.c.l.b16 %v2370
        %v2459 = vunpack.c.l.b16 %v2371
        %v2460 = vunpack.c.l.b16 %v2372
        %v2461 = vunpack.c.l.b16 %v2373
        %v2462 = vunpack.c.l.b16 %v2374
        %v2463 = vunpack.c.l.b16 %v2375
        %v2464 = vunpack.c.l.b16 %v2376
        %v2465 = vunpack.c.l.b16 %v2377
        %v2466 = vunpack.c.l.b16 %v2378
        %v2467 = vunpack.c.l.b16 %v2379
        %v2468 = vunpack.c.l.b16 %v2380
        %v2469 = vunpack.c.l.b16 %v2381
        %v2470 = vunpack.c.l.b16 %v2382
        %v2471 = vunpack.c.l.b16 %v2383
        %v2472 = vunpack.c.l.b16 %v2384
        %v2473 = vpack.c.b16 %v2458, %v2457
        %v2474 = vpack.c.b16 %v2460, %v2459
        %v2475 = vpack.c.b16 %v2462, %v2461
        %v2476 = vpack.c.b16 %v2464, %v2463
        %v2477 = vpack.c.b16 %v2466, %v2465
        %v2478 = vpack.c.b16 %v2468, %v2467
        %v2479 = vpack.c.b16 %v2470, %v2469
        %v2480 = vpack.c.b16 %v2472, %v2471
        %2489 = vmatprep.subr.bf16.mxu0 0
        %2490 = vmatpush1.bf16.msra.mxu0 %v2473
        %2491 = vmatprep.subr.bf16.mxu0 0
        %2492 = vmatpush1.bf16.msra.mxu0 %v2474
        %2493 = vmatprep.subr.bf16.mxu0 0
        %2494 = vmatpush1.bf16.msra.mxu0 %v2475
        %2495 = vmatprep.subr.bf16.mxu0 0
        %2496 = vmatpush1.bf16.msra.mxu0 %v2476
        %2497 = vmatprep.subr.bf16.mxu0 0
        %2498 = vmatpush1.bf16.msra.mxu0 %v2477
        %2499 = vmatprep.subr.bf16.mxu0 0
        %2500 = vmatpush1.bf16.msra.mxu0 %v2478
        %2501 = vmatprep.subr.bf16.mxu0 0
        %2502 = vmatpush1.bf16.msra.mxu0 %v2479
        %2503 = vmatprep.subr.bf16.mxu0 0
        %2504 = vmatpush1.bf16.msra.mxu0 %v2480
        %2505 = vmatprep.subr.bf16.mxu0 0
        %2506 = vmatpush1.bf16.msra.mxu0 0
        %2507 = vmatprep.subr.bf16.mxu0 0
        %2508 = vmatpush1.bf16.msra.mxu0 0
        %2509 = vmatprep.subr.bf16.mxu0 0
        %2510 = vmatpush1.bf16.msra.mxu0 0
        %2511 = vmatprep.subr.bf16.mxu0 0
        %2512 = vmatpush1.bf16.msra.mxu0 0
        %2513 = vmatprep.subr.bf16.mxu0 0
        %2514 = vmatpush1.bf16.msra.mxu0 0
        %2515 = vmatprep.subr.bf16.mxu0 0
        %2516 = vmatpush1.bf16.msra.mxu0 0
        %2517 = vmatprep.subr.bf16.mxu0 0
        %2518 = vmatpush1.bf16.msra.mxu0 0
        %2519 = vmatprep.subr.bf16.mxu0 0
        %2520 = vmatpush1.bf16.msra.mxu0 0
        %2521 = vmatprep.mubr.bf16.mxu0 0
        %2522 = vmatmul.mubr.bf16.gmra.mrb[0].mxu0 %v2419
        %v2523 = vpop.f32.mrb[0].mxu0
        %v2524 = vadd.f32 0.0, %v2523
        %v2525 = vpop.f32.mrb[0].mxu0
        %v2526 = vpop.f32.mrb[0].mxu0
        %v2527 = vadd.f32 0.0, %v2526
        %v2528 = vpop.f32.mrb[0].mxu0
        %2529 = vmatprep.mubr.bf16.mxu0 0
        %2530 = vmatmul.mubr.bf16.gmra.mrb[0].mxu0 %v2428
        %v2531 = vpop.f32.mrb[0].mxu0
        %v2532 = vadd.f32 0.0, %v2531
        %v2533 = vpop.f32.mrb[0].mxu0
        %v2534 = vpop.f32.mrb[0].mxu0
        %v2535 = vadd.f32 0.0, %v2534
        %v2536 = vpop.f32.mrb[0].mxu0
        %2537 = vmatprep.mubr.bf16.mxu0 0
        %2538 = vmatmul.mubr.bf16.gmra.mrb[0].mxu0 %v2437
        %v2539 = vpop.f32.mrb[0].mxu0
        %v2540 = vadd.f32 0.0, %v2539
        %v2541 = vpop.f32.mrb[0].mxu0
        %v2542 = vpop.f32.mrb[0].mxu0
        %v2543 = vadd.f32 0.0, %v2542
        %v2544 = vpop.f32.mrb[0].mxu0
        %2545 = vdwg.mxu0
        %v2546 = vadd.f32 %v2355, %v2524
        %v2547 = vadd.f32 %v2356, %v2527
        %v2548 = vadd.f32 %v2357, %v2532
        %v2549 = vadd.f32 %v2358, %v2535
        %v2550 = vadd.f32 %v2359, %v2540
        %v2551 = vadd.f32 %v2360, %v2543
        %2552 = vst [vmem:[#allocation3] sm:$0xff] %v2546
        %2553 = vst [vmem:[#allocation3 + $0x8] sm:$0xff] %v2547
        %2554 = vst [vmem:[#allocation3 + $0x10] sm:$0xff] %v2548
        %2555 = vst [vmem:[#allocation3 + $0x18] sm:$0xff] %v2549
        %2556 = vst [vmem:[#allocation3 + $0x20] sm:$0xff] %v2550
        %2557 = vst [vmem:[#allocation3 + $0x28] sm:$0xff] %v2551
        %v2558 = vld [vmem:[#allocation3] sm:$0xff]
        %v2559 = vld [vmem:[#allocation3 + $0x8] sm:$0xff]
        %v2560 = vld [vmem:[#allocation3 + $0x10] sm:$0xff]
        %v2561 = vld [vmem:[#allocation3 + $0x18] sm:$0xff]
        %v2562 = vld [vmem:[#allocation3 + $0x20] sm:$0xff]
        %v2563 = vld [vmem:[#allocation3 + $0x28] sm:$0xff]
        %v2564 = vld [vmem:[#allocation2 + $0x4] sm:$0xc]
        %v2565 = vld [vmem:[#allocation2 + $0x8] sm:$0xf]
        %v2566 = vld [vmem:[#allocation2 + $0xc] sm:$0xf]
        %v2567 = vld [vmem:[#allocation2 + $0x10] sm:$0xf]
        %v2568 = vld [vmem:[#allocation2 + $0x14] sm:$0xf]
        %v2569 = vld [vmem:[#allocation2 + $0x18] sm:$0xf]
        %v2570 = vld [vmem:[#allocation2 + $0x1c] sm:$0x3]
        %s2571 = scalar_lea.vmem [#allocation9], 768
        %v2572 = vld [vmem:[%s2571] sm:$0xf]
        %v2573 = vld [vmem:[%s2571 + $0x4] sm:$0xf]
        %v2574 = vld [vmem:[%s2571 + $0x8] sm:$0xf]
        %v2575 = vld [vmem:[%s2571 + $0xc] sm:$0xf]
        %v2576 = vld [vmem:[%s2571 + $0x10] sm:$0xf]
        %v2577 = vld [vmem:[%s2571 + $0x14] sm:$0xf]
        %v2578 = vld [vmem:[%s2571 + $0x18] sm:$0xf]
        %v2579 = vld [vmem:[%s2571 + $0x1c] sm:$0xf]
        %v2580 = vld [vmem:[%s2571 + $0x20] sm:$0xf]
        %v2581 = vld [vmem:[%s2571 + $0x24] sm:$0xf]
        %v2582 = vld [vmem:[%s2571 + $0x28] sm:$0xf]
        %v2583 = vld [vmem:[%s2571 + $0x2c] sm:$0xf]
        %v2584 = vld [vmem:[%s2571 + $0x30] sm:$0xf]
        %v2585 = vld [vmem:[%s2571 + $0x34] sm:$0xf]
        %v2586 = vld [vmem:[%s2571 + $0x38] sm:$0xf]
        %v2587 = vld [vmem:[%s2571 + $0x3c] sm:$0xf]
        %v2595 = vunpack.c.l.b16 %v2564
        %v2596 = vunpack.c.l.b16 %v2565
        %v2597 = vunpack.c.l.b16 %v2566
        %v2598 = vunpack.c.l.b16 %v2567
        %v2599 = vunpack.c.l.b16 %v2568
        %v2600 = vunpack.c.l.b16 %v2569
        %v2601 = vunpack.c.l.b16 %v2570
        %v2602 = vpack.c.b16 %v2596, %v2595
        %v2603 = vpack.c.b16 %v2598, %v2597
        %v2604 = vpack.c.b16 %v2600, %v2599
        %v2605 = vpack.c.b16 %v2601, %v2601
        %v2606 = vrot.slane %v2602, 2
        %v2607 = vrot.slane %v2603, 2
        %v2608 = vsel %vm1108, %v2606, %v2607
        %v2609 = vrot.slane %v2604, 2
        %v2610 = vsel %vm1108, %v2607, %v2609
        %v2611 = vrot.slane %v2605, 2
        %v2612 = vsel %vm1108, %v2609, %v2611
        %v2632 = vunpack.c.l.b16 %v2572
        %v2633 = vunpack.c.l.b16 %v2573
        %v2634 = vunpack.c.l.b16 %v2574
        %v2635 = vunpack.c.l.b16 %v2575
        %v2636 = vunpack.c.l.b16 %v2576
        %v2637 = vunpack.c.l.b16 %v2577
        %v2638 = vunpack.c.l.b16 %v2578
        %v2639 = vunpack.c.l.b16 %v2579
        %v2640 = vunpack.c.l.b16 %v2580
        %v2641 = vunpack.c.l.b16 %v2581
        %v2642 = vunpack.c.l.b16 %v2582
        %v2643 = vunpack.c.l.b16 %v2583
        %v2644 = vunpack.c.l.b16 %v2584
        %v2645 = vunpack.c.l.b16 %v2585
        %v2646 = vunpack.c.l.b16 %v2586
        %v2647 = vunpack.c.l.b16 %v2587
        %v2648 = vpack.c.b16 %v2633, %v2632
        %v2649 = vpack.c.b16 %v2635, %v2634
        %v2650 = vpack.c.b16 %v2637, %v2636
        %v2651 = vpack.c.b16 %v2639, %v2638
        %v2652 = vpack.c.b16 %v2641, %v2640
        %v2653 = vpack.c.b16 %v2643, %v2642
        %v2654 = vpack.c.b16 %v2645, %v2644
        %v2655 = vpack.c.b16 %v2647, %v2646
        %2664 = vmatprep.subr.bf16.mxu0 0
        %2665 = vmatpush1.bf16.msra.mxu0 %v2648
        %2666 = vmatprep.subr.bf16.mxu0 0
        %2667 = vmatpush1.bf16.msra.mxu0 %v2649
        %2668 = vmatprep.subr.bf16.mxu0 0
        %2669 = vmatpush1.bf16.msra.mxu0 %v2650
        %2670 = vmatprep.subr.bf16.mxu0 0
        %2671 = vmatpush1.bf16.msra.mxu0 %v2651
        %2672 = vmatprep.subr.bf16.mxu0 0
        %2673 = vmatpush1.bf16.msra.mxu0 %v2652
        %2674 = vmatprep.subr.bf16.mxu0 0
        %2675 = vmatpush1.bf16.msra.mxu0 %v2653
        %2676 = vmatprep.subr.bf16.mxu0 0
        %2677 = vmatpush1.bf16.msra.mxu0 %v2654
        %2678 = vmatprep.subr.bf16.mxu0 0
        %2679 = vmatpush1.bf16.msra.mxu0 %v2655
        %2680 = vmatprep.subr.bf16.mxu0 0
        %2681 = vmatpush1.bf16.msra.mxu0 0
        %2682 = vmatprep.subr.bf16.mxu0 0
        %2683 = vmatpush1.bf16.msra.mxu0 0
        %2684 = vmatprep.subr.bf16.mxu0 0
        %2685 = vmatpush1.bf16.msra.mxu0 0
        %2686 = vmatprep.subr.bf16.mxu0 0
        %2687 = vmatpush1.bf16.msra.mxu0 0
        %2688 = vmatprep.subr.bf16.mxu0 0
        %2689 = vmatpush1.bf16.msra.mxu0 0
        %2690 = vmatprep.subr.bf16.mxu0 0
        %2691 = vmatpush1.bf16.msra.mxu0 0
        %2692 = vmatprep.subr.bf16.mxu0 0
        %2693 = vmatpush1.bf16.msra.mxu0 0
        %2694 = vmatprep.subr.bf16.mxu0 0
        %2695 = vmatpush1.bf16.msra.mxu0 0
        %2696 = vmatprep.mubr.bf16.mxu0 0
        %2697 = vmatmul.mubr.bf16.gmra.mrb[0].mxu0 %v2608
        %v2698 = vpop.f32.mrb[0].mxu0
        %v2699 = vadd.f32 0.0, %v2698
        %v2700 = vpop.f32.mrb[0].mxu0
        %v2701 = vpop.f32.mrb[0].mxu0
        %v2702 = vadd.f32 0.0, %v2701
        %v2703 = vpop.f32.mrb[0].mxu0
        %2704 = vmatprep.mubr.bf16.mxu0 0
        %2705 = vmatmul.mubr.bf16.gmra.mrb[0].mxu0 %v2610
        %v2706 = vpop.f32.mrb[0].mxu0
        %v2707 = vadd.f32 0.0, %v2706
        %v2708 = vpop.f32.mrb[0].mxu0
        %v2709 = vpop.f32.mrb[0].mxu0
        %v2710 = vadd.f32 0.0, %v2709
        %v2711 = vpop.f32.mrb[0].mxu0
        %2712 = vmatprep.mubr.bf16.mxu0 0
        %2713 = vmatmul.mubr.bf16.gmra.mrb[0].mxu0 %v2612
        %v2714 = vpop.f32.mrb[0].mxu0
        %v2715 = vadd.f32 0.0, %v2714
        %v2716 = vpop.f32.mrb[0].mxu0
        %v2717 = vpop.f32.mrb[0].mxu0
        %v2718 = vadd.f32 0.0, %v2717
        %v2719 = vpop.f32.mrb[0].mxu0
        %2720 = vdwg.mxu0
        %v2721 = vadd.f32 %v2558, %v2699
        %v2722 = vadd.f32 %v2559, %v2702
        %v2723 = vadd.f32 %v2560, %v2707
        %v2724 = vadd.f32 %v2561, %v2710
        %v2725 = vadd.f32 %v2562, %v2715
        %v2726 = vadd.f32 %v2563, %v2718
        %2727 = vst [vmem:[#allocation3] sm:$0xff] %v2721
        %2728 = vst [vmem:[#allocation3 + $0x8] sm:$0xff] %v2722
        %2729 = vst [vmem:[#allocation3 + $0x10] sm:$0xff] %v2723
        %2730 = vst [vmem:[#allocation3 + $0x18] sm:$0xff] %v2724
        %2731 = vst [vmem:[#allocation3 + $0x20] sm:$0xff] %v2725
        %2732 = vst [vmem:[#allocation3 + $0x28] sm:$0xff] %v2726
        %v2733 = vld [vmem:[#allocation3] sm:$0xff]
        %v2734 = vld [vmem:[#allocation3 + $0x8] sm:$0xff]
        %v2735 = vld [vmem:[#allocation3 + $0x10] sm:$0xff]
        %v2736 = vld [vmem:[#allocation3 + $0x18] sm:$0xff]
        %v2737 = vld [vmem:[#allocation3 + $0x20] sm:$0xff]
        %v2738 = vld [vmem:[#allocation3 + $0x28] sm:$0xff]
        %v2739 = vld [vmem:[#allocation2 + $0x4] sm:$0xc]
        %v2740 = vld [vmem:[#allocation2 + $0x8] sm:$0xf]
        %v2741 = vld [vmem:[#allocation2 + $0xc] sm:$0xf]
        %v2742 = vld [vmem:[#allocation2 + $0x10] sm:$0xf]
        %v2743 = vld [vmem:[#allocation2 + $0x14] sm:$0xf]
        %v2744 = vld [vmem:[#allocation2 + $0x18] sm:$0xf]
        %v2745 = vld [vmem:[#allocation2 + $0x1c] sm:$0x7]
        %s2746 = scalar_lea.vmem [#allocation9], 832
        %v2747 = vld [vmem:[%s2746] sm:$0xf]
        %v2748 = vld [vmem:[%s2746 + $0x4] sm:$0xf]
        %v2749 = vld [vmem:[%s2746 + $0x8] sm:$0xf]
        %v2750 = vld [vmem:[%s2746 + $0xc] sm:$0xf]
        %v2751 = vld [vmem:[%s2746 + $0x10] sm:$0xf]
        %v2752 = vld [vmem:[%s2746 + $0x14] sm:$0xf]
        %v2753 = vld [vmem:[%s2746 + $0x18] sm:$0xf]
        %v2754 = vld [vmem:[%s2746 + $0x1c] sm:$0xf]
        %v2755 = vld [vmem:[%s2746 + $0x20] sm:$0xf]
        %v2756 = vld [vmem:[%s2746 + $0x24] sm:$0xf]
        %v2757 = vld [vmem:[%s2746 + $0x28] sm:$0xf]
        %v2758 = vld [vmem:[%s2746 + $0x2c] sm:$0xf]
        %v2759 = vld [vmem:[%s2746 + $0x30] sm:$0xf]
        %v2760 = vld [vmem:[%s2746 + $0x34] sm:$0xf]
        %v2761 = vld [vmem:[%s2746 + $0x38] sm:$0xf]
        %v2762 = vld [vmem:[%s2746 + $0x3c] sm:$0xf]
        %v2770 = vunpack.c.l.b16 %v2739
        %v2771 = vunpack.c.l.b16 %v2740
        %v2772 = vunpack.c.l.b16 %v2741
        %v2773 = vunpack.c.l.b16 %v2742
        %v2774 = vunpack.c.l.b16 %v2743
        %v2775 = vunpack.c.l.b16 %v2744
        %v2776 = vunpack.c.l.b16 %v2745
        %v2777 = vpack.c.b16 %v2771, %v2770
        %v2778 = vpack.c.b16 %v2773, %v2772
        %v2779 = vpack.c.b16 %v2775, %v2774
        %v2780 = vpack.c.b16 %v2776, %v2776
        %v2782 = vshrl.u32 %v2777, 16
        %v2784 = vrot.slane %v2782, 2
        %v2785 = vshll.u32 %v2777, 16
        %v2787 = vrot.slane %v2785, 3
        %v2788 = vor.u32 %v2784, %v2787
        %v2790 = vshrl.u32 %v2778, 16
        %v2792 = vrot.slane %v2790, 2
        %v2793 = vshll.u32 %v2778, 16
        %v2795 = vrot.slane %v2793, 3
        %v2796 = vor.u32 %v2792, %v2795
        %v2797 = vsel %vm1284, %v2788, %v2796
        %v2799 = vshrl.u32 %v2779, 16
        %v2801 = vrot.slane %v2799, 2
        %v2802 = vshll.u32 %v2779, 16
        %v2804 = vrot.slane %v2802, 3
        %v2805 = vor.u32 %v2801, %v2804
        %v2806 = vsel %vm1284, %v2796, %v2805
        %v2808 = vshrl.u32 %v2780, 16
        %v2810 = vrot.slane %v2808, 2
        %v2811 = vshll.u32 %v2780, 16
        %v2813 = vrot.slane %v2811, 3
        %v2814 = vor.u32 %v2810, %v2813
        %v2815 = vsel %vm1284, %v2805, %v2814
        %v2835 = vunpack.c.l.b16 %v2747
        %v2836 = vunpack.c.l.b16 %v2748
        %v2837 = vunpack.c.l.b16 %v2749
        %v2838 = vunpack.c.l.b16 %v2750
        %v2839 = vunpack.c.l.b16 %v2751
        %v2840 = vunpack.c.l.b16 %v2752
        %v2841 = vunpack.c.l.b16 %v2753
        %v2842 = vunpack.c.l.b16 %v2754
        %v2843 = vunpack.c.l.b16 %v2755
        %v2844 = vunpack.c.l.b16 %v2756
        %v2845 = vunpack.c.l.b16 %v2757
        %v2846 = vunpack.c.l.b16 %v2758
        %v2847 = vunpack.c.l.b16 %v2759
        %v2848 = vunpack.c.l.b16 %v2760
        %v2849 = vunpack.c.l.b16 %v2761
        %v2850 = vunpack.c.l.b16 %v2762
        %v2851 = vpack.c.b16 %v2836, %v2835
        %v2852 = vpack.c.b16 %v2838, %v2837
        %v2853 = vpack.c.b16 %v2840, %v2839
        %v2854 = vpack.c.b16 %v2842, %v2841
        %v2855 = vpack.c.b16 %v2844, %v2843
        %v2856 = vpack.c.b16 %v2846, %v2845
        %v2857 = vpack.c.b16 %v2848, %v2847
        %v2858 = vpack.c.b16 %v2850, %v2849
        %2867 = vmatprep.subr.bf16.mxu0 0
        %2868 = vmatpush1.bf16.msra.mxu0 %v2851
        %2869 = vmatprep.subr.bf16.mxu0 0
        %2870 = vmatpush1.bf16.msra.mxu0 %v2852
        %2871 = vmatprep.subr.bf16.mxu0 0
        %2872 = vmatpush1.bf16.msra.mxu0 %v2853
        %2873 = vmatprep.subr.bf16.mxu0 0
        %2874 = vmatpush1.bf16.msra.mxu0 %v2854
        %2875 = vmatprep.subr.bf16.mxu0 0
        %2876 = vmatpush1.bf16.msra.mxu0 %v2855
        %2877 = vmatprep.subr.bf16.mxu0 0
        %2878 = vmatpush1.bf16.msra.mxu0 %v2856
        %2879 = vmatprep.subr.bf16.mxu0 0
        %2880 = vmatpush1.bf16.msra.mxu0 %v2857
        %2881 = vmatprep.subr.bf16.mxu0 0
        %2882 = vmatpush1.bf16.msra.mxu0 %v2858
        %2883 = vmatprep.subr.bf16.mxu0 0
        %2884 = vmatpush1.bf16.msra.mxu0 0
        %2885 = vmatprep.subr.bf16.mxu0 0
        %2886 = vmatpush1.bf16.msra.mxu0 0
        %2887 = vmatprep.subr.bf16.mxu0 0
        %2888 = vmatpush1.bf16.msra.mxu0 0
        %2889 = vmatprep.subr.bf16.mxu0 0
        %2890 = vmatpush1.bf16.msra.mxu0 0
        %2891 = vmatprep.subr.bf16.mxu0 0
        %2892 = vmatpush1.bf16.msra.mxu0 0
        %2893 = vmatprep.subr.bf16.mxu0 0
        %2894 = vmatpush1.bf16.msra.mxu0 0
        %2895 = vmatprep.subr.bf16.mxu0 0
        %2896 = vmatpush1.bf16.msra.mxu0 0
        %2897 = vmatprep.subr.bf16.mxu0 0
        %2898 = vmatpush1.bf16.msra.mxu0 0
        %2899 = vmatprep.mubr.bf16.mxu0 0
        %2900 = vmatmul.mubr.bf16.gmra.mrb[0].mxu0 %v2797
        %v2901 = vpop.f32.mrb[0].mxu0
        %v2902 = vadd.f32 0.0, %v2901
        %v2903 = vpop.f32.mrb[0].mxu0
        %v2904 = vpop.f32.mrb[0].mxu0
        %v2905 = vadd.f32 0.0, %v2904
        %v2906 = vpop.f32.mrb[0].mxu0
        %2907 = vmatprep.mubr.bf16.mxu0 0
        %2908 = vmatmul.mubr.bf16.gmra.mrb[0].mxu0 %v2806
        %v2909 = vpop.f32.mrb[0].mxu0
        %v2910 = vadd.f32 0.0, %v2909
        %v2911 = vpop.f32.mrb[0].mxu0
        %v2912 = vpop.f32.mrb[0].mxu0
        %v2913 = vadd.f32 0.0, %v2912
        %v2914 = vpop.f32.mrb[0].mxu0
        %2915 = vmatprep.mubr.bf16.mxu0 0
        %2916 = vmatmul.mubr.bf16.gmra.mrb[0].mxu0 %v2815
        %v2917 = vpop.f32.mrb[0].mxu0
        %v2918 = vadd.f32 0.0, %v2917
        %v2919 = vpop.f32.mrb[0].mxu0
        %v2920 = vpop.f32.mrb[0].mxu0
        %v2921 = vadd.f32 0.0, %v2920
        %v2922 = vpop.f32.mrb[0].mxu0
        %2923 = vdwg.mxu0
        %v2924 = vadd.f32 %v2733, %v2902
        %v2925 = vadd.f32 %v2734, %v2905
        %v2926 = vadd.f32 %v2735, %v2910
        %v2927 = vadd.f32 %v2736, %v2913
        %v2928 = vadd.f32 %v2737, %v2918
        %v2929 = vadd.f32 %v2738, %v2921
        %2930 = vst [vmem:[#allocation3] sm:$0xff] %v2924
        %2931 = vst [vmem:[#allocation3 + $0x8] sm:$0xff] %v2925
        %2932 = vst [vmem:[#allocation3 + $0x10] sm:$0xff] %v2926
        %2933 = vst [vmem:[#allocation3 + $0x18] sm:$0xff] %v2927
        %2934 = vst [vmem:[#allocation3 + $0x20] sm:$0xff] %v2928
        %2935 = vst [vmem:[#allocation3 + $0x28] sm:$0xff] %v2929
        %v2936 = vld [vmem:[#allocation3] sm:$0xff]
        %v2937 = vld [vmem:[#allocation3 + $0x8] sm:$0xff]
        %v2938 = vld [vmem:[#allocation3 + $0x10] sm:$0xff]
        %v2939 = vld [vmem:[#allocation3 + $0x18] sm:$0xff]
        %v2940 = vld [vmem:[#allocation3 + $0x20] sm:$0xff]
        %v2941 = vld [vmem:[#allocation3 + $0x28] sm:$0xff]
        %v2942 = vld [vmem:[#allocation2 + $0x4] sm:$0x8]
        %v2943 = vld [vmem:[#allocation2 + $0x8] sm:$0xf]
        %v2944 = vld [vmem:[#allocation2 + $0xc] sm:$0xf]
        %v2945 = vld [vmem:[#allocation2 + $0x10] sm:$0xf]
        %v2946 = vld [vmem:[#allocation2 + $0x14] sm:$0xf]
        %v2947 = vld [vmem:[#allocation2 + $0x18] sm:$0xf]
        %v2948 = vld [vmem:[#allocation2 + $0x1c] sm:$0x7]
        %s2949 = scalar_lea.vmem [#allocation9], 896
        %v2950 = vld [vmem:[%s2949] sm:$0xf]
        %v2951 = vld [vmem:[%s2949 + $0x4] sm:$0xf]
        %v2952 = vld [vmem:[%s2949 + $0x8] sm:$0xf]
        %v2953 = vld [vmem:[%s2949 + $0xc] sm:$0xf]
        %v2954 = vld [vmem:[%s2949 + $0x10] sm:$0xf]
        %v2955 = vld [vmem:[%s2949 + $0x14] sm:$0xf]
        %v2956 = vld [vmem:[%s2949 + $0x18] sm:$0xf]
        %v2957 = vld [vmem:[%s2949 + $0x1c] sm:$0xf]
        %v2958 = vld [vmem:[%s2949 + $0x20] sm:$0xf]
        %v2959 = vld [vmem:[%s2949 + $0x24] sm:$0xf]
        %v2960 = vld [vmem:[%s2949 + $0x28] sm:$0xf]
        %v2961 = vld [vmem:[%s2949 + $0x2c] sm:$0xf]
        %v2962 = vld [vmem:[%s2949 + $0x30] sm:$0xf]
        %v2963 = vld [vmem:[%s2949 + $0x34] sm:$0xf]
        %v2964 = vld [vmem:[%s2949 + $0x38] sm:$0xf]
        %v2965 = vld [vmem:[%s2949 + $0x3c] sm:$0xf]
        %v2973 = vunpack.c.l.b16 %v2942
        %v2974 = vunpack.c.l.b16 %v2943
        %v2975 = vunpack.c.l.b16 %v2944
        %v2976 = vunpack.c.l.b16 %v2945
        %v2977 = vunpack.c.l.b16 %v2946
        %v2978 = vunpack.c.l.b16 %v2947
        %v2979 = vunpack.c.l.b16 %v2948
        %v2980 = vpack.c.b16 %v2974, %v2973
        %v2981 = vpack.c.b16 %v2976, %v2975
        %v2982 = vpack.c.b16 %v2978, %v2977
        %v2983 = vpack.c.b16 %v2979, %v2979
        %v2984 = vrot.slane %v2980, 3
        %v2985 = vrot.slane %v2981, 3
        %v2986 = vsel %vm1488, %v2984, %v2985
        %v2987 = vrot.slane %v2982, 3
        %v2988 = vsel %vm1488, %v2985, %v2987
        %v2989 = vrot.slane %v2983, 3
        %v2990 = vsel %vm1488, %v2987, %v2989
        %v3010 = vunpack.c.l.b16 %v2950
        %v3011 = vunpack.c.l.b16 %v2951
        %v3012 = vunpack.c.l.b16 %v2952
        %v3013 = vunpack.c.l.b16 %v2953
        %v3014 = vunpack.c.l.b16 %v2954
        %v3015 = vunpack.c.l.b16 %v2955
        %v3016 = vunpack.c.l.b16 %v2956
        %v3017 = vunpack.c.l.b16 %v2957
        %v3018 = vunpack.c.l.b16 %v2958
        %v3019 = vunpack.c.l.b16 %v2959
        %v3020 = vunpack.c.l.b16 %v2960
        %v3021 = vunpack.c.l.b16 %v2961
        %v3022 = vunpack.c.l.b16 %v2962
        %v3023 = vunpack.c.l.b16 %v2963
        %v3024 = vunpack.c.l.b16 %v2964
        %v3025 = vunpack.c.l.b16 %v2965
        %v3026 = vpack.c.b16 %v3011, %v3010
        %v3027 = vpack.c.b16 %v3013, %v3012
        %v3028 = vpack.c.b16 %v3015, %v3014
        %v3029 = vpack.c.b16 %v3017, %v3016
        %v3030 = vpack.c.b16 %v3019, %v3018
        %v3031 = vpack.c.b16 %v3021, %v3020
        %v3032 = vpack.c.b16 %v3023, %v3022
        %v3033 = vpack.c.b16 %v3025, %v3024
        %3042 = vmatprep.subr.bf16.mxu0 0
        %3043 = vmatpush1.bf16.msra.mxu0 %v3026
        %3044 = vmatprep.subr.bf16.mxu0 0
        %3045 = vmatpush1.bf16.msra.mxu0 %v3027
        %3046 = vmatprep.subr.bf16.mxu0 0
        %3047 = vmatpush1.bf16.msra.mxu0 %v3028
        %3048 = vmatprep.subr.bf16.mxu0 0
        %3049 = vmatpush1.bf16.msra.mxu0 %v3029
        %3050 = vmatprep.subr.bf16.mxu0 0
        %3051 = vmatpush1.bf16.msra.mxu0 %v3030
        %3052 = vmatprep.subr.bf16.mxu0 0
        %3053 = vmatpush1.bf16.msra.mxu0 %v3031
        %3054 = vmatprep.subr.bf16.mxu0 0
        %3055 = vmatpush1.bf16.msra.mxu0 %v3032
        %3056 = vmatprep.subr.bf16.mxu0 0
        %3057 = vmatpush1.bf16.msra.mxu0 %v3033
        %3058 = vmatprep.subr.bf16.mxu0 0
        %3059 = vmatpush1.bf16.msra.mxu0 0
        %3060 = vmatprep.subr.bf16.mxu0 0
        %3061 = vmatpush1.bf16.msra.mxu0 0
        %3062 = vmatprep.subr.bf16.mxu0 0
        %3063 = vmatpush1.bf16.msra.mxu0 0
        %3064 = vmatprep.subr.bf16.mxu0 0
        %3065 = vmatpush1.bf16.msra.mxu0 0
        %3066 = vmatprep.subr.bf16.mxu0 0
        %3067 = vmatpush1.bf16.msra.mxu0 0
        %3068 = vmatprep.subr.bf16.mxu0 0
        %3069 = vmatpush1.bf16.msra.mxu0 0
        %3070 = vmatprep.subr.bf16.mxu0 0
        %3071 = vmatpush1.bf16.msra.mxu0 0
        %3072 = vmatprep.subr.bf16.mxu0 0
        %3073 = vmatpush1.bf16.msra.mxu0 0
        %3074 = vmatprep.mubr.bf16.mxu0 0
        %3075 = vmatmul.mubr.bf16.gmra.mrb[0].mxu0 %v2986
        %v3076 = vpop.f32.mrb[0].mxu0
        %v3077 = vadd.f32 0.0, %v3076
        %v3078 = vpop.f32.mrb[0].mxu0
        %v3079 = vpop.f32.mrb[0].mxu0
        %v3080 = vadd.f32 0.0, %v3079
        %v3081 = vpop.f32.mrb[0].mxu0
        %3082 = vmatprep.mubr.bf16.mxu0 0
        %3083 = vmatmul.mubr.bf16.gmra.mrb[0].mxu0 %v2988
        %v3084 = vpop.f32.mrb[0].mxu0
        %v3085 = vadd.f32 0.0, %v3084
        %v3086 = vpop.f32.mrb[0].mxu0
        %v3087 = vpop.f32.mrb[0].mxu0
        %v3088 = vadd.f32 0.0, %v3087
        %v3089 = vpop.f32.mrb[0].mxu0
        %3090 = vmatprep.mubr.bf16.mxu0 0
        %3091 = vmatmul.mubr.bf16.gmra.mrb[0].mxu0 %v2990
        %v3092 = vpop.f32.mrb[0].mxu0
        %v3093 = vadd.f32 0.0, %v3092
        %v3094 = vpop.f32.mrb[0].mxu0
        %v3095 = vpop.f32.mrb[0].mxu0
        %v3096 = vadd.f32 0.0, %v3095
        %v3097 = vpop.f32.mrb[0].mxu0
        %3098 = vdwg.mxu0
        %v3099 = vadd.f32 %v2936, %v3077
        %v3100 = vadd.f32 %v2937, %v3080
        %v3101 = vadd.f32 %v2938, %v3085
        %v3102 = vadd.f32 %v2939, %v3088
        %v3103 = vadd.f32 %v2940, %v3093
        %v3104 = vadd.f32 %v2941, %v3096
        %3105 = vst [vmem:[#allocation3] sm:$0xff] %v3099
        %3106 = vst [vmem:[#allocation3 + $0x8] sm:$0xff] %v3100
        %3107 = vst [vmem:[#allocation3 + $0x10] sm:$0xff] %v3101
        %3108 = vst [vmem:[#allocation3 + $0x18] sm:$0xff] %v3102
        %3109 = vst [vmem:[#allocation3 + $0x20] sm:$0xff] %v3103
        %3110 = vst [vmem:[#allocation3 + $0x28] sm:$0xff] %v3104
        %v3111 = vld [vmem:[#allocation3] sm:$0xff]
        %v3112 = vld [vmem:[#allocation3 + $0x8] sm:$0xff]
        %v3113 = vld [vmem:[#allocation3 + $0x10] sm:$0xff]
        %v3114 = vld [vmem:[#allocation3 + $0x18] sm:$0xff]
        %v3115 = vld [vmem:[#allocation3 + $0x20] sm:$0xff]
        %v3116 = vld [vmem:[#allocation3 + $0x28] sm:$0xff]
        %v3117 = vld [vmem:[#allocation2 + $0x4] sm:$0x8]
        %v3118 = vld [vmem:[#allocation2 + $0x8] sm:$0xf]
        %v3119 = vld [vmem:[#allocation2 + $0xc] sm:$0xf]
        %v3120 = vld [vmem:[#allocation2 + $0x10] sm:$0xf]
        %v3121 = vld [vmem:[#allocation2 + $0x14] sm:$0xf]
        %v3122 = vld [vmem:[#allocation2 + $0x18] sm:$0xf]
        %v3123 = vld [vmem:[#allocation2 + $0x1c] sm:$0xf]
        %s3124 = scalar_lea.vmem [#allocation9], 960
        %v3125 = vld [vmem:[%s3124] sm:$0xf]
        %v3126 = vld [vmem:[%s3124 + $0x4] sm:$0xf]
        %v3127 = vld [vmem:[%s3124 + $0x8] sm:$0xf]
        %v3128 = vld [vmem:[%s3124 + $0xc] sm:$0xf]
        %v3129 = vld [vmem:[%s3124 + $0x10] sm:$0xf]
        %v3130 = vld [vmem:[%s3124 + $0x14] sm:$0xf]
        %v3131 = vld [vmem:[%s3124 + $0x18] sm:$0xf]
        %v3132 = vld [vmem:[%s3124 + $0x1c] sm:$0xf]
        %v3133 = vld [vmem:[%s3124 + $0x20] sm:$0xf]
        %v3134 = vld [vmem:[%s3124 + $0x24] sm:$0xf]
        %v3135 = vld [vmem:[%s3124 + $0x28] sm:$0xf]
        %v3136 = vld [vmem:[%s3124 + $0x2c] sm:$0xf]
        %v3137 = vld [vmem:[%s3124 + $0x30] sm:$0xf]
        %v3138 = vld [vmem:[%s3124 + $0x34] sm:$0xf]
        %v3139 = vld [vmem:[%s3124 + $0x38] sm:$0xf]
        %v3140 = vld [vmem:[%s3124 + $0x3c] sm:$0xf]
        %v3148 = vunpack.c.l.b16 %v3117
        %v3149 = vunpack.c.l.b16 %v3118
        %v3150 = vunpack.c.l.b16 %v3119
        %v3151 = vunpack.c.l.b16 %v3120
        %v3152 = vunpack.c.l.b16 %v3121
        %v3153 = vunpack.c.l.b16 %v3122
        %v3154 = vunpack.c.l.b16 %v3123
        %v3155 = vpack.c.b16 %v3149, %v3148
        %v3156 = vpack.c.b16 %v3151, %v3150
        %v3157 = vpack.c.b16 %v3153, %v3152
        %v3158 = vpack.c.b16 %v3154, %v3154
        %v3160 = vshrl.u32 %v3155, 16
        %v3162 = vrot.slane %v3160, 3
        %v3163 = vshll.u32 %v3155, 16
        %v3165 = vrot.slane %v3163, 4
        %v3166 = vor.u32 %v3162, %v3165
        %v3168 = vshrl.u32 %v3156, 16
        %v3170 = vrot.slane %v3168, 3
        %v3171 = vshll.u32 %v3156, 16
        %v3173 = vrot.slane %v3171, 4
        %v3174 = vor.u32 %v3170, %v3173
        %v3175 = vsel %vm1664, %v3166, %v3174
        %v3177 = vshrl.u32 %v3157, 16
        %v3179 = vrot.slane %v3177, 3
        %v3180 = vshll.u32 %v3157, 16
        %v3182 = vrot.slane %v3180, 4
        %v3183 = vor.u32 %v3179, %v3182
        %v3184 = vsel %vm1664, %v3174, %v3183
        %v3186 = vshrl.u32 %v3158, 16
        %v3188 = vrot.slane %v3186, 3
        %v3189 = vshll.u32 %v3158, 16
        %v3191 = vrot.slane %v3189, 4
        %v3192 = vor.u32 %v3188, %v3191
        %v3193 = vsel %vm1664, %v3183, %v3192
        %v3213 = vunpack.c.l.b16 %v3125
        %v3214 = vunpack.c.l.b16 %v3126
        %v3215 = vunpack.c.l.b16 %v3127
        %v3216 = vunpack.c.l.b16 %v3128
        %v3217 = vunpack.c.l.b16 %v3129
        %v3218 = vunpack.c.l.b16 %v3130
        %v3219 = vunpack.c.l.b16 %v3131
        %v3220 = vunpack.c.l.b16 %v3132
        %v3221 = vunpack.c.l.b16 %v3133
        %v3222 = vunpack.c.l.b16 %v3134
        %v3223 = vunpack.c.l.b16 %v3135
        %v3224 = vunpack.c.l.b16 %v3136
        %v3225 = vunpack.c.l.b16 %v3137
        %v3226 = vunpack.c.l.b16 %v3138
        %v3227 = vunpack.c.l.b16 %v3139
        %v3228 = vunpack.c.l.b16 %v3140
        %v3229 = vpack.c.b16 %v3214, %v3213
        %v3230 = vpack.c.b16 %v3216, %v3215
        %v3231 = vpack.c.b16 %v3218, %v3217
        %v3232 = vpack.c.b16 %v3220, %v3219
        %v3233 = vpack.c.b16 %v3222, %v3221
        %v3234 = vpack.c.b16 %v3224, %v3223
        %v3235 = vpack.c.b16 %v3226, %v3225
        %v3236 = vpack.c.b16 %v3228, %v3227
        %3245 = vmatprep.subr.bf16.mxu0 0
        %3246 = vmatpush1.bf16.msra.mxu0 %v3229
        %3247 = vmatprep.subr.bf16.mxu0 0
        %3248 = vmatpush1.bf16.msra.mxu0 %v3230
        %3249 = vmatprep.subr.bf16.mxu0 0
        %3250 = vmatpush1.bf16.msra.mxu0 %v3231
        %3251 = vmatprep.subr.bf16.mxu0 0
        %3252 = vmatpush1.bf16.msra.mxu0 %v3232
        %3253 = vmatprep.subr.bf16.mxu0 0
        %3254 = vmatpush1.bf16.msra.mxu0 %v3233
        %3255 = vmatprep.subr.bf16.mxu0 0
        %3256 = vmatpush1.bf16.msra.mxu0 %v3234
        %3257 = vmatprep.subr.bf16.mxu0 0
        %3258 = vmatpush1.bf16.msra.mxu0 %v3235
        %3259 = vmatprep.subr.bf16.mxu0 0
        %3260 = vmatpush1.bf16.msra.mxu0 %v3236
        %3261 = vmatprep.subr.bf16.mxu0 0
        %3262 = vmatpush1.bf16.msra.mxu0 0
        %3263 = vmatprep.subr.bf16.mxu0 0
        %3264 = vmatpush1.bf16.msra.mxu0 0
        %3265 = vmatprep.subr.bf16.mxu0 0
        %3266 = vmatpush1.bf16.msra.mxu0 0
        %3267 = vmatprep.subr.bf16.mxu0 0
        %3268 = vmatpush1.bf16.msra.mxu0 0
        %3269 = vmatprep.subr.bf16.mxu0 0
        %3270 = vmatpush1.bf16.msra.mxu0 0
        %3271 = vmatprep.subr.bf16.mxu0 0
        %3272 = vmatpush1.bf16.msra.mxu0 0
        %3273 = vmatprep.subr.bf16.mxu0 0
        %3274 = vmatpush1.bf16.msra.mxu0 0
        %3275 = vmatprep.subr.bf16.mxu0 0
        %3276 = vmatpush1.bf16.msra.mxu0 0
        %3277 = vmatprep.mubr.bf16.mxu0 0
        %3278 = vmatmul.mubr.bf16.gmra.mrb[0].mxu0 %v3175
        %v3279 = vpop.f32.mrb[0].mxu0
        %v3280 = vadd.f32 0.0, %v3279
        %v3281 = vpop.f32.mrb[0].mxu0
        %v3282 = vpop.f32.mrb[0].mxu0
        %v3283 = vadd.f32 0.0, %v3282
        %v3284 = vpop.f32.mrb[0].mxu0
        %3285 = vmatprep.mubr.bf16.mxu0 0
        %3286 = vmatmul.mubr.bf16.gmra.mrb[0].mxu0 %v3184
        %v3287 = vpop.f32.mrb[0].mxu0
        %v3288 = vadd.f32 0.0, %v3287
        %v3289 = vpop.f32.mrb[0].mxu0
        %v3290 = vpop.f32.mrb[0].mxu0
        %v3291 = vadd.f32 0.0, %v3290
        %v3292 = vpop.f32.mrb[0].mxu0
        %3293 = vmatprep.mubr.bf16.mxu0 0
        %3294 = vmatmul.mubr.bf16.gmra.mrb[0].mxu0 %v3193
        %v3295 = vpop.f32.mrb[0].mxu0
        %v3296 = vadd.f32 0.0, %v3295
        %v3297 = vpop.f32.mrb[0].mxu0
        %v3298 = vpop.f32.mrb[0].mxu0
        %v3299 = vadd.f32 0.0, %v3298
        %v3300 = vpop.f32.mrb[0].mxu0
        %3301 = vdwg.mxu0
        %v3302 = vadd.f32 %v3111, %v3280
        %v3303 = vadd.f32 %v3112, %v3283
        %v3304 = vadd.f32 %v3113, %v3288
        %v3305 = vadd.f32 %v3114, %v3291
        %v3306 = vadd.f32 %v3115, %v3296
        %v3307 = vadd.f32 %v3116, %v3299
        %3308 = vst [vmem:[#allocation3] sm:$0xff] %v3302
        %3309 = vst [vmem:[#allocation3 + $0x8] sm:$0xff] %v3303
        %3310 = vst [vmem:[#allocation3 + $0x10] sm:$0xff] %v3304
        %3311 = vst [vmem:[#allocation3 + $0x18] sm:$0xff] %v3305
        %3312 = vst [vmem:[#allocation3 + $0x20] sm:$0xff] %v3306
        %3313 = vst [vmem:[#allocation3 + $0x28] sm:$0xff] %v3307
        %v3314 = vld [vmem:[#allocation3] sm:$0xff]
        %v3315 = vld [vmem:[#allocation3 + $0x8] sm:$0xff]
        %v3316 = vld [vmem:[#allocation3 + $0x10] sm:$0xff]
        %v3317 = vld [vmem:[#allocation3 + $0x18] sm:$0xff]
        %v3318 = vld [vmem:[#allocation3 + $0x20] sm:$0xff]
        %v3319 = vld [vmem:[#allocation3 + $0x28] sm:$0xff]
        %v3320 = vld [vmem:[#allocation2 + $0x8] sm:$0xf]
        %v3321 = vld [vmem:[#allocation2 + $0xc] sm:$0xf]
        %v3322 = vld [vmem:[#allocation2 + $0x10] sm:$0xf]
        %v3323 = vld [vmem:[#allocation2 + $0x14] sm:$0xf]
        %v3324 = vld [vmem:[#allocation2 + $0x18] sm:$0xf]
        %v3325 = vld [vmem:[#allocation2 + $0x1c] sm:$0xf]
        %s3326 = scalar_lea.vmem [#allocation9], 1024
        %v3327 = vld [vmem:[%s3326] sm:$0xf]
        %v3328 = vld [vmem:[%s3326 + $0x4] sm:$0xf]
        %v3329 = vld [vmem:[%s3326 + $0x8] sm:$0xf]
        %v3330 = vld [vmem:[%s3326 + $0xc] sm:$0xf]
        %v3331 = vld [vmem:[%s3326 + $0x10] sm:$0xf]
        %v3332 = vld [vmem:[%s3326 + $0x14] sm:$0xf]
        %v3333 = vld [vmem:[%s3326 + $0x18] sm:$0xf]
        %v3334 = vld [vmem:[%s3326 + $0x1c] sm:$0xf]
        %v3335 = vld [vmem:[%s3326 + $0x20] sm:$0xf]
        %v3336 = vld [vmem:[%s3326 + $0x24] sm:$0xf]
        %v3337 = vld [vmem:[%s3326 + $0x28] sm:$0xf]
        %v3338 = vld [vmem:[%s3326 + $0x2c] sm:$0xf]
        %v3339 = vld [vmem:[%s3326 + $0x30] sm:$0xf]
        %v3340 = vld [vmem:[%s3326 + $0x34] sm:$0xf]
        %v3341 = vld [vmem:[%s3326 + $0x38] sm:$0xf]
        %v3342 = vld [vmem:[%s3326 + $0x3c] sm:$0xf]
        %v3349 = vunpack.c.l.b16 %v3320
        %v3350 = vunpack.c.l.b16 %v3321
        %v3351 = vunpack.c.l.b16 %v3322
        %v3352 = vunpack.c.l.b16 %v3323
        %v3353 = vunpack.c.l.b16 %v3324
        %v3354 = vunpack.c.l.b16 %v3325
        %v3355 = vpack.c.b16 %v3350, %v3349
        %v3356 = vpack.c.b16 %v3352, %v3351
        %v3357 = vpack.c.b16 %v3354, %v3353
        %v3377 = vunpack.c.l.b16 %v3327
        %v3378 = vunpack.c.l.b16 %v3328
        %v3379 = vunpack.c.l.b16 %v3329
        %v3380 = vunpack.c.l.b16 %v3330
        %v3381 = vunpack.c.l.b16 %v3331
        %v3382 = vunpack.c.l.b16 %v3332
        %v3383 = vunpack.c.l.b16 %v3333
        %v3384 = vunpack.c.l.b16 %v3334
        %v3385 = vunpack.c.l.b16 %v3335
        %v3386 = vunpack.c.l.b16 %v3336
        %v3387 = vunpack.c.l.b16 %v3337
        %v3388 = vunpack.c.l.b16 %v3338
        %v3389 = vunpack.c.l.b16 %v3339
        %v3390 = vunpack.c.l.b16 %v3340
        %v3391 = vunpack.c.l.b16 %v3341
        %v3392 = vunpack.c.l.b16 %v3342
        %v3393 = vpack.c.b16 %v3378, %v3377
        %v3394 = vpack.c.b16 %v3380, %v3379
        %v3395 = vpack.c.b16 %v3382, %v3381
        %v3396 = vpack.c.b16 %v3384, %v3383
        %v3397 = vpack.c.b16 %v3386, %v3385
        %v3398 = vpack.c.b16 %v3388, %v3387
        %v3399 = vpack.c.b16 %v3390, %v3389
        %v3400 = vpack.c.b16 %v3392, %v3391
        %3409 = vmatprep.subr.bf16.mxu0 0
        %3410 = vmatpush1.bf16.msra.mxu0 %v3393
        %3411 = vmatprep.subr.bf16.mxu0 0
        %3412 = vmatpush1.bf16.msra.mxu0 %v3394
        %3413 = vmatprep.subr.bf16.mxu0 0
        %3414 = vmatpush1.bf16.msra.mxu0 %v3395
        %3415 = vmatprep.subr.bf16.mxu0 0
        %3416 = vmatpush1.bf16.msra.mxu0 %v3396
        %3417 = vmatprep.subr.bf16.mxu0 0
        %3418 = vmatpush1.bf16.msra.mxu0 %v3397
        %3419 = vmatprep.subr.bf16.mxu0 0
        %3420 = vmatpush1.bf16.msra.mxu0 %v3398
        %3421 = vmatprep.subr.bf16.mxu0 0
        %3422 = vmatpush1.bf16.msra.mxu0 %v3399
        %3423 = vmatprep.subr.bf16.mxu0 0
        %3424 = vmatpush1.bf16.msra.mxu0 %v3400
        %3425 = vmatprep.subr.bf16.mxu0 0
        %3426 = vmatpush1.bf16.msra.mxu0 0
        %3427 = vmatprep.subr.bf16.mxu0 0
        %3428 = vmatpush1.bf16.msra.mxu0 0
        %3429 = vmatprep.subr.bf16.mxu0 0
        %3430 = vmatpush1.bf16.msra.mxu0 0
        %3431 = vmatprep.subr.bf16.mxu0 0
        %3432 = vmatpush1.bf16.msra.mxu0 0
        %3433 = vmatprep.subr.bf16.mxu0 0
        %3434 = vmatpush1.bf16.msra.mxu0 0
        %3435 = vmatprep.subr.bf16.mxu0 0
        %3436 = vmatpush1.bf16.msra.mxu0 0
        %3437 = vmatprep.subr.bf16.mxu0 0
        %3438 = vmatpush1.bf16.msra.mxu0 0
        %3439 = vmatprep.subr.bf16.mxu0 0
        %3440 = vmatpush1.bf16.msra.mxu0 0
        %3441 = vmatprep.mubr.bf16.mxu0 0
        %3442 = vmatmul.mubr.bf16.gmra.mrb[0].mxu0 %v3355
        %v3443 = vpop.f32.mrb[0].mxu0
        %v3444 = vadd.f32 0.0, %v3443
        %v3445 = vpop.f32.mrb[0].mxu0
        %v3446 = vpop.f32.mrb[0].mxu0
        %v3447 = vadd.f32 0.0, %v3446
        %v3448 = vpop.f32.mrb[0].mxu0
        %3449 = vmatprep.mubr.bf16.mxu0 0
        %3450 = vmatmul.mubr.bf16.gmra.mrb[0].mxu0 %v3356
        %v3451 = vpop.f32.mrb[0].mxu0
        %v3452 = vadd.f32 0.0, %v3451
        %v3453 = vpop.f32.mrb[0].mxu0
        %v3454 = vpop.f32.mrb[0].mxu0
        %v3455 = vadd.f32 0.0, %v3454
        %v3456 = vpop.f32.mrb[0].mxu0
        %3457 = vmatprep.mubr.bf16.mxu0 0
        %3458 = vmatmul.mubr.bf16.gmra.mrb[0].mxu0 %v3357
        %v3459 = vpop.f32.mrb[0].mxu0
        %v3460 = vadd.f32 0.0, %v3459
        %v3461 = vpop.f32.mrb[0].mxu0
        %v3462 = vpop.f32.mrb[0].mxu0
        %v3463 = vadd.f32 0.0, %v3462
        %v3464 = vpop.f32.mrb[0].mxu0
        %3465 = vdwg.mxu0
        %v3466 = vadd.f32 %v3314, %v3444
        %v3467 = vadd.f32 %v3315, %v3447
        %v3468 = vadd.f32 %v3316, %v3452
        %v3469 = vadd.f32 %v3317, %v3455
        %v3470 = vadd.f32 %v3318, %v3460
        %v3471 = vadd.f32 %v3319, %v3463
        %3472 = vst [vmem:[#allocation3] sm:$0xff] %v3466
        %3473 = vst [vmem:[#allocation3 + $0x8] sm:$0xff] %v3467
        %3474 = vst [vmem:[#allocation3 + $0x10] sm:$0xff] %v3468
        %3475 = vst [vmem:[#allocation3 + $0x18] sm:$0xff] %v3469
        %3476 = vst [vmem:[#allocation3 + $0x20] sm:$0xff] %v3470
        %3477 = vst [vmem:[#allocation3 + $0x28] sm:$0xff] %v3471
        %v3478 = vld [vmem:[#allocation3] sm:$0xff]
        %v3479 = vld [vmem:[#allocation3 + $0x8] sm:$0xff]
        %v3480 = vld [vmem:[#allocation3 + $0x10] sm:$0xff]
        %v3481 = vld [vmem:[#allocation3 + $0x18] sm:$0xff]
        %v3482 = vld [vmem:[#allocation3 + $0x20] sm:$0xff]
        %v3483 = vld [vmem:[#allocation3 + $0x28] sm:$0xff]
        %v3484 = vld [vmem:[#allocation2 + $0x8] sm:$0xf]
        %v3485 = vld [vmem:[#allocation2 + $0xc] sm:$0xf]
        %v3486 = vld [vmem:[#allocation2 + $0x10] sm:$0xf]
        %v3487 = vld [vmem:[#allocation2 + $0x14] sm:$0xf]
        %v3488 = vld [vmem:[#allocation2 + $0x18] sm:$0xf]
        %v3489 = vld [vmem:[#allocation2 + $0x1c] sm:$0xf]
        %v3490 = vld [vmem:[#allocation2 + $0x20] sm:$0x1]
        %s3491 = scalar_lea.vmem [#allocation9], 1088
        %v3492 = vld [vmem:[%s3491] sm:$0xf]
        %v3493 = vld [vmem:[%s3491 + $0x4] sm:$0xf]
        %v3494 = vld [vmem:[%s3491 + $0x8] sm:$0xf]
        %v3495 = vld [vmem:[%s3491 + $0xc] sm:$0xf]
        %v3496 = vld [vmem:[%s3491 + $0x10] sm:$0xf]
        %v3497 = vld [vmem:[%s3491 + $0x14] sm:$0xf]
        %v3498 = vld [vmem:[%s3491 + $0x18] sm:$0xf]
        %v3499 = vld [vmem:[%s3491 + $0x1c] sm:$0xf]
        %v3500 = vld [vmem:[%s3491 + $0x20] sm:$0xf]
        %v3501 = vld [vmem:[%s3491 + $0x24] sm:$0xf]
        %v3502 = vld [vmem:[%s3491 + $0x28] sm:$0xf]
        %v3503 = vld [vmem:[%s3491 + $0x2c] sm:$0xf]
        %v3504 = vld [vmem:[%s3491 + $0x30] sm:$0xf]
        %v3505 = vld [vmem:[%s3491 + $0x34] sm:$0xf]
        %v3506 = vld [vmem:[%s3491 + $0x38] sm:$0xf]
        %v3507 = vld [vmem:[%s3491 + $0x3c] sm:$0xf]
        %v3515 = vunpack.c.l.b16 %v3484
        %v3516 = vunpack.c.l.b16 %v3485
        %v3517 = vunpack.c.l.b16 %v3486
        %v3518 = vunpack.c.l.b16 %v3487
        %v3519 = vunpack.c.l.b16 %v3488
        %v3520 = vunpack.c.l.b16 %v3489
        %v3521 = vunpack.c.l.b16 %v3490
        %v3522 = vpack.c.b16 %v3516, %v3515
        %v3523 = vpack.c.b16 %v3518, %v3517
        %v3524 = vpack.c.b16 %v3520, %v3519
        %v3525 = vpack.c.b16 %v3521, %v3521
        %v3527 = vshrl.u32 %v3522, 16
        %v3529 = vshll.u32 %v3522, 16
        %v3531 = vrot.slane %v3529, 1
        %v3532 = vor.u32 %v3527, %v3531
        %v3534 = vshll.u32 %v3523, 16
        %v3536 = vrot.slane %v3534, 1
        %v3537 = vsel %vm531, %v3532, %v3536
        %v3538 = vshrl.u32 %v3523, 16
        %v3540 = vor.u32 %v3538, %v3536
        %v3542 = vshll.u32 %v3524, 16
        %v3544 = vrot.slane %v3542, 1
        %v3545 = vsel %vm531, %v3540, %v3544
        %v3546 = vshrl.u32 %v3524, 16
        %v3548 = vor.u32 %v3546, %v3544
        %v3550 = vshll.u32 %v3525, 16
        %v3552 = vrot.slane %v3550, 1
        %v3553 = vsel %vm531, %v3548, %v3552
        %v3573 = vunpack.c.l.b16 %v3492
        %v3574 = vunpack.c.l.b16 %v3493
        %v3575 = vunpack.c.l.b16 %v3494
        %v3576 = vunpack.c.l.b16 %v3495
        %v3577 = vunpack.c.l.b16 %v3496
        %v3578 = vunpack.c.l.b16 %v3497
        %v3579 = vunpack.c.l.b16 %v3498
        %v3580 = vunpack.c.l.b16 %v3499
        %v3581 = vunpack.c.l.b16 %v3500
        %v3582 = vunpack.c.l.b16 %v3501
        %v3583 = vunpack.c.l.b16 %v3502
        %v3584 = vunpack.c.l.b16 %v3503
        %v3585 = vunpack.c.l.b16 %v3504
        %v3586 = vunpack.c.l.b16 %v3505
        %v3587 = vunpack.c.l.b16 %v3506
        %v3588 = vunpack.c.l.b16 %v3507
        %v3589 = vpack.c.b16 %v3574, %v3573
        %v3590 = vpack.c.b16 %v3576, %v3575
        %v3591 = vpack.c.b16 %v3578, %v3577
        %v3592 = vpack.c.b16 %v3580, %v3579
        %v3593 = vpack.c.b16 %v3582, %v3581
        %v3594 = vpack.c.b16 %v3584, %v3583
        %v3595 = vpack.c.b16 %v3586, %v3585
        %v3596 = vpack.c.b16 %v3588, %v3587
        %3605 = vmatprep.subr.bf16.mxu0 0
        %3606 = vmatpush1.bf16.msra.mxu0 %v3589
        %3607 = vmatprep.subr.bf16.mxu0 0
        %3608 = vmatpush1.bf16.msra.mxu0 %v3590
        %3609 = vmatprep.subr.bf16.mxu0 0
        %3610 = vmatpush1.bf16.msra.mxu0 %v3591
        %3611 = vmatprep.subr.bf16.mxu0 0
        %3612 = vmatpush1.bf16.msra.mxu0 %v3592
        %3613 = vmatprep.subr.bf16.mxu0 0
        %3614 = vmatpush1.bf16.msra.mxu0 %v3593
        %3615 = vmatprep.subr.bf16.mxu0 0
        %3616 = vmatpush1.bf16.msra.mxu0 %v3594
        %3617 = vmatprep.subr.bf16.mxu0 0
        %3618 = vmatpush1.bf16.msra.mxu0 %v3595
        %3619 = vmatprep.subr.bf16.mxu0 0
        %3620 = vmatpush1.bf16.msra.mxu0 %v3596
        %3621 = vmatprep.subr.bf16.mxu0 0
        %3622 = vmatpush1.bf16.msra.mxu0 0
        %3623 = vmatprep.subr.bf16.mxu0 0
        %3624 = vmatpush1.bf16.msra.mxu0 0
        %3625 = vmatprep.subr.bf16.mxu0 0
        %3626 = vmatpush1.bf16.msra.mxu0 0
        %3627 = vmatprep.subr.bf16.mxu0 0
        %3628 = vmatpush1.bf16.msra.mxu0 0
        %3629 = vmatprep.subr.bf16.mxu0 0
        %3630 = vmatpush1.bf16.msra.mxu0 0
        %3631 = vmatprep.subr.bf16.mxu0 0
        %3632 = vmatpush1.bf16.msra.mxu0 0
        %3633 = vmatprep.subr.bf16.mxu0 0
        %3634 = vmatpush1.bf16.msra.mxu0 0
        %3635 = vmatprep.subr.bf16.mxu0 0
        %3636 = vmatpush1.bf16.msra.mxu0 0
        %3637 = vmatprep.mubr.bf16.mxu0 0
        %3638 = vmatmul.mubr.bf16.gmra.mrb[0].mxu0 %v3537
        %v3639 = vpop.f32.mrb[0].mxu0
        %v3640 = vadd.f32 0.0, %v3639
        %v3641 = vpop.f32.mrb[0].mxu0
        %v3642 = vpop.f32.mrb[0].mxu0
        %v3643 = vadd.f32 0.0, %v3642
        %v3644 = vpop.f32.mrb[0].mxu0
        %3645 = vmatprep.mubr.bf16.mxu0 0
        %3646 = vmatmul.mubr.bf16.gmra.mrb[0].mxu0 %v3545
        %v3647 = vpop.f32.mrb[0].mxu0
        %v3648 = vadd.f32 0.0, %v3647
        %v3649 = vpop.f32.mrb[0].mxu0
        %v3650 = vpop.f32.mrb[0].mxu0
        %v3651 = vadd.f32 0.0, %v3650
        %v3652 = vpop.f32.mrb[0].mxu0
        %3653 = vmatprep.mubr.bf16.mxu0 0
        %3654 = vmatmul.mubr.bf16.gmra.mrb[0].mxu0 %v3553
        %v3655 = vpop.f32.mrb[0].mxu0
        %v3656 = vadd.f32 0.0, %v3655
        %v3657 = vpop.f32.mrb[0].mxu0
        %v3658 = vpop.f32.mrb[0].mxu0
        %v3659 = vadd.f32 0.0, %v3658
        %v3660 = vpop.f32.mrb[0].mxu0
        %3661 = vdwg.mxu0
        %v3662 = vadd.f32 %v3478, %v3640
        %v3663 = vadd.f32 %v3479, %v3643
        %v3664 = vadd.f32 %v3480, %v3648
        %v3665 = vadd.f32 %v3481, %v3651
        %v3666 = vadd.f32 %v3482, %v3656
        %v3667 = vadd.f32 %v3483, %v3659
        %3668 = vst [vmem:[#allocation3] sm:$0xff] %v3662
        %3669 = vst [vmem:[#allocation3 + $0x8] sm:$0xff] %v3663
        %3670 = vst [vmem:[#allocation3 + $0x10] sm:$0xff] %v3664
        %3671 = vst [vmem:[#allocation3 + $0x18] sm:$0xff] %v3665
        %3672 = vst [vmem:[#allocation3 + $0x20] sm:$0xff] %v3666
        %3673 = vst [vmem:[#allocation3 + $0x28] sm:$0xff] %v3667
        %v3674 = vld [vmem:[#allocation3] sm:$0xff]
        %v3675 = vld [vmem:[#allocation3 + $0x8] sm:$0xff]
        %v3676 = vld [vmem:[#allocation3 + $0x10] sm:$0xff]
        %v3677 = vld [vmem:[#allocation3 + $0x18] sm:$0xff]
        %v3678 = vld [vmem:[#allocation3 + $0x20] sm:$0xff]
        %v3679 = vld [vmem:[#allocation3 + $0x28] sm:$0xff]
        %v3680 = vld [vmem:[#allocation2 + $0x8] sm:$0xe]
        %v3681 = vld [vmem:[#allocation2 + $0xc] sm:$0xf]
        %v3682 = vld [vmem:[#allocation2 + $0x10] sm:$0xf]
        %v3683 = vld [vmem:[#allocation2 + $0x14] sm:$0xf]
        %v3684 = vld [vmem:[#allocation2 + $0x18] sm:$0xf]
        %v3685 = vld [vmem:[#allocation2 + $0x1c] sm:$0xf]
        %v3686 = vld [vmem:[#allocation2 + $0x20] sm:$0x1]
        %s3687 = scalar_lea.vmem [#allocation9], 1152
        %v3688 = vld [vmem:[%s3687] sm:$0xf]
        %v3689 = vld [vmem:[%s3687 + $0x4] sm:$0xf]
        %v3690 = vld [vmem:[%s3687 + $0x8] sm:$0xf]
        %v3691 = vld [vmem:[%s3687 + $0xc] sm:$0xf]
        %v3692 = vld [vmem:[%s3687 + $0x10] sm:$0xf]
        %v3693 = vld [vmem:[%s3687 + $0x14] sm:$0xf]
        %v3694 = vld [vmem:[%s3687 + $0x18] sm:$0xf]
        %v3695 = vld [vmem:[%s3687 + $0x1c] sm:$0xf]
        %v3696 = vld [vmem:[%s3687 + $0x20] sm:$0xf]
        %v3697 = vld [vmem:[%s3687 + $0x24] sm:$0xf]
        %v3698 = vld [vmem:[%s3687 + $0x28] sm:$0xf]
        %v3699 = vld [vmem:[%s3687 + $0x2c] sm:$0xf]
        %v3700 = vld [vmem:[%s3687 + $0x30] sm:$0xf]
        %v3701 = vld [vmem:[%s3687 + $0x34] sm:$0xf]
        %v3702 = vld [vmem:[%s3687 + $0x38] sm:$0xf]
        %v3703 = vld [vmem:[%s3687 + $0x3c] sm:$0xf]
        %v3711 = vunpack.c.l.b16 %v3680
        %v3712 = vunpack.c.l.b16 %v3681
        %v3713 = vunpack.c.l.b16 %v3682
        %v3714 = vunpack.c.l.b16 %v3683
        %v3715 = vunpack.c.l.b16 %v3684
        %v3716 = vunpack.c.l.b16 %v3685
        %v3717 = vunpack.c.l.b16 %v3686
        %v3718 = vpack.c.b16 %v3712, %v3711
        %v3719 = vpack.c.b16 %v3714, %v3713
        %v3720 = vpack.c.b16 %v3716, %v3715
        %v3721 = vpack.c.b16 %v3717, %v3717
        %v3722 = vrot.slane %v3718, 1
        %v3723 = vrot.slane %v3719, 1
        %v3724 = vsel %vm728, %v3722, %v3723
        %v3725 = vrot.slane %v3720, 1
        %v3726 = vsel %vm728, %v3723, %v3725
        %v3727 = vrot.slane %v3721, 1
        %v3728 = vsel %vm728, %v3725, %v3727
        %v3748 = vunpack.c.l.b16 %v3688
        %v3749 = vunpack.c.l.b16 %v3689
        %v3750 = vunpack.c.l.b16 %v3690
        %v3751 = vunpack.c.l.b16 %v3691
        %v3752 = vunpack.c.l.b16 %v3692
        %v3753 = vunpack.c.l.b16 %v3693
        %v3754 = vunpack.c.l.b16 %v3694
        %v3755 = vunpack.c.l.b16 %v3695
        %v3756 = vunpack.c.l.b16 %v3696
        %v3757 = vunpack.c.l.b16 %v3697
        %v3758 = vunpack.c.l.b16 %v3698
        %v3759 = vunpack.c.l.b16 %v3699
        %v3760 = vunpack.c.l.b16 %v3700
        %v3761 = vunpack.c.l.b16 %v3701
        %v3762 = vunpack.c.l.b16 %v3702
        %v3763 = vunpack.c.l.b16 %v3703
        %v3764 = vpack.c.b16 %v3749, %v3748
        %v3765 = vpack.c.b16 %v3751, %v3750
        %v3766 = vpack.c.b16 %v3753, %v3752
        %v3767 = vpack.c.b16 %v3755, %v3754
        %v3768 = vpack.c.b16 %v3757, %v3756
        %v3769 = vpack.c.b16 %v3759, %v3758
        %v3770 = vpack.c.b16 %v3761, %v3760
        %v3771 = vpack.c.b16 %v3763, %v3762
        %3780 = vmatprep.subr.bf16.mxu0 0
        %3781 = vmatpush1.bf16.msra.mxu0 %v3764
        %3782 = vmatprep.subr.bf16.mxu0 0
        %3783 = vmatpush1.bf16.msra.mxu0 %v3765
        %3784 = vmatprep.subr.bf16.mxu0 0
        %3785 = vmatpush1.bf16.msra.mxu0 %v3766
        %3786 = vmatprep.subr.bf16.mxu0 0
        %3787 = vmatpush1.bf16.msra.mxu0 %v3767
        %3788 = vmatprep.subr.bf16.mxu0 0
        %3789 = vmatpush1.bf16.msra.mxu0 %v3768
        %3790 = vmatprep.subr.bf16.mxu0 0
        %3791 = vmatpush1.bf16.msra.mxu0 %v3769
        %3792 = vmatprep.subr.bf16.mxu0 0
        %3793 = vmatpush1.bf16.msra.mxu0 %v3770
        %3794 = vmatprep.subr.bf16.mxu0 0
        %3795 = vmatpush1.bf16.msra.mxu0 %v3771
        %3796 = vmatprep.subr.bf16.mxu0 0
        %3797 = vmatpush1.bf16.msra.mxu0 0
        %3798 = vmatprep.subr.bf16.mxu0 0
        %3799 = vmatpush1.bf16.msra.mxu0 0
        %3800 = vmatprep.subr.bf16.mxu0 0
        %3801 = vmatpush1.bf16.msra.mxu0 0
        %3802 = vmatprep.subr.bf16.mxu0 0
        %3803 = vmatpush1.bf16.msra.mxu0 0
        %3804 = vmatprep.subr.bf16.mxu0 0
        %3805 = vmatpush1.bf16.msra.mxu0 0
        %3806 = vmatprep.subr.bf16.mxu0 0
        %3807 = vmatpush1.bf16.msra.mxu0 0
        %3808 = vmatprep.subr.bf16.mxu0 0
        %3809 = vmatpush1.bf16.msra.mxu0 0
        %3810 = vmatprep.subr.bf16.mxu0 0
        %3811 = vmatpush1.bf16.msra.mxu0 0
        %3812 = vmatprep.mubr.bf16.mxu0 0
        %3813 = vmatmul.mubr.bf16.gmra.mrb[0].mxu0 %v3724
        %v3814 = vpop.f32.mrb[0].mxu0
        %v3815 = vadd.f32 0.0, %v3814
        %v3816 = vpop.f32.mrb[0].mxu0
        %v3817 = vpop.f32.mrb[0].mxu0
        %v3818 = vadd.f32 0.0, %v3817
        %v3819 = vpop.f32.mrb[0].mxu0
        %3820 = vmatprep.mubr.bf16.mxu0 0
        %3821 = vmatmul.mubr.bf16.gmra.mrb[0].mxu0 %v3726
        %v3822 = vpop.f32.mrb[0].mxu0
        %v3823 = vadd.f32 0.0, %v3822
        %v3824 = vpop.f32.mrb[0].mxu0
        %v3825 = vpop.f32.mrb[0].mxu0
        %v3826 = vadd.f32 0.0, %v3825
        %v3827 = vpop.f32.mrb[0].mxu0
        %3828 = vmatprep.mubr.bf16.mxu0 0
        %3829 = vmatmul.mubr.bf16.gmra.mrb[0].mxu0 %v3728
        %v3830 = vpop.f32.mrb[0].mxu0
        %v3831 = vadd.f32 0.0, %v3830
        %v3832 = vpop.f32.mrb[0].mxu0
        %v3833 = vpop.f32.mrb[0].mxu0
        %v3834 = vadd.f32 0.0, %v3833
        %v3835 = vpop.f32.mrb[0].mxu0
        %3836 = vdwg.mxu0
        %v3837 = vadd.f32 %v3674, %v3815
        %v3838 = vadd.f32 %v3675, %v3818
        %v3839 = vadd.f32 %v3676, %v3823
        %v3840 = vadd.f32 %v3677, %v3826
        %v3841 = vadd.f32 %v3678, %v3831
        %v3842 = vadd.f32 %v3679, %v3834
        %3843 = vst [vmem:[#allocation3] sm:$0xff] %v3837
        %3844 = vst [vmem:[#allocation3 + $0x8] sm:$0xff] %v3838
        %3845 = vst [vmem:[#allocation3 + $0x10] sm:$0xff] %v3839
        %3846 = vst [vmem:[#allocation3 + $0x18] sm:$0xff] %v3840
        %3847 = vst [vmem:[#allocation3 + $0x20] sm:$0xff] %v3841
        %3848 = vst [vmem:[#allocation3 + $0x28] sm:$0xff] %v3842
        %v3849 = vld [vmem:[#allocation3] sm:$0xff]
        %v3850 = vld [vmem:[#allocation3 + $0x8] sm:$0xff]
        %v3851 = vld [vmem:[#allocation3 + $0x10] sm:$0xff]
        %v3852 = vld [vmem:[#allocation3 + $0x18] sm:$0xff]
        %v3853 = vld [vmem:[#allocation3 + $0x20] sm:$0xff]
        %v3854 = vld [vmem:[#allocation3 + $0x28] sm:$0xff]
        %v3855 = vld [vmem:[#allocation2 + $0x8] sm:$0xe]
        %v3856 = vld [vmem:[#allocation2 + $0xc] sm:$0xf]
        %v3857 = vld [vmem:[#allocation2 + $0x10] sm:$0xf]
        %v3858 = vld [vmem:[#allocation2 + $0x14] sm:$0xf]
        %v3859 = vld [vmem:[#allocation2 + $0x18] sm:$0xf]
        %v3860 = vld [vmem:[#allocation2 + $0x1c] sm:$0xf]
        %v3861 = vld [vmem:[#allocation2 + $0x20] sm:$0x3]
        %s3862 = scalar_lea.vmem [#allocation9], 1216
        %v3863 = vld [vmem:[%s3862] sm:$0xf]
        %v3864 = vld [vmem:[%s3862 + $0x4] sm:$0xf]
        %v3865 = vld [vmem:[%s3862 + $0x8] sm:$0xf]
        %v3866 = vld [vmem:[%s3862 + $0xc] sm:$0xf]
        %v3867 = vld [vmem:[%s3862 + $0x10] sm:$0xf]
        %v3868 = vld [vmem:[%s3862 + $0x14] sm:$0xf]
        %v3869 = vld [vmem:[%s3862 + $0x18] sm:$0xf]
        %v3870 = vld [vmem:[%s3862 + $0x1c] sm:$0xf]
        %v3871 = vld [vmem:[%s3862 + $0x20] sm:$0xf]
        %v3872 = vld [vmem:[%s3862 + $0x24] sm:$0xf]
        %v3873 = vld [vmem:[%s3862 + $0x28] sm:$0xf]
        %v3874 = vld [vmem:[%s3862 + $0x2c] sm:$0xf]
        %v3875 = vld [vmem:[%s3862 + $0x30] sm:$0xf]
        %v3876 = vld [vmem:[%s3862 + $0x34] sm:$0xf]
        %v3877 = vld [vmem:[%s3862 + $0x38] sm:$0xf]
        %v3878 = vld [vmem:[%s3862 + $0x3c] sm:$0xf]
        %v3886 = vunpack.c.l.b16 %v3855
        %v3887 = vunpack.c.l.b16 %v3856
        %v3888 = vunpack.c.l.b16 %v3857
        %v3889 = vunpack.c.l.b16 %v3858
        %v3890 = vunpack.c.l.b16 %v3859
        %v3891 = vunpack.c.l.b16 %v3860
        %v3892 = vunpack.c.l.b16 %v3861
        %v3893 = vpack.c.b16 %v3887, %v3886
        %v3894 = vpack.c.b16 %v3889, %v3888
        %v3895 = vpack.c.b16 %v3891, %v3890
        %v3896 = vpack.c.b16 %v3892, %v3892
        %v3898 = vshrl.u32 %v3893, 16
        %v3900 = vrot.slane %v3898, 1
        %v3901 = vshll.u32 %v3893, 16
        %v3903 = vrot.slane %v3901, 2
        %v3904 = vor.u32 %v3900, %v3903
        %v3906 = vshrl.u32 %v3894, 16
        %v3908 = vrot.slane %v3906, 1
        %v3909 = vshll.u32 %v3894, 16
        %v3911 = vrot.slane %v3909, 2
        %v3912 = vor.u32 %v3908, %v3911
        %v3913 = vsel %vm904, %v3904, %v3912
        %v3915 = vshrl.u32 %v3895, 16
        %v3917 = vrot.slane %v3915, 1
        %v3918 = vshll.u32 %v3895, 16
        %v3920 = vrot.slane %v3918, 2
        %v3921 = vor.u32 %v3917, %v3920
        %v3922 = vsel %vm904, %v3912, %v3921
        %v3924 = vshrl.u32 %v3896, 16
        %v3926 = vrot.slane %v3924, 1
        %v3927 = vshll.u32 %v3896, 16
        %v3929 = vrot.slane %v3927, 2
        %v3930 = vor.u32 %v3926, %v3929
        %v3931 = vsel %vm904, %v3921, %v3930
        %v3951 = vunpack.c.l.b16 %v3863
        %v3952 = vunpack.c.l.b16 %v3864
        %v3953 = vunpack.c.l.b16 %v3865
        %v3954 = vunpack.c.l.b16 %v3866
        %v3955 = vunpack.c.l.b16 %v3867
        %v3956 = vunpack.c.l.b16 %v3868
        %v3957 = vunpack.c.l.b16 %v3869
        %v3958 = vunpack.c.l.b16 %v3870
        %v3959 = vunpack.c.l.b16 %v3871
        %v3960 = vunpack.c.l.b16 %v3872
        %v3961 = vunpack.c.l.b16 %v3873
        %v3962 = vunpack.c.l.b16 %v3874
        %v3963 = vunpack.c.l.b16 %v3875
        %v3964 = vunpack.c.l.b16 %v3876
        %v3965 = vunpack.c.l.b16 %v3877
        %v3966 = vunpack.c.l.b16 %v3878
        %v3967 = vpack.c.b16 %v3952, %v3951
        %v3968 = vpack.c.b16 %v3954, %v3953
        %v3969 = vpack.c.b16 %v3956, %v3955
        %v3970 = vpack.c.b16 %v3958, %v3957
        %v3971 = vpack.c.b16 %v3960, %v3959
        %v3972 = vpack.c.b16 %v3962, %v3961
        %v3973 = vpack.c.b16 %v3964, %v3963
        %v3974 = vpack.c.b16 %v3966, %v3965
        %3983 = vmatprep.subr.bf16.mxu0 0
        %3984 = vmatpush1.bf16.msra.mxu0 %v3967
        %3985 = vmatprep.subr.bf16.mxu0 0
        %3986 = vmatpush1.bf16.msra.mxu0 %v3968
        %3987 = vmatprep.subr.bf16.mxu0 0
        %3988 = vmatpush1.bf16.msra.mxu0 %v3969
        %3989 = vmatprep.subr.bf16.mxu0 0
        %3990 = vmatpush1.bf16.msra.mxu0 %v3970
        %3991 = vmatprep.subr.bf16.mxu0 0
        %3992 = vmatpush1.bf16.msra.mxu0 %v3971
        %3993 = vmatprep.subr.bf16.mxu0 0
        %3994 = vmatpush1.bf16.msra.mxu0 %v3972
        %3995 = vmatprep.subr.bf16.mxu0 0
        %3996 = vmatpush1.bf16.msra.mxu0 %v3973
        %3997 = vmatprep.subr.bf16.mxu0 0
        %3998 = vmatpush1.bf16.msra.mxu0 %v3974
        %3999 = vmatprep.subr.bf16.mxu0 0
        %4000 = vmatpush1.bf16.msra.mxu0 0
        %4001 = vmatprep.subr.bf16.mxu0 0
        %4002 = vmatpush1.bf16.msra.mxu0 0
        %4003 = vmatprep.subr.bf16.mxu0 0
        %4004 = vmatpush1.bf16.msra.mxu0 0
        %4005 = vmatprep.subr.bf16.mxu0 0
        %4006 = vmatpush1.bf16.msra.mxu0 0
        %4007 = vmatprep.subr.bf16.mxu0 0
        %4008 = vmatpush1.bf16.msra.mxu0 0
        %4009 = vmatprep.subr.bf16.mxu0 0
        %4010 = vmatpush1.bf16.msra.mxu0 0
        %4011 = vmatprep.subr.bf16.mxu0 0
        %4012 = vmatpush1.bf16.msra.mxu0 0
        %4013 = vmatprep.subr.bf16.mxu0 0
        %4014 = vmatpush1.bf16.msra.mxu0 0
        %4015 = vmatprep.mubr.bf16.mxu0 0
        %4016 = vmatmul.mubr.bf16.gmra.mrb[0].mxu0 %v3913
        %v4017 = vpop.f32.mrb[0].mxu0
        %v4018 = vadd.f32 0.0, %v4017
        %v4019 = vpop.f32.mrb[0].mxu0
        %v4020 = vpop.f32.mrb[0].mxu0
        %v4021 = vadd.f32 0.0, %v4020
        %v4022 = vpop.f32.mrb[0].mxu0
        %4023 = vmatprep.mubr.bf16.mxu0 0
        %4024 = vmatmul.mubr.bf16.gmra.mrb[0].mxu0 %v3922
        %v4025 = vpop.f32.mrb[0].mxu0
        %v4026 = vadd.f32 0.0, %v4025
        %v4027 = vpop.f32.mrb[0].mxu0
        %v4028 = vpop.f32.mrb[0].mxu0
        %v4029 = vadd.f32 0.0, %v4028
        %v4030 = vpop.f32.mrb[0].mxu0
        %4031 = vmatprep.mubr.bf16.mxu0 0
        %4032 = vmatmul.mubr.bf16.gmra.mrb[0].mxu0 %v3931
        %v4033 = vpop.f32.mrb[0].mxu0
        %v4034 = vadd.f32 0.0, %v4033
        %v4035 = vpop.f32.mrb[0].mxu0
        %v4036 = vpop.f32.mrb[0].mxu0
        %v4037 = vadd.f32 0.0, %v4036
        %v4038 = vpop.f32.mrb[0].mxu0
        %4039 = vdwg.mxu0
        %v4040 = vadd.f32 %v3849, %v4018
        %v4041 = vadd.f32 %v3850, %v4021
        %v4042 = vadd.f32 %v3851, %v4026
        %v4043 = vadd.f32 %v3852, %v4029
        %v4044 = vadd.f32 %v3853, %v4034
        %v4045 = vadd.f32 %v3854, %v4037
        %4046 = vst [vmem:[#allocation3] sm:$0xff] %v4040
        %4047 = vst [vmem:[#allocation3 + $0x8] sm:$0xff] %v4041
        %4048 = vst [vmem:[#allocation3 + $0x10] sm:$0xff] %v4042
        %4049 = vst [vmem:[#allocation3 + $0x18] sm:$0xff] %v4043
        %4050 = vst [vmem:[#allocation3 + $0x20] sm:$0xff] %v4044
        %4051 = vst [vmem:[#allocation3 + $0x28] sm:$0xff] %v4045
        %v4052 = vld [vmem:[#allocation3] sm:$0xff]
        %v4053 = vld [vmem:[#allocation3 + $0x8] sm:$0xff]
        %v4054 = vld [vmem:[#allocation3 + $0x10] sm:$0xff]
        %v4055 = vld [vmem:[#allocation3 + $0x18] sm:$0xff]
        %v4056 = vld [vmem:[#allocation3 + $0x20] sm:$0xff]
        %v4057 = vld [vmem:[#allocation3 + $0x28] sm:$0xff]
        %v4058 = vld [vmem:[#allocation2 + $0x8] sm:$0xc]
        %v4059 = vld [vmem:[#allocation2 + $0xc] sm:$0xf]
        %v4060 = vld [vmem:[#allocation2 + $0x10] sm:$0xf]
        %v4061 = vld [vmem:[#allocation2 + $0x14] sm:$0xf]
        %v4062 = vld [vmem:[#allocation2 + $0x18] sm:$0xf]
        %v4063 = vld [vmem:[#allocation2 + $0x1c] sm:$0xf]
        %v4064 = vld [vmem:[#allocation2 + $0x20] sm:$0x3]
        %s4065 = scalar_lea.vmem [#allocation9], 1280
        %v4066 = vld [vmem:[%s4065] sm:$0xf]
        %v4067 = vld [vmem:[%s4065 + $0x4] sm:$0xf]
        %v4068 = vld [vmem:[%s4065 + $0x8] sm:$0xf]
        %v4069 = vld [vmem:[%s4065 + $0xc] sm:$0xf]
        %v4070 = vld [vmem:[%s4065 + $0x10] sm:$0xf]
        %v4071 = vld [vmem:[%s4065 + $0x14] sm:$0xf]
        %v4072 = vld [vmem:[%s4065 + $0x18] sm:$0xf]
        %v4073 = vld [vmem:[%s4065 + $0x1c] sm:$0xf]
        %v4074 = vld [vmem:[%s4065 + $0x20] sm:$0xf]
        %v4075 = vld [vmem:[%s4065 + $0x24] sm:$0xf]
        %v4076 = vld [vmem:[%s4065 + $0x28] sm:$0xf]
        %v4077 = vld [vmem:[%s4065 + $0x2c] sm:$0xf]
        %v4078 = vld [vmem:[%s4065 + $0x30] sm:$0xf]
        %v4079 = vld [vmem:[%s4065 + $0x34] sm:$0xf]
        %v4080 = vld [vmem:[%s4065 + $0x38] sm:$0xf]
        %v4081 = vld [vmem:[%s4065 + $0x3c] sm:$0xf]
        %v4089 = vunpack.c.l.b16 %v4058
        %v4090 = vunpack.c.l.b16 %v4059
        %v4091 = vunpack.c.l.b16 %v4060
        %v4092 = vunpack.c.l.b16 %v4061
        %v4093 = vunpack.c.l.b16 %v4062
        %v4094 = vunpack.c.l.b16 %v4063
        %v4095 = vunpack.c.l.b16 %v4064
        %v4096 = vpack.c.b16 %v4090, %v4089
        %v4097 = vpack.c.b16 %v4092, %v4091
        %v4098 = vpack.c.b16 %v4094, %v4093
        %v4099 = vpack.c.b16 %v4095, %v4095
        %v4100 = vrot.slane %v4096, 2
        %v4101 = vrot.slane %v4097, 2
        %v4102 = vsel %vm1108, %v4100, %v4101
        %v4103 = vrot.slane %v4098, 2
        %v4104 = vsel %vm1108, %v4101, %v4103
        %v4105 = vrot.slane %v4099, 2
        %v4106 = vsel %vm1108, %v4103, %v4105
        %v4126 = vunpack.c.l.b16 %v4066
        %v4127 = vunpack.c.l.b16 %v4067
        %v4128 = vunpack.c.l.b16 %v4068
        %v4129 = vunpack.c.l.b16 %v4069
        %v4130 = vunpack.c.l.b16 %v4070
        %v4131 = vunpack.c.l.b16 %v4071
        %v4132 = vunpack.c.l.b16 %v4072
        %v4133 = vunpack.c.l.b16 %v4073
        %v4134 = vunpack.c.l.b16 %v4074
        %v4135 = vunpack.c.l.b16 %v4075
        %v4136 = vunpack.c.l.b16 %v4076
        %v4137 = vunpack.c.l.b16 %v4077
        %v4138 = vunpack.c.l.b16 %v4078
        %v4139 = vunpack.c.l.b16 %v4079
        %v4140 = vunpack.c.l.b16 %v4080
        %v4141 = vunpack.c.l.b16 %v4081
        %v4142 = vpack.c.b16 %v4127, %v4126
        %v4143 = vpack.c.b16 %v4129, %v4128
        %v4144 = vpack.c.b16 %v4131, %v4130
        %v4145 = vpack.c.b16 %v4133, %v4132
        %v4146 = vpack.c.b16 %v4135, %v4134
        %v4147 = vpack.c.b16 %v4137, %v4136
        %v4148 = vpack.c.b16 %v4139, %v4138
        %v4149 = vpack.c.b16 %v4141, %v4140
        %4158 = vmatprep.subr.bf16.mxu0 0
        %4159 = vmatpush1.bf16.msra.mxu0 %v4142
        %4160 = vmatprep.subr.bf16.mxu0 0
        %4161 = vmatpush1.bf16.msra.mxu0 %v4143
        %4162 = vmatprep.subr.bf16.mxu0 0
        %4163 = vmatpush1.bf16.msra.mxu0 %v4144
        %4164 = vmatprep.subr.bf16.mxu0 0
        %4165 = vmatpush1.bf16.msra.mxu0 %v4145
        %4166 = vmatprep.subr.bf16.mxu0 0
        %4167 = vmatpush1.bf16.msra.mxu0 %v4146
        %4168 = vmatprep.subr.bf16.mxu0 0
        %4169 = vmatpush1.bf16.msra.mxu0 %v4147
        %4170 = vmatprep.subr.bf16.mxu0 0
        %4171 = vmatpush1.bf16.msra.mxu0 %v4148
        %4172 = vmatprep.subr.bf16.mxu0 0
        %4173 = vmatpush1.bf16.msra.mxu0 %v4149
        %4174 = vmatprep.subr.bf16.mxu0 0
        %4175 = vmatpush1.bf16.msra.mxu0 0
        %4176 = vmatprep.subr.bf16.mxu0 0
        %4177 = vmatpush1.bf16.msra.mxu0 0
        %4178 = vmatprep.subr.bf16.mxu0 0
        %4179 = vmatpush1.bf16.msra.mxu0 0
        %4180 = vmatprep.subr.bf16.mxu0 0
        %4181 = vmatpush1.bf16.msra.mxu0 0
        %4182 = vmatprep.subr.bf16.mxu0 0
        %4183 = vmatpush1.bf16.msra.mxu0 0
        %4184 = vmatprep.subr.bf16.mxu0 0
        %4185 = vmatpush1.bf16.msra.mxu0 0
        %4186 = vmatprep.subr.bf16.mxu0 0
        %4187 = vmatpush1.bf16.msra.mxu0 0
        %4188 = vmatprep.subr.bf16.mxu0 0
        %4189 = vmatpush1.bf16.msra.mxu0 0
        %4190 = vmatprep.mubr.bf16.mxu0 0
        %4191 = vmatmul.mubr.bf16.gmra.mrb[0].mxu0 %v4102
        %v4192 = vpop.f32.mrb[0].mxu0
        %v4193 = vadd.f32 0.0, %v4192
        %v4194 = vpop.f32.mrb[0].mxu0
        %v4195 = vpop.f32.mrb[0].mxu0
        %v4196 = vadd.f32 0.0, %v4195
        %v4197 = vpop.f32.mrb[0].mxu0
        %4198 = vmatprep.mubr.bf16.mxu0 0
        %4199 = vmatmul.mubr.bf16.gmra.mrb[0].mxu0 %v4104
        %v4200 = vpop.f32.mrb[0].mxu0
        %v4201 = vadd.f32 0.0, %v4200
        %v4202 = vpop.f32.mrb[0].mxu0
        %v4203 = vpop.f32.mrb[0].mxu0
        %v4204 = vadd.f32 0.0, %v4203
        %v4205 = vpop.f32.mrb[0].mxu0
        %4206 = vmatprep.mubr.bf16.mxu0 0
        %4207 = vmatmul.mubr.bf16.gmra.mrb[0].mxu0 %v4106
        %v4208 = vpop.f32.mrb[0].mxu0
        %v4209 = vadd.f32 0.0, %v4208
        %v4210 = vpop.f32.mrb[0].mxu0
        %v4211 = vpop.f32.mrb[0].mxu0
        %v4212 = vadd.f32 0.0, %v4211
        %v4213 = vpop.f32.mrb[0].mxu0
        %4214 = vdwg.mxu0
        %v4215 = vadd.f32 %v4052, %v4193
        %v4216 = vadd.f32 %v4053, %v4196
        %v4217 = vadd.f32 %v4054, %v4201
        %v4218 = vadd.f32 %v4055, %v4204
        %v4219 = vadd.f32 %v4056, %v4209
        %v4220 = vadd.f32 %v4057, %v4212
        %4221 = vst [vmem:[#allocation3] sm:$0xff] %v4215
        %4222 = vst [vmem:[#allocation3 + $0x8] sm:$0xff] %v4216
        %4223 = vst [vmem:[#allocation3 + $0x10] sm:$0xff] %v4217
        %4224 = vst [vmem:[#allocation3 + $0x18] sm:$0xff] %v4218
        %4225 = vst [vmem:[#allocation3 + $0x20] sm:$0xff] %v4219
        %4226 = vst [vmem:[#allocation3 + $0x28] sm:$0xff] %v4220
        %v4227 = vld [vmem:[#allocation3] sm:$0xff]
        %v4228 = vld [vmem:[#allocation3 + $0x8] sm:$0xff]
        %v4229 = vld [vmem:[#allocation3 + $0x10] sm:$0xff]
        %v4230 = vld [vmem:[#allocation3 + $0x18] sm:$0xff]
        %v4231 = vld [vmem:[#allocation3 + $0x20] sm:$0xff]
        %v4232 = vld [vmem:[#allocation3 + $0x28] sm:$0xff]
        %v4233 = vld [vmem:[#allocation2 + $0x8] sm:$0xc]
        %v4234 = vld [vmem:[#allocation2 + $0xc] sm:$0xf]
        %v4235 = vld [vmem:[#allocation2 + $0x10] sm:$0xf]
        %v4236 = vld [vmem:[#allocation2 + $0x14] sm:$0xf]
        %v4237 = vld [vmem:[#allocation2 + $0x18] sm:$0xf]
        %v4238 = vld [vmem:[#allocation2 + $0x1c] sm:$0xf]
        %v4239 = vld [vmem:[#allocation2 + $0x20] sm:$0x7]
        %s4240 = scalar_lea.vmem [#allocation9], 1344
        %v4241 = vld [vmem:[%s4240] sm:$0xf]
        %v4242 = vld [vmem:[%s4240 + $0x4] sm:$0xf]
        %v4243 = vld [vmem:[%s4240 + $0x8] sm:$0xf]
        %v4244 = vld [vmem:[%s4240 + $0xc] sm:$0xf]
        %v4245 = vld [vmem:[%s4240 + $0x10] sm:$0xf]
        %v4246 = vld [vmem:[%s4240 + $0x14] sm:$0xf]
        %v4247 = vld [vmem:[%s4240 + $0x18] sm:$0xf]
        %v4248 = vld [vmem:[%s4240 + $0x1c] sm:$0xf]
        %v4249 = vld [vmem:[%s4240 + $0x20] sm:$0xf]
        %v4250 = vld [vmem:[%s4240 + $0x24] sm:$0xf]
        %v4251 = vld [vmem:[%s4240 + $0x28] sm:$0xf]
        %v4252 = vld [vmem:[%s4240 + $0x2c] sm:$0xf]
        %v4253 = vld [vmem:[%s4240 + $0x30] sm:$0xf]
        %v4254 = vld [vmem:[%s4240 + $0x34] sm:$0xf]
        %v4255 = vld [vmem:[%s4240 + $0x38] sm:$0xf]
        %v4256 = vld [vmem:[%s4240 + $0x3c] sm:$0xf]
        %v4264 = vunpack.c.l.b16 %v4233
        %v4265 = vunpack.c.l.b16 %v4234
        %v4266 = vunpack.c.l.b16 %v4235
        %v4267 = vunpack.c.l.b16 %v4236
        %v4268 = vunpack.c.l.b16 %v4237
        %v4269 = vunpack.c.l.b16 %v4238
        %v4270 = vunpack.c.l.b16 %v4239
        %v4271 = vpack.c.b16 %v4265, %v4264
        %v4272 = vpack.c.b16 %v4267, %v4266
        %v4273 = vpack.c.b16 %v4269, %v4268
        %v4274 = vpack.c.b16 %v4270, %v4270
        %v4276 = vshrl.u32 %v4271, 16
        %v4278 = vrot.slane %v4276, 2
        %v4279 = vshll.u32 %v4271, 16
        %v4281 = vrot.slane %v4279, 3
        %v4282 = vor.u32 %v4278, %v4281
        %v4284 = vshrl.u32 %v4272, 16
        %v4286 = vrot.slane %v4284, 2
        %v4287 = vshll.u32 %v4272, 16
        %v4289 = vrot.slane %v4287, 3
        %v4290 = vor.u32 %v4286, %v4289
        %v4291 = vsel %vm1284, %v4282, %v4290
        %v4293 = vshrl.u32 %v4273, 16
        %v4295 = vrot.slane %v4293, 2
        %v4296 = vshll.u32 %v4273, 16
        %v4298 = vrot.slane %v4296, 3
        %v4299 = vor.u32 %v4295, %v4298
        %v4300 = vsel %vm1284, %v4290, %v4299
        %v4302 = vshrl.u32 %v4274, 16
        %v4304 = vrot.slane %v4302, 2
        %v4305 = vshll.u32 %v4274, 16
        %v4307 = vrot.slane %v4305, 3
        %v4308 = vor.u32 %v4304, %v4307
        %v4309 = vsel %vm1284, %v4299, %v4308
        %v4329 = vunpack.c.l.b16 %v4241
        %v4330 = vunpack.c.l.b16 %v4242
        %v4331 = vunpack.c.l.b16 %v4243
        %v4332 = vunpack.c.l.b16 %v4244
        %v4333 = vunpack.c.l.b16 %v4245
        %v4334 = vunpack.c.l.b16 %v4246
        %v4335 = vunpack.c.l.b16 %v4247
        %v4336 = vunpack.c.l.b16 %v4248
        %v4337 = vunpack.c.l.b16 %v4249
        %v4338 = vunpack.c.l.b16 %v4250
        %v4339 = vunpack.c.l.b16 %v4251
        %v4340 = vunpack.c.l.b16 %v4252
        %v4341 = vunpack.c.l.b16 %v4253
        %v4342 = vunpack.c.l.b16 %v4254
        %v4343 = vunpack.c.l.b16 %v4255
        %v4344 = vunpack.c.l.b16 %v4256
        %v4345 = vpack.c.b16 %v4330, %v4329
        %v4346 = vpack.c.b16 %v4332, %v4331
        %v4347 = vpack.c.b16 %v4334, %v4333
        %v4348 = vpack.c.b16 %v4336, %v4335
        %v4349 = vpack.c.b16 %v4338, %v4337
        %v4350 = vpack.c.b16 %v4340, %v4339
        %v4351 = vpack.c.b16 %v4342, %v4341
        %v4352 = vpack.c.b16 %v4344, %v4343
        %4361 = vmatprep.subr.bf16.mxu0 0
        %4362 = vmatpush1.bf16.msra.mxu0 %v4345
        %4363 = vmatprep.subr.bf16.mxu0 0
        %4364 = vmatpush1.bf16.msra.mxu0 %v4346
        %4365 = vmatprep.subr.bf16.mxu0 0
        %4366 = vmatpush1.bf16.msra.mxu0 %v4347
        %4367 = vmatprep.subr.bf16.mxu0 0
        %4368 = vmatpush1.bf16.msra.mxu0 %v4348
        %4369 = vmatprep.subr.bf16.mxu0 0
        %4370 = vmatpush1.bf16.msra.mxu0 %v4349
        %4371 = vmatprep.subr.bf16.mxu0 0
        %4372 = vmatpush1.bf16.msra.mxu0 %v4350
        %4373 = vmatprep.subr.bf16.mxu0 0
        %4374 = vmatpush1.bf16.msra.mxu0 %v4351
        %4375 = vmatprep.subr.bf16.mxu0 0
        %4376 = vmatpush1.bf16.msra.mxu0 %v4352
        %4377 = vmatprep.subr.bf16.mxu0 0
        %4378 = vmatpush1.bf16.msra.mxu0 0
        %4379 = vmatprep.subr.bf16.mxu0 0
        %4380 = vmatpush1.bf16.msra.mxu0 0
        %4381 = vmatprep.subr.bf16.mxu0 0
        %4382 = vmatpush1.bf16.msra.mxu0 0
        %4383 = vmatprep.subr.bf16.mxu0 0
        %4384 = vmatpush1.bf16.msra.mxu0 0
        %4385 = vmatprep.subr.bf16.mxu0 0
        %4386 = vmatpush1.bf16.msra.mxu0 0
        %4387 = vmatprep.subr.bf16.mxu0 0
        %4388 = vmatpush1.bf16.msra.mxu0 0
        %4389 = vmatprep.subr.bf16.mxu0 0
        %4390 = vmatpush1.bf16.msra.mxu0 0
        %4391 = vmatprep.subr.bf16.mxu0 0
        %4392 = vmatpush1.bf16.msra.mxu0 0
        %4393 = vmatprep.mubr.bf16.mxu0 0
        %4394 = vmatmul.mubr.bf16.gmra.mrb[0].mxu0 %v4291
        %v4395 = vpop.f32.mrb[0].mxu0
        %v4396 = vadd.f32 0.0, %v4395
        %v4397 = vpop.f32.mrb[0].mxu0
        %v4398 = vpop.f32.mrb[0].mxu0
        %v4399 = vadd.f32 0.0, %v4398
        %v4400 = vpop.f32.mrb[0].mxu0
        %4401 = vmatprep.mubr.bf16.mxu0 0
        %4402 = vmatmul.mubr.bf16.gmra.mrb[0].mxu0 %v4300
        %v4403 = vpop.f32.mrb[0].mxu0
        %v4404 = vadd.f32 0.0, %v4403
        %v4405 = vpop.f32.mrb[0].mxu0
        %v4406 = vpop.f32.mrb[0].mxu0
        %v4407 = vadd.f32 0.0, %v4406
        %v4408 = vpop.f32.mrb[0].mxu0
        %4409 = vmatprep.mubr.bf16.mxu0 0
        %4410 = vmatmul.mubr.bf16.gmra.mrb[0].mxu0 %v4309
        %v4411 = vpop.f32.mrb[0].mxu0
        %v4412 = vadd.f32 0.0, %v4411
        %v4413 = vpop.f32.mrb[0].mxu0
        %v4414 = vpop.f32.mrb[0].mxu0
        %v4415 = vadd.f32 0.0, %v4414
        %v4416 = vpop.f32.mrb[0].mxu0
        %4417 = vdwg.mxu0
        %v4418 = vadd.f32 %v4227, %v4396
        %v4419 = vadd.f32 %v4228, %v4399
        %v4420 = vadd.f32 %v4229, %v4404
        %v4421 = vadd.f32 %v4230, %v4407
        %v4422 = vadd.f32 %v4231, %v4412
        %v4423 = vadd.f32 %v4232, %v4415
        %4424 = vst [vmem:[#allocation3] sm:$0xff] %v4418
        %4425 = vst [vmem:[#allocation3 + $0x8] sm:$0xff] %v4419
        %4426 = vst [vmem:[#allocation3 + $0x10] sm:$0xff] %v4420
        %4427 = vst [vmem:[#allocation3 + $0x18] sm:$0xff] %v4421
        %4428 = vst [vmem:[#allocation3 + $0x20] sm:$0xff] %v4422
        %4429 = vst [vmem:[#allocation3 + $0x28] sm:$0xff] %v4423
        %v4430 = vld [vmem:[#allocation3] sm:$0xff]
        %v4431 = vld [vmem:[#allocation3 + $0x8] sm:$0xff]
        %v4432 = vld [vmem:[#allocation3 + $0x10] sm:$0xff]
        %v4433 = vld [vmem:[#allocation3 + $0x18] sm:$0xff]
        %v4434 = vld [vmem:[#allocation3 + $0x20] sm:$0xff]
        %v4435 = vld [vmem:[#allocation3 + $0x28] sm:$0xff]
        %v4436 = vld [vmem:[#allocation2 + $0x8] sm:$0x8]
        %v4437 = vld [vmem:[#allocation2 + $0xc] sm:$0xf]
        %v4438 = vld [vmem:[#allocation2 + $0x10] sm:$0xf]
        %v4439 = vld [vmem:[#allocation2 + $0x14] sm:$0xf]
        %v4440 = vld [vmem:[#allocation2 + $0x18] sm:$0xf]
        %v4441 = vld [vmem:[#allocation2 + $0x1c] sm:$0xf]
        %v4442 = vld [vmem:[#allocation2 + $0x20] sm:$0x7]
        %s4443 = scalar_lea.vmem [#allocation9], 1408
        %v4444 = vld [vmem:[%s4443] sm:$0xf]
        %v4445 = vld [vmem:[%s4443 + $0x4] sm:$0xf]
        %v4446 = vld [vmem:[%s4443 + $0x8] sm:$0xf]
        %v4447 = vld [vmem:[%s4443 + $0xc] sm:$0xf]
        %v4448 = vld [vmem:[%s4443 + $0x10] sm:$0xf]
        %v4449 = vld [vmem:[%s4443 + $0x14] sm:$0xf]
        %v4450 = vld [vmem:[%s4443 + $0x18] sm:$0xf]
        %v4451 = vld [vmem:[%s4443 + $0x1c] sm:$0xf]
        %v4452 = vld [vmem:[%s4443 + $0x20] sm:$0xf]
        %v4453 = vld [vmem:[%s4443 + $0x24] sm:$0xf]
        %v4454 = vld [vmem:[%s4443 + $0x28] sm:$0xf]
        %v4455 = vld [vmem:[%s4443 + $0x2c] sm:$0xf]
        %v4456 = vld [vmem:[%s4443 + $0x30] sm:$0xf]
        %v4457 = vld [vmem:[%s4443 + $0x34] sm:$0xf]
        %v4458 = vld [vmem:[%s4443 + $0x38] sm:$0xf]
        %v4459 = vld [vmem:[%s4443 + $0x3c] sm:$0xf]
        %v4467 = vunpack.c.l.b16 %v4436
        %v4468 = vunpack.c.l.b16 %v4437
        %v4469 = vunpack.c.l.b16 %v4438
        %v4470 = vunpack.c.l.b16 %v4439
        %v4471 = vunpack.c.l.b16 %v4440
        %v4472 = vunpack.c.l.b16 %v4441
        %v4473 = vunpack.c.l.b16 %v4442
        %v4474 = vpack.c.b16 %v4468, %v4467
        %v4475 = vpack.c.b16 %v4470, %v4469
        %v4476 = vpack.c.b16 %v4472, %v4471
        %v4477 = vpack.c.b16 %v4473, %v4473
        %v4478 = vrot.slane %v4474, 3
        %v4479 = vrot.slane %v4475, 3
        %v4480 = vsel %vm1488, %v4478, %v4479
        %v4481 = vrot.slane %v4476, 3
        %v4482 = vsel %vm1488, %v4479, %v4481
        %v4483 = vrot.slane %v4477, 3
        %v4484 = vsel %vm1488, %v4481, %v4483
        %v4504 = vunpack.c.l.b16 %v4444
        %v4505 = vunpack.c.l.b16 %v4445
        %v4506 = vunpack.c.l.b16 %v4446
        %v4507 = vunpack.c.l.b16 %v4447
        %v4508 = vunpack.c.l.b16 %v4448
        %v4509 = vunpack.c.l.b16 %v4449
        %v4510 = vunpack.c.l.b16 %v4450
        %v4511 = vunpack.c.l.b16 %v4451
        %v4512 = vunpack.c.l.b16 %v4452
        %v4513 = vunpack.c.l.b16 %v4453
        %v4514 = vunpack.c.l.b16 %v4454
        %v4515 = vunpack.c.l.b16 %v4455
        %v4516 = vunpack.c.l.b16 %v4456
        %v4517 = vunpack.c.l.b16 %v4457
        %v4518 = vunpack.c.l.b16 %v4458
        %v4519 = vunpack.c.l.b16 %v4459
        %v4520 = vpack.c.b16 %v4505, %v4504
        %v4521 = vpack.c.b16 %v4507, %v4506
        %v4522 = vpack.c.b16 %v4509, %v4508
        %v4523 = vpack.c.b16 %v4511, %v4510
        %v4524 = vpack.c.b16 %v4513, %v4512
        %v4525 = vpack.c.b16 %v4515, %v4514
        %v4526 = vpack.c.b16 %v4517, %v4516
        %v4527 = vpack.c.b16 %v4519, %v4518
        %4536 = vmatprep.subr.bf16.mxu0 0
        %4537 = vmatpush1.bf16.msra.mxu0 %v4520
        %4538 = vmatprep.subr.bf16.mxu0 0
        %4539 = vmatpush1.bf16.msra.mxu0 %v4521
        %4540 = vmatprep.subr.bf16.mxu0 0
        %4541 = vmatpush1.bf16.msra.mxu0 %v4522
        %4542 = vmatprep.subr.bf16.mxu0 0
        %4543 = vmatpush1.bf16.msra.mxu0 %v4523
        %4544 = vmatprep.subr.bf16.mxu0 0
        %4545 = vmatpush1.bf16.msra.mxu0 %v4524
        %4546 = vmatprep.subr.bf16.mxu0 0
        %4547 = vmatpush1.bf16.msra.mxu0 %v4525
        %4548 = vmatprep.subr.bf16.mxu0 0
        %4549 = vmatpush1.bf16.msra.mxu0 %v4526
        %4550 = vmatprep.subr.bf16.mxu0 0
        %4551 = vmatpush1.bf16.msra.mxu0 %v4527
        %4552 = vmatprep.subr.bf16.mxu0 0
        %4553 = vmatpush1.bf16.msra.mxu0 0
        %4554 = vmatprep.subr.bf16.mxu0 0
        %4555 = vmatpush1.bf16.msra.mxu0 0
        %4556 = vmatprep.subr.bf16.mxu0 0
        %4557 = vmatpush1.bf16.msra.mxu0 0
        %4558 = vmatprep.subr.bf16.mxu0 0
        %4559 = vmatpush1.bf16.msra.mxu0 0
        %4560 = vmatprep.subr.bf16.mxu0 0
        %4561 = vmatpush1.bf16.msra.mxu0 0
        %4562 = vmatprep.subr.bf16.mxu0 0
        %4563 = vmatpush1.bf16.msra.mxu0 0
        %4564 = vmatprep.subr.bf16.mxu0 0
        %4565 = vmatpush1.bf16.msra.mxu0 0
        %4566 = vmatprep.subr.bf16.mxu0 0
        %4567 = vmatpush1.bf16.msra.mxu0 0
        %4568 = vmatprep.mubr.bf16.mxu0 0
        %4569 = vmatmul.mubr.bf16.gmra.mrb[0].mxu0 %v4480
        %v4570 = vpop.f32.mrb[0].mxu0
        %v4571 = vadd.f32 0.0, %v4570
        %v4572 = vpop.f32.mrb[0].mxu0
        %v4573 = vpop.f32.mrb[0].mxu0
        %v4574 = vadd.f32 0.0, %v4573
        %v4575 = vpop.f32.mrb[0].mxu0
        %4576 = vmatprep.mubr.bf16.mxu0 0
        %4577 = vmatmul.mubr.bf16.gmra.mrb[0].mxu0 %v4482
        %v4578 = vpop.f32.mrb[0].mxu0
        %v4579 = vadd.f32 0.0, %v4578
        %v4580 = vpop.f32.mrb[0].mxu0
        %v4581 = vpop.f32.mrb[0].mxu0
        %v4582 = vadd.f32 0.0, %v4581
        %v4583 = vpop.f32.mrb[0].mxu0
        %4584 = vmatprep.mubr.bf16.mxu0 0
        %4585 = vmatmul.mubr.bf16.gmra.mrb[0].mxu0 %v4484
        %v4586 = vpop.f32.mrb[0].mxu0
        %v4587 = vadd.f32 0.0, %v4586
        %v4588 = vpop.f32.mrb[0].mxu0
        %v4589 = vpop.f32.mrb[0].mxu0
        %v4590 = vadd.f32 0.0, %v4589
        %v4591 = vpop.f32.mrb[0].mxu0
        %4592 = vdwg.mxu0
        %v4593 = vadd.f32 %v4430, %v4571
        %v4594 = vadd.f32 %v4431, %v4574
        %v4595 = vadd.f32 %v4432, %v4579
        %v4596 = vadd.f32 %v4433, %v4582
        %v4597 = vadd.f32 %v4434, %v4587
        %v4598 = vadd.f32 %v4435, %v4590
        %4599 = vst [vmem:[#allocation3] sm:$0xff] %v4593
        %4600 = vst [vmem:[#allocation3 + $0x8] sm:$0xff] %v4594
        %4601 = vst [vmem:[#allocation3 + $0x10] sm:$0xff] %v4595
        %4602 = vst [vmem:[#allocation3 + $0x18] sm:$0xff] %v4596
        %4603 = vst [vmem:[#allocation3 + $0x20] sm:$0xff] %v4597
        %4604 = vst [vmem:[#allocation3 + $0x28] sm:$0xff] %v4598
        %v4605 = vld [vmem:[#allocation3] sm:$0xff]
        %v4606 = vld [vmem:[#allocation3 + $0x8] sm:$0xff]
        %v4607 = vld [vmem:[#allocation3 + $0x10] sm:$0xff]
        %v4608 = vld [vmem:[#allocation3 + $0x18] sm:$0xff]
        %v4609 = vld [vmem:[#allocation3 + $0x20] sm:$0xff]
        %v4610 = vld [vmem:[#allocation3 + $0x28] sm:$0xff]
        %v4611 = vld [vmem:[#allocation2 + $0x8] sm:$0x8]
        %v4612 = vld [vmem:[#allocation2 + $0xc] sm:$0xf]
        %v4613 = vld [vmem:[#allocation2 + $0x10] sm:$0xf]
        %v4614 = vld [vmem:[#allocation2 + $0x14] sm:$0xf]
        %v4615 = vld [vmem:[#allocation2 + $0x18] sm:$0xf]
        %v4616 = vld [vmem:[#allocation2 + $0x1c] sm:$0xf]
        %v4617 = vld [vmem:[#allocation2 + $0x20] sm:$0xf]
        %s4618 = scalar_lea.vmem [#allocation9], 1472
        %v4619 = vld [vmem:[%s4618] sm:$0xf]
        %v4620 = vld [vmem:[%s4618 + $0x4] sm:$0xf]
        %v4621 = vld [vmem:[%s4618 + $0x8] sm:$0xf]
        %v4622 = vld [vmem:[%s4618 + $0xc] sm:$0xf]
        %v4623 = vld [vmem:[%s4618 + $0x10] sm:$0xf]
        %v4624 = vld [vmem:[%s4618 + $0x14] sm:$0xf]
        %v4625 = vld [vmem:[%s4618 + $0x18] sm:$0xf]
        %v4626 = vld [vmem:[%s4618 + $0x1c] sm:$0xf]
        %v4627 = vld [vmem:[%s4618 + $0x20] sm:$0xf]
        %v4628 = vld [vmem:[%s4618 + $0x24] sm:$0xf]
        %v4629 = vld [vmem:[%s4618 + $0x28] sm:$0xf]
        %v4630 = vld [vmem:[%s4618 + $0x2c] sm:$0xf]
        %v4631 = vld [vmem:[%s4618 + $0x30] sm:$0xf]
        %v4632 = vld [vmem:[%s4618 + $0x34] sm:$0xf]
        %v4633 = vld [vmem:[%s4618 + $0x38] sm:$0xf]
        %v4634 = vld [vmem:[%s4618 + $0x3c] sm:$0xf]
        %v4642 = vunpack.c.l.b16 %v4611
        %v4643 = vunpack.c.l.b16 %v4612
        %v4644 = vunpack.c.l.b16 %v4613
        %v4645 = vunpack.c.l.b16 %v4614
        %v4646 = vunpack.c.l.b16 %v4615
        %v4647 = vunpack.c.l.b16 %v4616
        %v4648 = vunpack.c.l.b16 %v4617
        %v4649 = vpack.c.b16 %v4643, %v4642
        %v4650 = vpack.c.b16 %v4645, %v4644
        %v4651 = vpack.c.b16 %v4647, %v4646
        %v4652 = vpack.c.b16 %v4648, %v4648
        %v4654 = vshrl.u32 %v4649, 16
        %v4656 = vrot.slane %v4654, 3
        %v4657 = vshll.u32 %v4649, 16
        %v4659 = vrot.slane %v4657, 4
        %v4660 = vor.u32 %v4656, %v4659
        %v4662 = vshrl.u32 %v4650, 16
        %v4664 = vrot.slane %v4662, 3
        %v4665 = vshll.u32 %v4650, 16
        %v4667 = vrot.slane %v4665, 4
        %v4668 = vor.u32 %v4664, %v4667
        %v4669 = vsel %vm1664, %v4660, %v4668
        %v4671 = vshrl.u32 %v4651, 16
        %v4673 = vrot.slane %v4671, 3
        %v4674 = vshll.u32 %v4651, 16
        %v4676 = vrot.slane %v4674, 4
        %v4677 = vor.u32 %v4673, %v4676
        %v4678 = vsel %vm1664, %v4668, %v4677
        %v4680 = vshrl.u32 %v4652, 16
        %v4682 = vrot.slane %v4680, 3
        %v4683 = vshll.u32 %v4652, 16
        %v4685 = vrot.slane %v4683, 4
        %v4686 = vor.u32 %v4682, %v4685
        %v4687 = vsel %vm1664, %v4677, %v4686
        %v4707 = vunpack.c.l.b16 %v4619
        %v4708 = vunpack.c.l.b16 %v4620
        %v4709 = vunpack.c.l.b16 %v4621
        %v4710 = vunpack.c.l.b16 %v4622
        %v4711 = vunpack.c.l.b16 %v4623
        %v4712 = vunpack.c.l.b16 %v4624
        %v4713 = vunpack.c.l.b16 %v4625
        %v4714 = vunpack.c.l.b16 %v4626
        %v4715 = vunpack.c.l.b16 %v4627
        %v4716 = vunpack.c.l.b16 %v4628
        %v4717 = vunpack.c.l.b16 %v4629
        %v4718 = vunpack.c.l.b16 %v4630
        %v4719 = vunpack.c.l.b16 %v4631
        %v4720 = vunpack.c.l.b16 %v4632
        %v4721 = vunpack.c.l.b16 %v4633
        %v4722 = vunpack.c.l.b16 %v4634
        %v4723 = vpack.c.b16 %v4708, %v4707
        %v4724 = vpack.c.b16 %v4710, %v4709
        %v4725 = vpack.c.b16 %v4712, %v4711
        %v4726 = vpack.c.b16 %v4714, %v4713
        %v4727 = vpack.c.b16 %v4716, %v4715
        %v4728 = vpack.c.b16 %v4718, %v4717
        %v4729 = vpack.c.b16 %v4720, %v4719
        %v4730 = vpack.c.b16 %v4722, %v4721
        %4739 = vmatprep.subr.bf16.mxu0 0
        %4740 = vmatpush1.bf16.msra.mxu0 %v4723
        %4741 = vmatprep.subr.bf16.mxu0 0
        %4742 = vmatpush1.bf16.msra.mxu0 %v4724
        %4743 = vmatprep.subr.bf16.mxu0 0
        %4744 = vmatpush1.bf16.msra.mxu0 %v4725
        %4745 = vmatprep.subr.bf16.mxu0 0
        %4746 = vmatpush1.bf16.msra.mxu0 %v4726
        %4747 = vmatprep.subr.bf16.mxu0 0
        %4748 = vmatpush1.bf16.msra.mxu0 %v4727
        %4749 = vmatprep.subr.bf16.mxu0 0
        %4750 = vmatpush1.bf16.msra.mxu0 %v4728
        %4751 = vmatprep.subr.bf16.mxu0 0
        %4752 = vmatpush1.bf16.msra.mxu0 %v4729
        %4753 = vmatprep.subr.bf16.mxu0 0
        %4754 = vmatpush1.bf16.msra.mxu0 %v4730
        %4755 = vmatprep.subr.bf16.mxu0 0
        %4756 = vmatpush1.bf16.msra.mxu0 0
        %4757 = vmatprep.subr.bf16.mxu0 0
        %4758 = vmatpush1.bf16.msra.mxu0 0
        %4759 = vmatprep.subr.bf16.mxu0 0
        %4760 = vmatpush1.bf16.msra.mxu0 0
        %4761 = vmatprep.subr.bf16.mxu0 0
        %4762 = vmatpush1.bf16.msra.mxu0 0
        %4763 = vmatprep.subr.bf16.mxu0 0
        %4764 = vmatpush1.bf16.msra.mxu0 0
        %4765 = vmatprep.subr.bf16.mxu0 0
        %4766 = vmatpush1.bf16.msra.mxu0 0
        %4767 = vmatprep.subr.bf16.mxu0 0
        %4768 = vmatpush1.bf16.msra.mxu0 0
        %4769 = vmatprep.subr.bf16.mxu0 0
        %4770 = vmatpush1.bf16.msra.mxu0 0
        %4771 = vmatprep.mubr.bf16.mxu0 0
        %4772 = vmatmul.mubr.bf16.gmra.mrb[0].mxu0 %v4669
        %v4773 = vpop.f32.mrb[0].mxu0
        %v4774 = vadd.f32 0.0, %v4773
        %v4775 = vpop.f32.mrb[0].mxu0
        %v4776 = vpop.f32.mrb[0].mxu0
        %v4777 = vadd.f32 0.0, %v4776
        %v4778 = vpop.f32.mrb[0].mxu0
        %4779 = vmatprep.mubr.bf16.mxu0 0
        %4780 = vmatmul.mubr.bf16.gmra.mrb[0].mxu0 %v4678
        %v4781 = vpop.f32.mrb[0].mxu0
        %v4782 = vadd.f32 0.0, %v4781
        %v4783 = vpop.f32.mrb[0].mxu0
        %v4784 = vpop.f32.mrb[0].mxu0
        %v4785 = vadd.f32 0.0, %v4784
        %v4786 = vpop.f32.mrb[0].mxu0
        %4787 = vmatprep.mubr.bf16.mxu0 0
        %4788 = vmatmul.mubr.bf16.gmra.mrb[0].mxu0 %v4687
        %v4789 = vpop.f32.mrb[0].mxu0
        %v4790 = vadd.f32 0.0, %v4789
        %v4791 = vpop.f32.mrb[0].mxu0
        %v4792 = vpop.f32.mrb[0].mxu0
        %v4793 = vadd.f32 0.0, %v4792
        %v4794 = vpop.f32.mrb[0].mxu0
        %4795 = vdwg.mxu0
        %v4796 = vadd.f32 %v4605, %v4774
        %v4797 = vadd.f32 %v4606, %v4777
        %v4798 = vadd.f32 %v4607, %v4782
        %v4799 = vadd.f32 %v4608, %v4785
        %v4800 = vadd.f32 %v4609, %v4790
        %v4801 = vadd.f32 %v4610, %v4793
        %4802 = vst [vmem:[#allocation3] sm:$0xff] %v4796
        %4803 = vst [vmem:[#allocation3 + $0x8] sm:$0xff] %v4797
        %4804 = vst [vmem:[#allocation3 + $0x10] sm:$0xff] %v4798
        %4805 = vst [vmem:[#allocation3 + $0x18] sm:$0xff] %v4799
        %4806 = vst [vmem:[#allocation3 + $0x20] sm:$0xff] %v4800
        %4807 = vst [vmem:[#allocation3 + $0x28] sm:$0xff] %v4801
        %v4808 = vld [vmem:[#allocation3] sm:$0xff]
        %v4809 = vld [vmem:[#allocation3 + $0x8] sm:$0xff]
        %v4810 = vld [vmem:[#allocation3 + $0x10] sm:$0xff]
        %v4811 = vld [vmem:[#allocation3 + $0x18] sm:$0xff]
        %v4812 = vld [vmem:[#allocation3 + $0x20] sm:$0xff]
        %v4813 = vld [vmem:[#allocation3 + $0x28] sm:$0xff]
        %v4814 = vld [vmem:[#allocation2 + $0xc] sm:$0xf]
        %v4815 = vld [vmem:[#allocation2 + $0x10] sm:$0xf]
        %v4816 = vld [vmem:[#allocation2 + $0x14] sm:$0xf]
        %v4817 = vld [vmem:[#allocation2 + $0x18] sm:$0xf]
        %v4818 = vld [vmem:[#allocation2 + $0x1c] sm:$0xf]
        %v4819 = vld [vmem:[#allocation2 + $0x20] sm:$0xf]
        %s4820 = scalar_lea.vmem [#allocation9], 1536
        %v4821 = vld [vmem:[%s4820] sm:$0xf]
        %v4822 = vld [vmem:[%s4820 + $0x4] sm:$0xf]
        %v4823 = vld [vmem:[%s4820 + $0x8] sm:$0xf]
        %v4824 = vld [vmem:[%s4820 + $0xc] sm:$0xf]
        %v4825 = vld [vmem:[%s4820 + $0x10] sm:$0xf]
        %v4826 = vld [vmem:[%s4820 + $0x14] sm:$0xf]
        %v4827 = vld [vmem:[%s4820 + $0x18] sm:$0xf]
        %v4828 = vld [vmem:[%s4820 + $0x1c] sm:$0xf]
        %v4829 = vld [vmem:[%s4820 + $0x20] sm:$0xf]
        %v4830 = vld [vmem:[%s4820 + $0x24] sm:$0xf]
        %v4831 = vld [vmem:[%s4820 + $0x28] sm:$0xf]
        %v4832 = vld [vmem:[%s4820 + $0x2c] sm:$0xf]
        %v4833 = vld [vmem:[%s4820 + $0x30] sm:$0xf]
        %v4834 = vld [vmem:[%s4820 + $0x34] sm:$0xf]
        %v4835 = vld [vmem:[%s4820 + $0x38] sm:$0xf]
        %v4836 = vld [vmem:[%s4820 + $0x3c] sm:$0xf]
        %v4843 = vunpack.c.l.b16 %v4814
        %v4844 = vunpack.c.l.b16 %v4815
        %v4845 = vunpack.c.l.b16 %v4816
        %v4846 = vunpack.c.l.b16 %v4817
        %v4847 = vunpack.c.l.b16 %v4818
        %v4848 = vunpack.c.l.b16 %v4819
        %v4849 = vpack.c.b16 %v4844, %v4843
        %v4850 = vpack.c.b16 %v4846, %v4845
        %v4851 = vpack.c.b16 %v4848, %v4847
        %v4871 = vunpack.c.l.b16 %v4821
        %v4872 = vunpack.c.l.b16 %v4822
        %v4873 = vunpack.c.l.b16 %v4823
        %v4874 = vunpack.c.l.b16 %v4824
        %v4875 = vunpack.c.l.b16 %v4825
        %v4876 = vunpack.c.l.b16 %v4826
        %v4877 = vunpack.c.l.b16 %v4827
        %v4878 = vunpack.c.l.b16 %v4828
        %v4879 = vunpack.c.l.b16 %v4829
        %v4880 = vunpack.c.l.b16 %v4830
        %v4881 = vunpack.c.l.b16 %v4831
        %v4882 = vunpack.c.l.b16 %v4832
        %v4883 = vunpack.c.l.b16 %v4833
        %v4884 = vunpack.c.l.b16 %v4834
        %v4885 = vunpack.c.l.b16 %v4835
        %v4886 = vunpack.c.l.b16 %v4836
        %v4887 = vpack.c.b16 %v4872, %v4871
        %v4888 = vpack.c.b16 %v4874, %v4873
        %v4889 = vpack.c.b16 %v4876, %v4875
        %v4890 = vpack.c.b16 %v4878, %v4877
        %v4891 = vpack.c.b16 %v4880, %v4879
        %v4892 = vpack.c.b16 %v4882, %v4881
        %v4893 = vpack.c.b16 %v4884, %v4883
        %v4894 = vpack.c.b16 %v4886, %v4885
        %4903 = vmatprep.subr.bf16.mxu0 0
        %4904 = vmatpush1.bf16.msra.mxu0 %v4887
        %4905 = vmatprep.subr.bf16.mxu0 0
        %4906 = vmatpush1.bf16.msra.mxu0 %v4888
        %4907 = vmatprep.subr.bf16.mxu0 0
        %4908 = vmatpush1.bf16.msra.mxu0 %v4889
        %4909 = vmatprep.subr.bf16.mxu0 0
        %4910 = vmatpush1.bf16.msra.mxu0 %v4890
        %4911 = vmatprep.subr.bf16.mxu0 0
        %4912 = vmatpush1.bf16.msra.mxu0 %v4891
        %4913 = vmatprep.subr.bf16.mxu0 0
        %4914 = vmatpush1.bf16.msra.mxu0 %v4892
        %4915 = vmatprep.subr.bf16.mxu0 0
        %4916 = vmatpush1.bf16.msra.mxu0 %v4893
        %4917 = vmatprep.subr.bf16.mxu0 0
        %4918 = vmatpush1.bf16.msra.mxu0 %v4894
        %4919 = vmatprep.subr.bf16.mxu0 0
        %4920 = vmatpush1.bf16.msra.mxu0 0
        %4921 = vmatprep.subr.bf16.mxu0 0
        %4922 = vmatpush1.bf16.msra.mxu0 0
        %4923 = vmatprep.subr.bf16.mxu0 0
        %4924 = vmatpush1.bf16.msra.mxu0 0
        %4925 = vmatprep.subr.bf16.mxu0 0
        %4926 = vmatpush1.bf16.msra.mxu0 0
        %4927 = vmatprep.subr.bf16.mxu0 0
        %4928 = vmatpush1.bf16.msra.mxu0 0
        %4929 = vmatprep.subr.bf16.mxu0 0
        %4930 = vmatpush1.bf16.msra.mxu0 0
        %4931 = vmatprep.subr.bf16.mxu0 0
        %4932 = vmatpush1.bf16.msra.mxu0 0
        %4933 = vmatprep.subr.bf16.mxu0 0
        %4934 = vmatpush1.bf16.msra.mxu0 0
        %4935 = vmatprep.mubr.bf16.mxu0 0
        %4936 = vmatmul.mubr.bf16.gmra.mrb[0].mxu0 %v4849
        %v4937 = vpop.f32.mrb[0].mxu0
        %v4938 = vadd.f32 0.0, %v4937
        %v4939 = vpop.f32.mrb[0].mxu0
        %v4940 = vpop.f32.mrb[0].mxu0
        %v4941 = vadd.f32 0.0, %v4940
        %v4942 = vpop.f32.mrb[0].mxu0
        %4943 = vmatprep.mubr.bf16.mxu0 0
        %4944 = vmatmul.mubr.bf16.gmra.mrb[0].mxu0 %v4850
        %v4945 = vpop.f32.mrb[0].mxu0
        %v4946 = vadd.f32 0.0, %v4945
        %v4947 = vpop.f32.mrb[0].mxu0
        %v4948 = vpop.f32.mrb[0].mxu0
        %v4949 = vadd.f32 0.0, %v4948
        %v4950 = vpop.f32.mrb[0].mxu0
        %4951 = vmatprep.mubr.bf16.mxu0 0
        %4952 = vmatmul.mubr.bf16.gmra.mrb[0].mxu0 %v4851
        %v4953 = vpop.f32.mrb[0].mxu0
        %v4954 = vadd.f32 0.0, %v4953
        %v4955 = vpop.f32.mrb[0].mxu0
        %v4956 = vpop.f32.mrb[0].mxu0
        %v4957 = vadd.f32 0.0, %v4956
        %v4958 = vpop.f32.mrb[0].mxu0
        %4959 = vdwg.mxu0
        %v4960 = vadd.f32 %v4808, %v4938
        %v4961 = vadd.f32 %v4809, %v4941
        %v4962 = vadd.f32 %v4810, %v4946
        %v4963 = vadd.f32 %v4811, %v4949
        %v4964 = vadd.f32 %v4812, %v4954
        %v4965 = vadd.f32 %v4813, %v4957
        %4966 = vst [vmem:[#allocation3] sm:$0xff] %v4960
        %4967 = vst [vmem:[#allocation3 + $0x8] sm:$0xff] %v4961
        %4968 = vst [vmem:[#allocation3 + $0x10] sm:$0xff] %v4962
        %4969 = vst [vmem:[#allocation3 + $0x18] sm:$0xff] %v4963
        %4970 = vst [vmem:[#allocation3 + $0x20] sm:$0xff] %v4964
        %4971 = vst [vmem:[#allocation3 + $0x28] sm:$0xff] %v4965
        %v4972 = vld [vmem:[#allocation3] sm:$0xff]
        %v4973 = vld [vmem:[#allocation3 + $0x8] sm:$0xff]
        %v4974 = vld [vmem:[#allocation3 + $0x10] sm:$0xff]
        %v4975 = vld [vmem:[#allocation3 + $0x18] sm:$0xff]
        %v4976 = vld [vmem:[#allocation3 + $0x20] sm:$0xff]
        %v4977 = vld [vmem:[#allocation3 + $0x28] sm:$0xff]
        %v4978 = vld [vmem:[%s3] sm:$0x1]
        %v4980 = vlaneseq
        %v4981 = vshrl.u32 %v4980, 7
        %v4982 = vsub.s32 0, %v4981
        %v4983 = vrot.slane %v4978, %v4982
        %v4985 = vadd.f32 %v4972, %v4983
        %v4986 = vadd.f32 %v4973, %v4983
        %v4987 = vadd.f32 %v4974, %v4983
        %v4988 = vadd.f32 %v4975, %v4983
        %v4989 = vadd.f32 %v4976, %v4983
        %v4990 = vadd.f32 %v4977, %v4983
        %4991 = vst [vmem:[%s303] sm:$0xff] %v4985
        %4992 = vst [vmem:[%s303 + $0x8] sm:$0xff] %v4986
        %4993 = vst [vmem:[%s303 + $0x10] sm:$0xff] %v4987
        %4994 = vst [vmem:[%s303 + $0x18] sm:$0xff] %v4988
        %4995 = vst [vmem:[%s303 + $0x20] sm:$0xff] %v4989
        %4996 = vst [vmem:[%s303 + $0x28] sm:$0xff] %v4990
        %s4997 = sand.u32 %s148, 1
        %s4998 = scalar_lea.sflag [#allocation6], %s4997
        %s4999 = sand.u32 %s148, 1
        %s5000 = smul.addr %s4999, 48
        %s5001 = scalar_lea.vmem [#allocation10], %s5000
        // Predicated region
        $region49: #{tpu_custom_call.1} parent=35 // pred_check
          %p5002 = pneg %p158
        $region50: #{tpu_custom_call.1} parent=35 // pred_check_branch
          %5004 = sbr.rel (%p5002) target = $region52
        $region51: #{tpu_custom_call.1} parent=35 // pred_region
          %s5005 = smul.u32 6, %s29
          %s5007 = ssub.s32 768, 768
          %5008 = vsyncadd %s4998, %s5007
          %s5009 = smul.addr %s28, 6
          %s5010 = sadd.s32 %s5005, %s5009
          %s5011 = smul.addr %s5010, 128
          %s5012 = scalar_lea.hbm %s4, %s5011
          %s5013 = sshll.u32 %s5001, 4
          %s5014 = int_to_ptr.vmem [resolvable:$true] %s5013
          %5019 = dma.vmem_to_hbm [thread:$0]  %s5014, 768, %s5012, %s4998, 128, 128, 8
        $region52: #{tpu_custom_call.1} parent=35 // pred_fallthru
          _
      $region36: #{tpu_custom_call.1} parent=5 // pred_fallthru
        _
      %p5020 = scmp.le.s32.totalorder 2, %s19
      // Predicated region
      $region53: #{tpu_custom_call.1} parent=5 // pred_check
        %p5021 = pneg %p5020
      $region54: #{tpu_custom_call.1} parent=5 // pred_check_branch
        %5023 = sbr.rel (%p5021) target = $region56
      $region55: #{tpu_custom_call.1} parent=5 // pred_region
        %s5024 = ssub.s32 %s19, 2
        // Predicated region
        $region57: #{tpu_custom_call.1} parent=55 // pred_check
          %p5025 = pneg %p164
        $region58: #{tpu_custom_call.1} parent=55 // pred_check_branch
          %5027 = sbr.rel (%p5025) target = $region60
        $region59: #{tpu_custom_call.1} parent=55 // pred_region
          %s5028 = sand.u32 %s149, 1
          %s5029 = scalar_lea.sflag [#allocation6], %s5028
          %s5030 = sand.u32 %s149, 1
          %s5031 = smul.addr %s5030, 48
          %s5032 = scalar_lea.vmem [#allocation10], %s5031
          %5033 = dma.done %s5029, 768
        $region60: #{tpu_custom_call.1} parent=55 // pred_fallthru
          _
      $region56: #{tpu_custom_call.1} parent=5 // pred_fallthru
        _
    $region6: #{tpu_custom_call.1} parent=1 // loop_footer
      %s23 = sadd.s32 1, %s19
    $region7: #{tpu_custom_call.1} parent=1 // loop_footer_branch
      %18 = sbr.rel target = $region3
    $region8: #{tpu_custom_call.1} parent=1 // loop_exit
      _
    %5034 = vsyncpa [#allocation5], 1
    %s5035 = scalar_lea.sflag [#allocation5], 1
    %5036 = vsyncpa %s5035, 1
    %5037 = vsyncpa [#allocation8], 1
    %s5038 = scalar_lea.sflag [#allocation8], 1
    %5039 = vsyncpa %s5038, 1
    %5040 = vsyncpa [#allocation6], 1
    %s5041 = scalar_lea.sflag [#allocation6], 1
    %5042 = vsyncpa %s5041, 1

</llo_original>
